<compile_context>
chip_gen: v7x
topology: tpu7x:2x2x1
jax: 0.10.0
libtpu: 0.0.40
codegen_flags: <defaults>
</compile_context>

<pallas_src>
import functools
import math

import jax
import jax.numpy as jnp
from jax import lax
from jax.experimental import pallas as pl
from jax.experimental.pallas import tpu as pltpu


def unit_conv2d_kernel(x_ref, w_ref, b_ref, scale_ref, shift_ref, o_ref,
                       *, K, C_in, tile_t, tile_nv, n_tchunks):
    """Per-grid-step block:
       x_ref    : (C_in, Tp*tile_nv)       time-padded activation chunk (bf16)
       w_ref    : (K, co_tile, C_in)       conv weights per tap (bf16)
       b_ref    : (co_tile, 1)             conv bias (f32)
       scale_ref/shift_ref : (co_tile, 1)  folded eval-mode BatchNorm affine (f32)
       o_ref    : (co_tile, T_out*tile_nv) output chunk
    """
    chunk_l = tile_t * tile_nv

    # Grid-invariant reads hoisted out of the time-chunk loop.
    wk = [w_ref[k] for k in range(K)]       # K x (co_tile, C_in), clean leading-index loads
    b = b_ref[...]                          # (co_tile, 1) f32
    scale = scale_ref[...]
    shift = shift_ref[...]

    def chunk_body(tc, carry):
        base = tc * tile_t
        # --- K accumulated MXU matmuls reading aligned lane slices of x_ref.
        off0 = pl.multiple_of(base * tile_nv, tile_nv)
        acc = jnp.dot(wk[0], x_ref[:, pl.ds(off0, chunk_l)],
                      preferred_element_type=jnp.float32)
        for k in range(1, K):
            offk = pl.multiple_of((base + k) * tile_nv, tile_nv)
            acc = acc + jnp.dot(wk[k], x_ref[:, pl.ds(offk, chunk_l)],
                                preferred_element_type=jnp.float32)

        y = acc + b                         # conv bias, (co_tile,1) broadcast, f32

        # --- Mish(y) = y * tanh(softplus(y)) with a single transcendental:
        #     tanh(softplus(y)) = e*(e+2) / (e*(e+2)+2),  e = exp(y)
        #     PyTorch softplus threshold-20 passthrough: mish(y) == y for y > 20.
        e = jnp.exp(jnp.minimum(y, 20.0))
        g = e * (e + 2.0)
        t = g * pl.reciprocal(g + 2.0, approx=True)
        m = jnp.where(y > 20.0, y, y * t)

        # --- BatchNorm2d (eval mode): folded per-channel scale/shift, dense store.
        obase = pl.multiple_of(tc * chunk_l, tile_nv)
        o_ref[:, pl.ds(obase, chunk_l)] = (m * scale + shift).astype(o_ref.dtype)
        return carry

    lax.fori_loop(0, n_tchunks, chunk_body, 0, unroll=True)


def unit_conv2d_forward(x, w, b, gamma, beta, running_mean, running_var,
                        *, kernel_size=9, eps=1e-5, tile_nv=128, tile_t=8,
                        compute_dtype=jnp.bfloat16):
    """x: (N, C_in, T, V) NCHW, w: (C_out, C_in, K, 1), b/gamma/beta/mean/var: (C_out,)."""
    N, C_in, T, V = x.shape
    C_out = w.shape[0]
    K = kernel_size
    if K % 2 != 1:
        raise NotImplementedError("same-padding arithmetic assumes odd kernel_size")
    pad = (K - 1) // 2
    out_dtype = x.dtype

    # --- tiling: N*V chunks of 128 lanes; time padded to a multiple of tile_t.
    NV = N * V
    NVp = -(-NV // tile_nv) * tile_nv
    NVc = NVp // tile_nv
    tile_t = min(tile_t, T)
    n_tchunks = -(-T // tile_t)
    T_out = n_tchunks * tile_t
    Tp = T_out + K - 1                       # left pad = pad, right pad = pad + (T_out - T)

    # --- C_out tiling (second, parallel grid axis).
    C_out_pad = -(-C_out // 8) * 8
    co_tile = 128 if (C_out_pad >= 128 and C_out_pad % 128 == 0) else C_out_pad
    n_co = C_out_pad // co_tile

    # --- glue: NCHW -> (NVc, C_in, Tp*128), time-major lanes, bf16 (half-width HBM pass).
    xt = jnp.transpose(x.astype(compute_dtype), (1, 2, 0, 3)).reshape(C_in, T, NV)
    xt = jnp.pad(xt, ((0, 0), (pad, pad + (T_out - T)), (0, NVp - NV)))
    xg = jnp.transpose(xt.reshape(C_in, Tp, NVc, tile_nv), (2, 0, 1, 3)).reshape(
        NVc, C_in, Tp * tile_nv)

    # Weights: (C_out, C_in, K, 1) -> (K, C_out_pad, C_in) so tap k is w_ref[k].
    w3 = jnp.transpose(w[:, :, :, 0], (2, 0, 1)).astype(compute_dtype)   # (K, C_out, C_in)
    w3 = jnp.pad(w3, ((0, 0), (0, C_out_pad - C_out), (0, 0)))

    # BatchNorm eval-mode folding (f32 epilogue).
    scale = (gamma / jnp.sqrt(running_var + eps)).astype(jnp.float32)
    shift = (beta - running_mean * scale).astype(jnp.float32)
    b2 = jnp.pad(b.astype(jnp.float32), (0, C_out_pad - C_out)).reshape(C_out_pad, 1)
    scale2 = jnp.pad(scale, (0, C_out_pad - C_out)).reshape(C_out_pad, 1)
    shift2 = jnp.pad(shift, (0, C_out_pad - C_out)).reshape(C_out_pad, 1)

    # --- VMEM budget from actual double-buffered blocks (fits v7x's 64 MiB too).
    isz_c = jnp.dtype(compute_dtype).itemsize
    isz_o = jnp.dtype(out_dtype).itemsize
    bytes_x_blk = C_in * Tp * tile_nv * isz_c
    bytes_o_blk = co_tile * T_out * tile_nv * isz_o
    bytes_w_blk = K * co_tile * C_in * isz_c
    bytes_vec = 3 * co_tile * 4
    vmem_limit = 2 * (bytes_x_blk + bytes_o_blk + bytes_w_blk + bytes_vec) + (4 << 20)
    vmem_limit = int(max(min(vmem_limit, 60 << 20), 8 << 20))

    kernel = functools.partial(unit_conv2d_kernel, K=K, C_in=C_in,
                               tile_t=tile_t, tile_nv=tile_nv, n_tchunks=n_tchunks)

    out = pl.pallas_call(
        kernel,
        out_shape=jax.ShapeDtypeStruct((NVc, C_out_pad, T_out * tile_nv), out_dtype),
        grid=(NVc, n_co),
        in_specs=[
            # activation chunk j: co-invariant -> DMA'd once per j, pipelined over j
            pl.BlockSpec((None, C_in, Tp * tile_nv), lambda j, co: (j, 0, 0)),
            # per-C_out-tile weights / bias / BN vectors
            pl.BlockSpec((K, co_tile, C_in), lambda j, co: (0, co, 0)),
            pl.BlockSpec((co_tile, 1), lambda j, co: (co, 0)),
            pl.BlockSpec((co_tile, 1), lambda j, co: (co, 0)),
            pl.BlockSpec((co_tile, 1), lambda j, co: (co, 0)),
        ],
        out_specs=pl.BlockSpec((None, co_tile, T_out * tile_nv), lambda j, co: (j, co, 0)),
        compiler_params=pltpu.CompilerParams(
            dimension_semantics=("parallel", "parallel"),
            vmem_limit_bytes=vmem_limit,
        ),
    )(xg, w3, b2, scale2, shift2)

    # --- glue: (NVc, C_out_pad, T_out*128) -> (N, C_out, T, V)
    out = out.reshape(NVc, C_out_pad, T_out, tile_nv)
    out = jnp.transpose(out, (1, 2, 0, 3)).reshape(C_out_pad, T_out, NVp)
    out = out[:C_out, :T, :NV].reshape(C_out, T, N, V)
    return jnp.transpose(out, (2, 0, 1, 3))


def _reference_forward(x, w, b, gamma, beta, running_mean, running_var,
                       *, kernel_size=9, eps=1e-5):
    """Pure-JAX reference: Conv2d((K,1), same-pad) -> Mish -> eval-mode BatchNorm2d."""
    pad = (kernel_size - 1) // 2
    y = lax.conv_general_dilated(x, w, window_strides=(1, 1),
                                 padding=((pad, pad), (0, 0)),
                                 dimension_numbers=("NCHW", "OIHW", "NCHW"))
    y = y + b.reshape(1, -1, 1, 1)
    sp = jnp.where(y > 20.0, y, jnp.log1p(jnp.exp(jnp.minimum(y, 20.0))))
    y = y * jnp.tanh(sp)
    scale = gamma / jnp.sqrt(running_var + eps)
    shift = beta - running_mean * scale
    return y * scale.reshape(1, -1, 1, 1) + shift.reshape(1, -1, 1, 1)


if __name__ == "__main__":
    key = jax.random.PRNGKey(0)
    # Small but multi-tile shapes: N*V = 256 -> two 128-lane chunks -> grid=(2, 1)
    N, D_in, D_out, T, V, K = 8, 4, 8, 16, 32, 9

    kx, kw, kb = jax.random.split(key, 3)
    x = jax.random.normal(kx, (N, D_in, T, V), jnp.float32)

    # conv_init: weight ~ Normal(0, sqrt(2 / (out_channels * prod(kernel_size))))
    n = D_out * K * 1
    w = jax.random.normal(kw, (D_out, D_in, K, 1), jnp.float32) * math.sqrt(2.0 / n)

    # Conv2d bias keeps PyTorch default uniform(-1/sqrt(fan_in), 1/sqrt(fan_in))
    fan_in = D_in * K * 1
    bound = 1.0 / math.sqrt(fan_in)
    b = jax.random.uniform(kb, (D_out,), jnp.float32, -bound, bound)

    # BatchNorm2d default parameters / running stats (eval mode)
    gamma = jnp.ones((D_out,), jnp.float32)
    beta = jnp.zeros((D_out,), jnp.float32)
    running_mean = jnp.zeros((D_out,), jnp.float32)
    running_var = jnp.ones((D_out,), jnp.float32)

    out = unit_conv2d_forward(x, w, b, gamma, beta, running_mean, running_var,
                              kernel_size=K)
    jax.block_until_ready(out)
    assert out.shape == (N, D_out, T, V)

    ref = _reference_forward(x, w, b, gamma, beta, running_mean, running_var,
                             kernel_size=K)
    max_err = float(jnp.max(jnp.abs(out - ref)))
    assert max_err < 5e-2, f"max abs error vs reference too large: {max_err}"

    print("KERNEL_OK")
</pallas_src>

<mosaic_0001>
module attributes {stable_mosaic.version = 11 : i64} {
  func.func @unit_conv2d_kernel(%arg0: i32, %arg1: i32, %arg2: memref<1x4x3072xbf16, #tpu.memory_space<vmem>>, %arg3: memref<9x8x4xbf16, #tpu.memory_space<vmem>>, %arg4: memref<8x1xf32, #tpu.memory_space<vmem>>, %arg5: memref<8x1xf32, #tpu.memory_space<vmem>>, %arg6: memref<8x1xf32, #tpu.memory_space<vmem>>, %arg7: memref<1x8x2048xf32, #tpu.memory_space<vmem>>) attributes {dimension_semantics = [#tpu.dimension_semantics<parallel>, #tpu.dimension_semantics<parallel>], iteration_bounds = array<i64: 2, 1>, scalar_prefetch = 0 : i64, scratch_operands = 0 : i64, tpu.core_type = #tpu.core_type<tc>, window_params = [{transform_indices = @transform_0, window_bounds = array<i64: 1, 4, 3072>}, {transform_indices = @transform_1, window_bounds = array<i64: 9, 8, 4>}, {transform_indices = @transform_2, window_bounds = array<i64: 8, 1>}, {transform_indices = @transform_3, window_bounds = array<i64: 8, 1>}, {transform_indices = @transform_4, window_bounds = array<i64: 8, 1>}, {transform_indices = @transform_5, window_bounds = array<i64: 1, 8, 2048>}]} {
    %c0 = arith.constant 0 : index
    %c0_0 = arith.constant 0 : index
    %c0_1 = arith.constant 0 : index
    %0 = vector.load %arg3[%c0, %c0_0, %c0_1] : memref<9x8x4xbf16, #tpu.memory_space<vmem>>, vector<1x8x4xbf16>
    %1 = vector.shape_cast %0 : vector<1x8x4xbf16> to vector<8x4xbf16>
    %c1 = arith.constant 1 : index
    %c0_2 = arith.constant 0 : index
    %c0_3 = arith.constant 0 : index
    %2 = vector.load %arg3[%c1, %c0_2, %c0_3] : memref<9x8x4xbf16, #tpu.memory_space<vmem>>, vector<1x8x4xbf16>
    %3 = vector.shape_cast %2 : vector<1x8x4xbf16> to vector<8x4xbf16>
    %c2 = arith.constant 2 : index
    %c0_4 = arith.constant 0 : index
    %c0_5 = arith.constant 0 : index
    %4 = vector.load %arg3[%c2, %c0_4, %c0_5] : memref<9x8x4xbf16, #tpu.memory_space<vmem>>, vector<1x8x4xbf16>
    %5 = vector.shape_cast %4 : vector<1x8x4xbf16> to vector<8x4xbf16>
    %c3 = arith.constant 3 : index
    %c0_6 = arith.constant 0 : index
    %c0_7 = arith.constant 0 : index
    %6 = vector.load %arg3[%c3, %c0_6, %c0_7] : memref<9x8x4xbf16, #tpu.memory_space<vmem>>, vector<1x8x4xbf16>
    %7 = vector.shape_cast %6 : vector<1x8x4xbf16> to vector<8x4xbf16>
    %c4 = arith.constant 4 : index
    %c0_8 = arith.constant 0 : index
    %c0_9 = arith.constant 0 : index
    %8 = vector.load %arg3[%c4, %c0_8, %c0_9] : memref<9x8x4xbf16, #tpu.memory_space<vmem>>, vector<1x8x4xbf16>
    %9 = vector.shape_cast %8 : vector<1x8x4xbf16> to vector<8x4xbf16>
    %c5 = arith.constant 5 : index
    %c0_10 = arith.constant 0 : index
    %c0_11 = arith.constant 0 : index
    %10 = vector.load %arg3[%c5, %c0_10, %c0_11] : memref<9x8x4xbf16, #tpu.memory_space<vmem>>, vector<1x8x4xbf16>
    %11 = vector.shape_cast %10 : vector<1x8x4xbf16> to vector<8x4xbf16>
    %c6 = arith.constant 6 : index
    %c0_12 = arith.constant 0 : index
    %c0_13 = arith.constant 0 : index
    %12 = vector.load %arg3[%c6, %c0_12, %c0_13] : memref<9x8x4xbf16, #tpu.memory_space<vmem>>, vector<1x8x4xbf16>
    %13 = vector.shape_cast %12 : vector<1x8x4xbf16> to vector<8x4xbf16>
    %c7 = arith.constant 7 : index
    %c0_14 = arith.constant 0 : index
    %c0_15 = arith.constant 0 : index
    %14 = vector.load %arg3[%c7, %c0_14, %c0_15] : memref<9x8x4xbf16, #tpu.memory_space<vmem>>, vector<1x8x4xbf16>
    %15 = vector.shape_cast %14 : vector<1x8x4xbf16> to vector<8x4xbf16>
    %c8 = arith.constant 8 : index
    %c0_16 = arith.constant 0 : index
    %c0_17 = arith.constant 0 : index
    %16 = vector.load %arg3[%c8, %c0_16, %c0_17] : memref<9x8x4xbf16, #tpu.memory_space<vmem>>, vector<1x8x4xbf16>
    %17 = vector.shape_cast %16 : vector<1x8x4xbf16> to vector<8x4xbf16>
    %c0_18 = arith.constant 0 : index
    %c0_19 = arith.constant 0 : index
    %18 = vector.load %arg4[%c0_18, %c0_19] : memref<8x1xf32, #tpu.memory_space<vmem>>, vector<8x1xf32>
    %c0_20 = arith.constant 0 : index
    %c0_21 = arith.constant 0 : index
    %19 = vector.load %arg5[%c0_20, %c0_21] : memref<8x1xf32, #tpu.memory_space<vmem>>, vector<8x1xf32>
    %c0_22 = arith.constant 0 : index
    %c0_23 = arith.constant 0 : index
    %20 = vector.load %arg6[%c0_22, %c0_23] : memref<8x1xf32, #tpu.memory_space<vmem>>, vector<8x1xf32>
    %c0_i32 = arith.constant 0 : i32
    %c8_i32 = arith.constant 8 : i32
    %21 = arith.muli %c0_i32, %c8_i32 : i32
    %c128_i32 = arith.constant 128 : i32
    %22 = arith.muli %21, %c128_i32 : i32
    %23 = tpu.assume_multiple %22, 128 : i32
    %c0_24 = arith.constant 0 : index
    %c0_25 = arith.constant 0 : index
    %24 = arith.index_cast %23 : i32 to index
    %25 = vector.load %arg2[%c0_24, %c0_25, %24] : memref<1x4x3072xbf16, #tpu.memory_space<vmem>>, vector<1x4x1024xbf16>
    %26 = vector.shape_cast %25 : vector<1x4x1024xbf16> to vector<4x1024xbf16>
    %cst = arith.constant dense<0.000000e+00> : vector<8x1024xf32>
    %27 = tpu.matmul %1, %26, %cst {dimension_numbers = #tpu.dot_dimension_numbers<[1], [0], [0], [1], [0, 0, 1, 1], [], []>} : vector<8x4xbf16>, vector<4x1024xbf16>, vector<8x1024xf32> -> vector<8x1024xf32>
    %c1_i32 = arith.constant 1 : i32
    %28 = arith.addi %21, %c1_i32 : i32
    %c128_i32_26 = arith.constant 128 : i32
    %29 = arith.muli %28, %c128_i32_26 : i32
    %30 = tpu.assume_multiple %29, 128 : i32
    %c0_27 = arith.constant 0 : index
    %c0_28 = arith.constant 0 : index
    %31 = arith.index_cast %30 : i32 to index
    %32 = vector.load %arg2[%c0_27, %c0_28, %31] : memref<1x4x3072xbf16, #tpu.memory_space<vmem>>, vector<1x4x1024xbf16>
    %33 = vector.shape_cast %32 : vector<1x4x1024xbf16> to vector<4x1024xbf16>
    %cst_29 = arith.constant dense<0.000000e+00> : vector<8x1024xf32>
    %34 = tpu.matmul %3, %33, %cst_29 {dimension_numbers = #tpu.dot_dimension_numbers<[1], [0], [0], [1], [0, 0, 1, 1], [], []>} : vector<8x4xbf16>, vector<4x1024xbf16>, vector<8x1024xf32> -> vector<8x1024xf32>
    %35 = arith.addf %27, %34 : vector<8x1024xf32>
    %c2_i32 = arith.constant 2 : i32
    %36 = arith.addi %21, %c2_i32 : i32
    %c128_i32_30 = arith.constant 128 : i32
    %37 = arith.muli %36, %c128_i32_30 : i32
    %38 = tpu.assume_multiple %37, 128 : i32
    %c0_31 = arith.constant 0 : index
    %c0_32 = arith.constant 0 : index
    %39 = arith.index_cast %38 : i32 to index
    %40 = vector.load %arg2[%c0_31, %c0_32, %39] : memref<1x4x3072xbf16, #tpu.memory_space<vmem>>, vector<1x4x1024xbf16>
    %41 = vector.shape_cast %40 : vector<1x4x1024xbf16> to vector<4x1024xbf16>
    %cst_33 = arith.constant dense<0.000000e+00> : vector<8x1024xf32>
    %42 = tpu.matmul %5, %41, %cst_33 {dimension_numbers = #tpu.dot_dimension_numbers<[1], [0], [0], [1], [0, 0, 1, 1], [], []>} : vector<8x4xbf16>, vector<4x1024xbf16>, vector<8x1024xf32> -> vector<8x1024xf32>
    %43 = arith.addf %35, %42 : vector<8x1024xf32>
    %c3_i32 = arith.constant 3 : i32
    %44 = arith.addi %21, %c3_i32 : i32
    %c128_i32_34 = arith.constant 128 : i32
    %45 = arith.muli %44, %c128_i32_34 : i32
    %46 = tpu.assume_multiple %45, 128 : i32
    %c0_35 = arith.constant 0 : index
    %c0_36 = arith.constant 0 : index
    %47 = arith.index_cast %46 : i32 to index
    %48 = vector.load %arg2[%c0_35, %c0_36, %47] : memref<1x4x3072xbf16, #tpu.memory_space<vmem>>, vector<1x4x1024xbf16>
    %49 = vector.shape_cast %48 : vector<1x4x1024xbf16> to vector<4x1024xbf16>
    %cst_37 = arith.constant dense<0.000000e+00> : vector<8x1024xf32>
    %50 = tpu.matmul %7, %49, %cst_37 {dimension_numbers = #tpu.dot_dimension_numbers<[1], [0], [0], [1], [0, 0, 1, 1], [], []>} : vector<8x4xbf16>, vector<4x1024xbf16>, vector<8x1024xf32> -> vector<8x1024xf32>
    %51 = arith.addf %43, %50 : vector<8x1024xf32>
    %c4_i32 = arith.constant 4 : i32
    %52 = arith.addi %21, %c4_i32 : i32
    %c128_i32_38 = arith.constant 128 : i32
    %53 = arith.muli %52, %c128_i32_38 : i32
    %54 = tpu.assume_multiple %53, 128 : i32
    %c0_39 = arith.constant 0 : index
    %c0_40 = arith.constant 0 : index
    %55 = arith.index_cast %54 : i32 to index
    %56 = vector.load %arg2[%c0_39, %c0_40, %55] : memref<1x4x3072xbf16, #tpu.memory_space<vmem>>, vector<1x4x1024xbf16>
    %57 = vector.shape_cast %56 : vector<1x4x1024xbf16> to vector<4x1024xbf16>
    %cst_41 = arith.constant dense<0.000000e+00> : vector<8x1024xf32>
    %58 = tpu.matmul %9, %57, %cst_41 {dimension_numbers = #tpu.dot_dimension_numbers<[1], [0], [0], [1], [0, 0, 1, 1], [], []>} : vector<8x4xbf16>, vector<4x1024xbf16>, vector<8x1024xf32> -> vector<8x1024xf32>
    %59 = arith.addf %51, %58 : vector<8x1024xf32>
    %c5_i32 = arith.constant 5 : i32
    %60 = arith.addi %21, %c5_i32 : i32
    %c128_i32_42 = arith.constant 128 : i32
    %61 = arith.muli %60, %c128_i32_42 : i32
    %62 = tpu.assume_multiple %61, 128 : i32
    %c0_43 = arith.constant 0 : index
    %c0_44 = arith.constant 0 : index
    %63 = arith.index_cast %62 : i32 to index
    %64 = vector.load %arg2[%c0_43, %c0_44, %63] : memref<1x4x3072xbf16, #tpu.memory_space<vmem>>, vector<1x4x1024xbf16>
    %65 = vector.shape_cast %64 : vector<1x4x1024xbf16> to vector<4x1024xbf16>
    %cst_45 = arith.constant dense<0.000000e+00> : vector<8x1024xf32>
    %66 = tpu.matmul %11, %65, %cst_45 {dimension_numbers = #tpu.dot_dimension_numbers<[1], [0], [0], [1], [0, 0, 1, 1], [], []>} : vector<8x4xbf16>, vector<4x1024xbf16>, vector<8x1024xf32> -> vector<8x1024xf32>
    %67 = arith.addf %59, %66 : vector<8x1024xf32>
    %c6_i32 = arith.constant 6 : i32
    %68 = arith.addi %21, %c6_i32 : i32
    %c128_i32_46 = arith.constant 128 : i32
    %69 = arith.muli %68, %c128_i32_46 : i32
    %70 = tpu.assume_multiple %69, 128 : i32
    %c0_47 = arith.constant 0 : index
    %c0_48 = arith.constant 0 : index
    %71 = arith.index_cast %70 : i32 to index
    %72 = vector.load %arg2[%c0_47, %c0_48, %71] : memref<1x4x3072xbf16, #tpu.memory_space<vmem>>, vector<1x4x1024xbf16>
    %73 = vector.shape_cast %72 : vector<1x4x1024xbf16> to vector<4x1024xbf16>
    %cst_49 = arith.constant dense<0.000000e+00> : vector<8x1024xf32>
    %74 = tpu.matmul %13, %73, %cst_49 {dimension_numbers = #tpu.dot_dimension_numbers<[1], [0], [0], [1], [0, 0, 1, 1], [], []>} : vector<8x4xbf16>, vector<4x1024xbf16>, vector<8x1024xf32> -> vector<8x1024xf32>
    %75 = arith.addf %67, %74 : vector<8x1024xf32>
    %c7_i32 = arith.constant 7 : i32
    %76 = arith.addi %21, %c7_i32 : i32
    %c128_i32_50 = arith.constant 128 : i32
    %77 = arith.muli %76, %c128_i32_50 : i32
    %78 = tpu.assume_multiple %77, 128 : i32
    %c0_51 = arith.constant 0 : index
    %c0_52 = arith.constant 0 : index
    %79 = arith.index_cast %78 : i32 to index
    %80 = vector.load %arg2[%c0_51, %c0_52, %79] : memref<1x4x3072xbf16, #tpu.memory_space<vmem>>, vector<1x4x1024xbf16>
    %81 = vector.shape_cast %80 : vector<1x4x1024xbf16> to vector<4x1024xbf16>
    %cst_53 = arith.constant dense<0.000000e+00> : vector<8x1024xf32>
    %82 = tpu.matmul %15, %81, %cst_53 {dimension_numbers = #tpu.dot_dimension_numbers<[1], [0], [0], [1], [0, 0, 1, 1], [], []>} : vector<8x4xbf16>, vector<4x1024xbf16>, vector<8x1024xf32> -> vector<8x1024xf32>
    %83 = arith.addf %75, %82 : vector<8x1024xf32>
    %c8_i32_54 = arith.constant 8 : i32
    %84 = arith.addi %21, %c8_i32_54 : i32
    %c128_i32_55 = arith.constant 128 : i32
    %85 = arith.muli %84, %c128_i32_55 : i32
    %86 = tpu.assume_multiple %85, 128 : i32
    %c0_56 = arith.constant 0 : index
    %c0_57 = arith.constant 0 : index
    %87 = arith.index_cast %86 : i32 to index
    %88 = vector.load %arg2[%c0_56, %c0_57, %87] : memref<1x4x3072xbf16, #tpu.memory_space<vmem>>, vector<1x4x1024xbf16>
    %89 = vector.shape_cast %88 : vector<1x4x1024xbf16> to vector<4x1024xbf16>
    %cst_58 = arith.constant dense<0.000000e+00> : vector<8x1024xf32>
    %90 = tpu.matmul %17, %89, %cst_58 {dimension_numbers = #tpu.dot_dimension_numbers<[1], [0], [0], [1], [0, 0, 1, 1], [], []>} : vector<8x4xbf16>, vector<4x1024xbf16>, vector<8x1024xf32> -> vector<8x1024xf32>
    %91 = arith.addf %83, %90 : vector<8x1024xf32>
    %92 = vector.broadcast %18 : vector<8x1xf32> to vector<8x1024xf32>
    %93 = arith.addf %91, %92 : vector<8x1024xf32>
    %cst_59 = arith.constant 2.000000e+01 : f32
    %94 = vector.broadcast %cst_59 : f32 to vector<8x1024xf32>
    %95 = arith.minimumf %93, %94 : vector<8x1024xf32>
    %96 = math.exp %95 : vector<8x1024xf32>
    %cst_60 = arith.constant 2.000000e+00 : f32
    %97 = vector.broadcast %cst_60 : f32 to vector<8x1024xf32>
    %98 = arith.addf %96, %97 : vector<8x1024xf32>
    %99 = arith.mulf %96, %98 : vector<8x1024xf32>
    %cst_61 = arith.constant 2.000000e+00 : f32
    %100 = vector.broadcast %cst_61 : f32 to vector<8x1024xf32>
    %101 = arith.addf %99, %100 : vector<8x1024xf32>
    %102 = tpu.reciprocal %101 {approx = true} : vector<8x1024xf32> -> vector<8x1024xf32>
    %103 = arith.mulf %99, %102 : vector<8x1024xf32>
    %cst_62 = arith.constant 2.000000e+01 : f32
    %104 = vector.broadcast %cst_62 : f32 to vector<8x1024xf32>
    %105 = arith.cmpf ogt, %93, %104 : vector<8x1024xf32>
    %106 = arith.mulf %93, %103 : vector<8x1024xf32>
    %107 = arith.select %105, %93, %106 : vector<8x1024xi1>, vector<8x1024xf32>
    %c1024_i32 = arith.constant 1024 : i32
    %108 = arith.muli %c0_i32, %c1024_i32 : i32
    %109 = tpu.assume_multiple %108, 128 : i32
    %110 = vector.broadcast %19 : vector<8x1xf32> to vector<8x1024xf32>
    %111 = arith.mulf %107, %110 : vector<8x1024xf32>
    %112 = vector.broadcast %20 : vector<8x1xf32> to vector<8x1024xf32>
    %113 = arith.addf %111, %112 : vector<8x1024xf32>
    %c0_63 = arith.constant 0 : index
    %c0_64 = arith.constant 0 : index
    %114 = arith.index_cast %109 : i32 to index
    %115 = vector.load %arg7[%c0_63, %c0_64, %114] : memref<1x8x2048xf32, #tpu.memory_space<vmem>>, vector<1x8x1024xf32>
    %116 = vector.shape_cast %115 : vector<1x8x1024xf32> to vector<8x1024xf32>
    %117 = vector.shape_cast %113 : vector<8x1024xf32> to vector<1x8x1024xf32>
    tpu.vector_store %arg7[%c0_63, %c0_64, %114], %117 {strides = array<i32>} : memref<1x8x2048xf32, #tpu.memory_space<vmem>>, vector<1x8x1024xf32>,
    %c1_i32_65 = arith.constant 1 : i32
    %c8_i32_66 = arith.constant 8 : i32
    %118 = arith.muli %c1_i32_65, %c8_i32_66 : i32
    %c128_i32_67 = arith.constant 128 : i32
    %119 = arith.muli %118, %c128_i32_67 : i32
    %120 = tpu.assume_multiple %119, 128 : i32
    %c0_68 = arith.constant 0 : index
    %c0_69 = arith.constant 0 : index
    %121 = arith.index_cast %120 : i32 to index
    %122 = vector.load %arg2[%c0_68, %c0_69, %121] : memref<1x4x3072xbf16, #tpu.memory_space<vmem>>, vector<1x4x1024xbf16>
    %123 = vector.shape_cast %122 : vector<1x4x1024xbf16> to vector<4x1024xbf16>
    %cst_70 = arith.constant dense<0.000000e+00> : vector<8x1024xf32>
    %124 = tpu.matmul %1, %123, %cst_70 {dimension_numbers = #tpu.dot_dimension_numbers<[1], [0], [0], [1], [0, 0, 1, 1], [], []>} : vector<8x4xbf16>, vector<4x1024xbf16>, vector<8x1024xf32> -> vector<8x1024xf32>
    %c1_i32_71 = arith.constant 1 : i32
    %125 = arith.addi %118, %c1_i32_71 : i32
    %c128_i32_72 = arith.constant 128 : i32
    %126 = arith.muli %125, %c128_i32_72 : i32
    %127 = tpu.assume_multiple %126, 128 : i32
    %c0_73 = arith.constant 0 : index
    %c0_74 = arith.constant 0 : index
    %128 = arith.index_cast %127 : i32 to index
    %129 = vector.load %arg2[%c0_73, %c0_74, %128] : memref<1x4x3072xbf16, #tpu.memory_space<vmem>>, vector<1x4x1024xbf16>
    %130 = vector.shape_cast %129 : vector<1x4x1024xbf16> to vector<4x1024xbf16>
    %cst_75 = arith.constant dense<0.000000e+00> : vector<8x1024xf32>
    %131 = tpu.matmul %3, %130, %cst_75 {dimension_numbers = #tpu.dot_dimension_numbers<[1], [0], [0], [1], [0, 0, 1, 1], [], []>} : vector<8x4xbf16>, vector<4x1024xbf16>, vector<8x1024xf32> -> vector<8x1024xf32>
    %132 = arith.addf %124, %131 : vector<8x1024xf32>
    %c2_i32_76 = arith.constant 2 : i32
    %133 = arith.addi %118, %c2_i32_76 : i32
    %c128_i32_77 = arith.constant 128 : i32
    %134 = arith.muli %133, %c128_i32_77 : i32
    %135 = tpu.assume_multiple %134, 128 : i32
    %c0_78 = arith.constant 0 : index
    %c0_79 = arith.constant 0 : index
    %136 = arith.index_cast %135 : i32 to index
    %137 = vector.load %arg2[%c0_78, %c0_79, %136] : memref<1x4x3072xbf16, #tpu.memory_space<vmem>>, vector<1x4x1024xbf16>
    %138 = vector.shape_cast %137 : vector<1x4x1024xbf16> to vector<4x1024xbf16>
    %cst_80 = arith.constant dense<0.000000e+00> : vector<8x1024xf32>
    %139 = tpu.matmul %5, %138, %cst_80 {dimension_numbers = #tpu.dot_dimension_numbers<[1], [0], [0], [1], [0, 0, 1, 1], [], []>} : vector<8x4xbf16>, vector<4x1024xbf16>, vector<8x1024xf32> -> vector<8x1024xf32>
    %140 = arith.addf %132, %139 : vector<8x1024xf32>
    %c3_i32_81 = arith.constant 3 : i32
    %141 = arith.addi %118, %c3_i32_81 : i32
    %c128_i32_82 = arith.constant 128 : i32
    %142 = arith.muli %141, %c128_i32_82 : i32
    %143 = tpu.assume_multiple %142, 128 : i32
    %c0_83 = arith.constant 0 : index
    %c0_84 = arith.constant 0 : index
    %144 = arith.index_cast %143 : i32 to index
    %145 = vector.load %arg2[%c0_83, %c0_84, %144] : memref<1x4x3072xbf16, #tpu.memory_space<vmem>>, vector<1x4x1024xbf16>
    %146 = vector.shape_cast %145 : vector<1x4x1024xbf16> to vector<4x1024xbf16>
    %cst_85 = arith.constant dense<0.000000e+00> : vector<8x1024xf32>
    %147 = tpu.matmul %7, %146, %cst_85 {dimension_numbers = #tpu.dot_dimension_numbers<[1], [0], [0], [1], [0, 0, 1, 1], [], []>} : vector<8x4xbf16>, vector<4x1024xbf16>, vector<8x1024xf32> -> vector<8x1024xf32>
    %148 = arith.addf %140, %147 : vector<8x1024xf32>
    %c4_i32_86 = arith.constant 4 : i32
    %149 = arith.addi %118, %c4_i32_86 : i32
    %c128_i32_87 = arith.constant 128 : i32
    %150 = arith.muli %149, %c128_i32_87 : i32
    %151 = tpu.assume_multiple %150, 128 : i32
    %c0_88 = arith.constant 0 : index
    %c0_89 = arith.constant 0 : index
    %152 = arith.index_cast %151 : i32 to index
    %153 = vector.load %arg2[%c0_88, %c0_89, %152] : memref<1x4x3072xbf16, #tpu.memory_space<vmem>>, vector<1x4x1024xbf16>
    %154 = vector.shape_cast %153 : vector<1x4x1024xbf16> to vector<4x1024xbf16>
    %cst_90 = arith.constant dense<0.000000e+00> : vector<8x1024xf32>
    %155 = tpu.matmul %9, %154, %cst_90 {dimension_numbers = #tpu.dot_dimension_numbers<[1], [0], [0], [1], [0, 0, 1, 1], [], []>} : vector<8x4xbf16>, vector<4x1024xbf16>, vector<8x1024xf32> -> vector<8x1024xf32>
    %156 = arith.addf %148, %155 : vector<8x1024xf32>
    %c5_i32_91 = arith.constant 5 : i32
    %157 = arith.addi %118, %c5_i32_91 : i32
    %c128_i32_92 = arith.constant 128 : i32
    %158 = arith.muli %157, %c128_i32_92 : i32
    %159 = tpu.assume_multiple %158, 128 : i32
    %c0_93 = arith.constant 0 : index
    %c0_94 = arith.constant 0 : index
    %160 = arith.index_cast %159 : i32 to index
    %161 = vector.load %arg2[%c0_93, %c0_94, %160] : memref<1x4x3072xbf16, #tpu.memory_space<vmem>>, vector<1x4x1024xbf16>
    %162 = vector.shape_cast %161 : vector<1x4x1024xbf16> to vector<4x1024xbf16>
    %cst_95 = arith.constant dense<0.000000e+00> : vector<8x1024xf32>
    %163 = tpu.matmul %11, %162, %cst_95 {dimension_numbers = #tpu.dot_dimension_numbers<[1], [0], [0], [1], [0, 0, 1, 1], [], []>} : vector<8x4xbf16>, vector<4x1024xbf16>, vector<8x1024xf32> -> vector<8x1024xf32>
    %164 = arith.addf %156, %163 : vector<8x1024xf32>
    %c6_i32_96 = arith.constant 6 : i32
    %165 = arith.addi %118, %c6_i32_96 : i32
    %c128_i32_97 = arith.constant 128 : i32
    %166 = arith.muli %165, %c128_i32_97 : i32
    %167 = tpu.assume_multiple %166, 128 : i32
    %c0_98 = arith.constant 0 : index
    %c0_99 = arith.constant 0 : index
    %168 = arith.index_cast %167 : i32 to index
    %169 = vector.load %arg2[%c0_98, %c0_99, %168] : memref<1x4x3072xbf16, #tpu.memory_space<vmem>>, vector<1x4x1024xbf16>
    %170 = vector.shape_cast %169 : vector<1x4x1024xbf16> to vector<4x1024xbf16>
    %cst_100 = arith.constant dense<0.000000e+00> : vector<8x1024xf32>
    %171 = tpu.matmul %13, %170, %cst_100 {dimension_numbers = #tpu.dot_dimension_numbers<[1], [0], [0], [1], [0, 0, 1, 1], [], []>} : vector<8x4xbf16>, vector<4x1024xbf16>, vector<8x1024xf32> -> vector<8x1024xf32>
    %172 = arith.addf %164, %171 : vector<8x1024xf32>
    %c7_i32_101 = arith.constant 7 : i32
    %173 = arith.addi %118, %c7_i32_101 : i32
    %c128_i32_102 = arith.constant 128 : i32
    %174 = arith.muli %173, %c128_i32_102 : i32
    %175 = tpu.assume_multiple %174, 128 : i32
    %c0_103 = arith.constant 0 : index
    %c0_104 = arith.constant 0 : index
    %176 = arith.index_cast %175 : i32 to index
    %177 = vector.load %arg2[%c0_103, %c0_104, %176] : memref<1x4x3072xbf16, #tpu.memory_space<vmem>>, vector<1x4x1024xbf16>
    %178 = vector.shape_cast %177 : vector<1x4x1024xbf16> to vector<4x1024xbf16>
    %cst_105 = arith.constant dense<0.000000e+00> : vector<8x1024xf32>
    %179 = tpu.matmul %15, %178, %cst_105 {dimension_numbers = #tpu.dot_dimension_numbers<[1], [0], [0], [1], [0, 0, 1, 1], [], []>} : vector<8x4xbf16>, vector<4x1024xbf16>, vector<8x1024xf32> -> vector<8x1024xf32>
    %180 = arith.addf %172, %179 : vector<8x1024xf32>
    %c8_i32_106 = arith.constant 8 : i32
    %181 = arith.addi %118, %c8_i32_106 : i32
    %c128_i32_107 = arith.constant 128 : i32
    %182 = arith.muli %181, %c128_i32_107 : i32
    %183 = tpu.assume_multiple %182, 128 : i32
    %c0_108 = arith.constant 0 : index
    %c0_109 = arith.constant 0 : index
    %184 = arith.index_cast %183 : i32 to index
    %185 = vector.load %arg2[%c0_108, %c0_109, %184] : memref<1x4x3072xbf16, #tpu.memory_space<vmem>>, vector<1x4x1024xbf16>
    %186 = vector.shape_cast %185 : vector<1x4x1024xbf16> to vector<4x1024xbf16>
    %cst_110 = arith.constant dense<0.000000e+00> : vector<8x1024xf32>
    %187 = tpu.matmul %17, %186, %cst_110 {dimension_numbers = #tpu.dot_dimension_numbers<[1], [0], [0], [1], [0, 0, 1, 1], [], []>} : vector<8x4xbf16>, vector<4x1024xbf16>, vector<8x1024xf32> -> vector<8x1024xf32>
    %188 = arith.addf %180, %187 : vector<8x1024xf32>
    %189 = vector.broadcast %18 : vector<8x1xf32> to vector<8x1024xf32>
    %190 = arith.addf %188, %189 : vector<8x1024xf32>
    %cst_111 = arith.constant 2.000000e+01 : f32
    %191 = vector.broadcast %cst_111 : f32 to vector<8x1024xf32>
    %192 = arith.minimumf %190, %191 : vector<8x1024xf32>
    %193 = math.exp %192 : vector<8x1024xf32>
    %cst_112 = arith.constant 2.000000e+00 : f32
    %194 = vector.broadcast %cst_112 : f32 to vector<8x1024xf32>
    %195 = arith.addf %193, %194 : vector<8x1024xf32>
    %196 = arith.mulf %193, %195 : vector<8x1024xf32>
    %cst_113 = arith.constant 2.000000e+00 : f32
    %197 = vector.broadcast %cst_113 : f32 to vector<8x1024xf32>
    %198 = arith.addf %196, %197 : vector<8x1024xf32>
    %199 = tpu.reciprocal %198 {approx = true} : vector<8x1024xf32> -> vector<8x1024xf32>
    %200 = arith.mulf %196, %199 : vector<8x1024xf32>
    %cst_114 = arith.constant 2.000000e+01 : f32
    %201 = vector.broadcast %cst_114 : f32 to vector<8x1024xf32>
    %202 = arith.cmpf ogt, %190, %201 : vector<8x1024xf32>
    %203 = arith.mulf %190, %200 : vector<8x1024xf32>
    %204 = arith.select %202, %190, %203 : vector<8x1024xi1>, vector<8x1024xf32>
    %c1024_i32_115 = arith.constant 1024 : i32
    %205 = arith.muli %c1_i32_65, %c1024_i32_115 : i32
    %206 = tpu.assume_multiple %205, 128 : i32
    %207 = vector.broadcast %19 : vector<8x1xf32> to vector<8x1024xf32>
    %208 = arith.mulf %204, %207 : vector<8x1024xf32>
    %209 = vector.broadcast %20 : vector<8x1xf32> to vector<8x1024xf32>
    %210 = arith.addf %208, %209 : vector<8x1024xf32>
    %c0_116 = arith.constant 0 : index
    %c0_117 = arith.constant 0 : index
    %211 = arith.index_cast %206 : i32 to index
    %212 = vector.load %arg7[%c0_116, %c0_117, %211] : memref<1x8x2048xf32, #tpu.memory_space<vmem>>, vector<1x8x1024xf32>
    %213 = vector.shape_cast %212 : vector<1x8x1024xf32> to vector<8x1024xf32>
    %214 = vector.shape_cast %210 : vector<8x1024xf32> to vector<1x8x1024xf32>
    tpu.vector_store %arg7[%c0_116, %c0_117, %211], %214 {strides = array<i32>} : memref<1x8x2048xf32, #tpu.memory_space<vmem>>, vector<1x8x1024xf32>,
    %c2_i32_118 = arith.constant 2 : i32
    return
  }
  func.func @transform_0(%arg0: i32, %arg1: i32) -> (i32, i32, i32) {
    %c0_i32 = arith.constant 0 : i32
    %c0_i32_0 = arith.constant 0 : i32
    %c0_i32_1 = arith.constant 0 : i32
    return %arg0, %c0_i32, %c0_i32_0 : i32, i32, i32
  }
  func.func @transform_1(%arg0: i32, %arg1: i32) -> (i32, i32, i32) {
    %c0_i32 = arith.constant 0 : i32
    %c0_i32_0 = arith.constant 0 : i32
    %c0_i32_1 = arith.constant 0 : i32
    return %c0_i32, %arg1, %c0_i32_0 : i32, i32, i32
  }
  func.func @transform_2(%arg0: i32, %arg1: i32) -> (i32, i32) {
    %c0_i32 = arith.constant 0 : i32
    %c0_i32_0 = arith.constant 0 : i32
    return %arg1, %c0_i32 : i32, i32
  }
  func.func @transform_3(%arg0: i32, %arg1: i32) -> (i32, i32) {
    %c0_i32 = arith.constant 0 : i32
    %c0_i32_0 = arith.constant 0 : i32
    return %arg1, %c0_i32 : i32, i32
  }
  func.func @transform_4(%arg0: i32, %arg1: i32) -> (i32, i32) {
    %c0_i32 = arith.constant 0 : i32
    %c0_i32_0 = arith.constant 0 : i32
    return %arg1, %c0_i32 : i32, i32
  }
  func.func @transform_5(%arg0: i32, %arg1: i32) -> (i32, i32, i32) {
    %c0_i32 = arith.constant 0 : i32
    %c0_i32_0 = arith.constant 0 : i32
    return %arg0, %arg1, %c0_i32 : i32, i32, i32
  }
}

</mosaic_0001>

<llo_original>
// kernel: tpu_custom_call.1
$region0: #{tpu_custom_call.1}
  #allocation0 [shape = 'u32[]', space=smem, size = 0x4, offset = 0x4, fixed_abs, tag = 'smem constant byte address 0x4 - core index']
  #allocation1 [shape = 'u32[144,128]{1,0:T(1,128)}', space=vmem, size = 0x12000, scoped, tag = 'internal scratch']
  %s0 = inlined_call_operand.hbm [shape: bf16[2,4,3072], index: 0, kind: input, shape index: {}]
  %s1 = inlined_call_operand.vmem [shape: bf16[9,8,4], index: 1, kind: input, shape index: {}]
  %s2 = inlined_call_operand.vmem [shape: f32[8,1], index: 2, kind: input, shape index: {}]
  %s3 = inlined_call_operand.vmem [shape: f32[8,1], index: 3, kind: input, shape index: {}]
  %s4 = inlined_call_operand.vmem [shape: f32[8,1], index: 4, kind: input, shape index: {}]
  %s5 = inlined_call_operand.hbm [shape: f32[2,8,2048], index: 5, kind: output, shape index: {}]
  %s6 = sld [smem:[#allocation0]]
  $region57: #{tpu_custom_call.1} parent=0
    _
  %s8 = ssub.s32 1, %s6
  %s9 = scalar_select 0, %s8, %s6
  $region1: #{tpu_custom_call.1} parent=0
    #allocation2 [shape = 'u8[49152]{0}', space=vmem, size = 0xc000, scoped, tag = 'input window, operand 0']
    #allocation3 [shape = 's32[2]{0}', space=sflag, size = 0x8, scoped, tag = 'scoped memory for tpu_custom_call.1']
    #allocation4 [shape = 's32[2]{0}', space=sflag, size = 0x8, scoped, tag = 'scoped memory for tpu_custom_call.1']
    #allocation5 [shape = 'u8[131072]{0}', space=vmem, size = 0x20000, scoped, tag = 'output window, operand 0']
    %10 = vsyncpa [#allocation3], 0
    %s11 = scalar_lea.sflag [#allocation3], 1
    %12 = vsyncpa %s11, 0
    %13 = vsyncpa [#allocation4], 0
    %s14 = scalar_lea.sflag [#allocation4], 1
    %15 = vsyncpa %s14, 0
    loop: start=0, step=1, limit=4
    $region2: #{tpu_custom_call.1} parent=1 // loop_pre_header
      _
    $region3: #{tpu_custom_call.1} parent=1 // loop_header
      %s17 = sphi 0, %s21
      %p18 = scmp.ge.s32.totalorder %s17, 4
      %s24 = sphi 0, %s36
      %s25 = sphi 0, %s32
      %s26 = sphi 0, %s24
      %s27 = sphi 0, %s25
      %s28 = sphi 0, %s26
      %s29 = sphi 0, %s27
      %s39 = sphi 0, %s41
      %s42 = sphi 0, %s39
      %s43 = sphi 0, %s42
      %s59 = sphi 0, %s43
      %s65 = sphi 0, %s67
      %s68 = sphi 0, %s65
      %s69 = sphi 0, %s68
      %s85 = sphi 0, %s69
      %s91 = sphi 0, %s93
      %s94 = sphi 0, %s91
      %s95 = sphi 0, %s94
      %s111 = sphi 0, %s95
      %s117 = sphi 0, %s119
      %s120 = sphi 0, %s117
      %s121 = sphi 0, %s120
      %s137 = sphi 0, %s121
      %s143 = sphi 0, %s145
      %s146 = sphi 0, %s143
      %s147 = sphi 0, %s146
      %s163 = sphi 0, %s147
      %s171 = sphi 0, %s173
      %s174 = sphi 0, %s171
      %s175 = sphi 0, %s174
      %s191 = sphi 0, %s175
    $region4: #{tpu_custom_call.1} parent=1 // loop_header_branch
      %20 = sbr.rel (%p18) target = $region8
    $region5: #{tpu_custom_call.1} parent=1 // loop_body
      %s22 = ssub.s32 %s17, 1
      %s23 = ssub.s32 %s17, 2
      %s30 = sadd.s32 1, %s25
      %p31 = scmp.ge.s32.totalorder %s30, 1
      %s32 = scalar_select %p31, 0, %s30
      %s33 = sadd.s32 1, %s24
      %s34 = scalar_select %p31, %s33, %s24
      %p35 = scmp.ge.s32.totalorder %s34, 2
      %s36 = scalar_select %p35, 0, %s34
      %s37 = ssub.s32 %s24, %s36
      %p38 = scmp.eq.s32.totalorder %s37, 0
      %s40 = sadd.s32 %s39, 1
      %s41 = scalar_select %p38, %s39, %s40
      %p44 = pneg %p38
      %p45 = scmp.eq.s32.totalorder %s17, 1
      %p46 = por %p44, %p45
      %p47 = scmp.ne.s32.totalorder %s39, %s42
      %p48 = scmp.eq.s32.totalorder %s17, 0
      %p49 = por %p47, %p48
      %p50 = scmp.ne.s32.totalorder %s39, %s42
      %p51 = scmp.eq.s32.totalorder %s22, 1
      %p52 = por %p50, %p51
      %p53 = scmp.ne.s32.totalorder %s42, %s43
      %p54 = scmp.eq.s32.totalorder %s22, 0
      %p55 = por %p53, %p54
      %p56 = scmp.ne.s32.totalorder %s42, %s43
      %p57 = scmp.eq.s32.totalorder %s23, 1
      %p58 = por %p56, %p57
      %p60 = scmp.ne.s32.totalorder %s43, %s59
      %p61 = scmp.eq.s32.totalorder %s23, 0
      %p62 = por %p60, %p61
      %s63 = ssub.s32 %s25, %s32
      %p64 = scmp.eq.s32.totalorder %s63, 0
      %s66 = sadd.s32 %s65, 1
      %s67 = scalar_select %p64, %s65, %s66
      %p70 = pneg %p64
      %p71 = scmp.eq.s32.totalorder %s17, 1
      %p72 = por %p70, %p71
      %p73 = scmp.ne.s32.totalorder %s65, %s68
      %p74 = scmp.eq.s32.totalorder %s17, 0
      %p75 = por %p73, %p74
      %p76 = scmp.ne.s32.totalorder %s65, %s68
      %p77 = scmp.eq.s32.totalorder %s22, 1
      %p78 = por %p76, %p77
      %p79 = scmp.ne.s32.totalorder %s68, %s69
      %p80 = scmp.eq.s32.totalorder %s22, 0
      %p81 = por %p79, %p80
      %p82 = scmp.ne.s32.totalorder %s68, %s69
      %p83 = scmp.eq.s32.totalorder %s23, 1
      %p84 = por %p82, %p83
      %p86 = scmp.ne.s32.totalorder %s69, %s85
      %p87 = scmp.eq.s32.totalorder %s23, 0
      %p88 = por %p86, %p87
      %s89 = ssub.s32 %s25, %s32
      %p90 = scmp.eq.s32.totalorder %s89, 0
      %s92 = sadd.s32 %s91, 1
      %s93 = scalar_select %p90, %s91, %s92
      %p96 = pneg %p90
      %p97 = scmp.eq.s32.totalorder %s17, 1
      %p98 = por %p96, %p97
      %p99 = scmp.ne.s32.totalorder %s91, %s94
      %p100 = scmp.eq.s32.totalorder %s17, 0
      %p101 = por %p99, %p100
      %p102 = scmp.ne.s32.totalorder %s91, %s94
      %p103 = scmp.eq.s32.totalorder %s22, 1
      %p104 = por %p102, %p103
      %p105 = scmp.ne.s32.totalorder %s94, %s95
      %p106 = scmp.eq.s32.totalorder %s22, 0
      %p107 = por %p105, %p106
      %p108 = scmp.ne.s32.totalorder %s94, %s95
      %p109 = scmp.eq.s32.totalorder %s23, 1
      %p110 = por %p108, %p109
      %p112 = scmp.ne.s32.totalorder %s95, %s111
      %p113 = scmp.eq.s32.totalorder %s23, 0
      %p114 = por %p112, %p113
      %s115 = ssub.s32 %s25, %s32
      %p116 = scmp.eq.s32.totalorder %s115, 0
      %s118 = sadd.s32 %s117, 1
      %s119 = scalar_select %p116, %s117, %s118
      %p122 = pneg %p116
      %p123 = scmp.eq.s32.totalorder %s17, 1
      %p124 = por %p122, %p123
      %p125 = scmp.ne.s32.totalorder %s117, %s120
      %p126 = scmp.eq.s32.totalorder %s17, 0
      %p127 = por %p125, %p126
      %p128 = scmp.ne.s32.totalorder %s117, %s120
      %p129 = scmp.eq.s32.totalorder %s22, 1
      %p130 = por %p128, %p129
      %p131 = scmp.ne.s32.totalorder %s120, %s121
      %p132 = scmp.eq.s32.totalorder %s22, 0
      %p133 = por %p131, %p132
      %p134 = scmp.ne.s32.totalorder %s120, %s121
      %p135 = scmp.eq.s32.totalorder %s23, 1
      %p136 = por %p134, %p135
      %p138 = scmp.ne.s32.totalorder %s121, %s137
      %p139 = scmp.eq.s32.totalorder %s23, 0
      %p140 = por %p138, %p139
      %s141 = ssub.s32 %s25, %s32
      %p142 = scmp.eq.s32.totalorder %s141, 0
      %s144 = sadd.s32 %s143, 1
      %s145 = scalar_select %p142, %s143, %s144
      %p148 = pneg %p142
      %p149 = scmp.eq.s32.totalorder %s17, 1
      %p150 = por %p148, %p149
      %p151 = scmp.ne.s32.totalorder %s143, %s146
      %p152 = scmp.eq.s32.totalorder %s17, 0
      %p153 = por %p151, %p152
      %p154 = scmp.ne.s32.totalorder %s143, %s146
      %p155 = scmp.eq.s32.totalorder %s22, 1
      %p156 = por %p154, %p155
      %p157 = scmp.ne.s32.totalorder %s146, %s147
      %p158 = scmp.eq.s32.totalorder %s22, 0
      %p159 = por %p157, %p158
      %p160 = scmp.ne.s32.totalorder %s146, %s147
      %p161 = scmp.eq.s32.totalorder %s23, 1
      %p162 = por %p160, %p161
      %p164 = scmp.ne.s32.totalorder %s147, %s163
      %p165 = scmp.eq.s32.totalorder %s23, 0
      %p166 = por %p164, %p165
      %s167 = ssub.s32 %s24, %s36
      %s168 = ssub.s32 %s25, %s32
      %s169 = sor.u32 %s167, %s168
      %p170 = scmp.eq.s32.totalorder %s169, 0
      %s172 = sadd.s32 %s171, 1
      %s173 = scalar_select %p170, %s171, %s172
      %p176 = pneg %p170
      %p177 = scmp.eq.s32.totalorder %s17, 1
      %p178 = por %p176, %p177
      %p179 = scmp.ne.s32.totalorder %s171, %s174
      %p180 = scmp.eq.s32.totalorder %s17, 0
      %p181 = por %p179, %p180
      %p182 = scmp.ne.s32.totalorder %s171, %s174
      %p183 = scmp.eq.s32.totalorder %s22, 1
      %p184 = por %p182, %p183
      %p185 = scmp.ne.s32.totalorder %s174, %s175
      %p186 = scmp.eq.s32.totalorder %s22, 0
      %p187 = por %p185, %p186
      %p188 = scmp.ne.s32.totalorder %s174, %s175
      %p189 = scmp.eq.s32.totalorder %s23, 1
      %p190 = por %p188, %p189
      %p192 = scmp.ne.s32.totalorder %s175, %s191
      %p193 = scmp.eq.s32.totalorder %s23, 0
      %p194 = por %p192, %p193
      %p195 = scmp.le.s32.totalorder 1, %s17
      %p196 = scmp.lt.s32.totalorder %s17, 3
      %p197 = pnand %p195, %p196
      %p198 = pneg %p197
      // Predicated region
      $region9: #{tpu_custom_call.1} parent=5 // pred_check
        _
      $region10: #{tpu_custom_call.1} parent=5 // pred_check_branch
        %200 = sbr.rel (%p197) target = $region12
      $region11: #{tpu_custom_call.1} parent=5 // pred_region
        %s201 = ssub.s32 %s17, 1
        // Predicated region
        $region13: #{tpu_custom_call.1} parent=11 // pred_check
          %p202 = pneg %p81
        $region14: #{tpu_custom_call.1} parent=11 // pred_check_branch
          %204 = sbr.rel (%p202) target = $region16
        $region15: #{tpu_custom_call.1} parent=11 // pred_region
          %p205 = scmp.lt.s32.totalorder %s27, 0
          %s206 = scalar_select %p205, %s27, 0
          %s207 = smul.addr %s206, 4
          %s208 = scalar_lea.vmem %s1, %s207
        $region16: #{tpu_custom_call.1} parent=11 // pred_fallthru
          _
        // Predicated region
        $region17: #{tpu_custom_call.1} parent=11 // pred_check
          %p209 = pneg %p107
        $region18: #{tpu_custom_call.1} parent=11 // pred_check_branch
          %211 = sbr.rel (%p209) target = $region20
        $region19: #{tpu_custom_call.1} parent=11 // pred_region
          %p212 = scmp.lt.s32.totalorder %s27, 0
          %s213 = scalar_select %p212, %s27, 0
          %s214 = smul.addr %s213, 8
          %s215 = scalar_lea.vmem %s2, %s214
        $region20: #{tpu_custom_call.1} parent=11 // pred_fallthru
          _
        // Predicated region
        $region21: #{tpu_custom_call.1} parent=11 // pred_check
          %p216 = pneg %p133
        $region22: #{tpu_custom_call.1} parent=11 // pred_check_branch
          %218 = sbr.rel (%p216) target = $region24
        $region23: #{tpu_custom_call.1} parent=11 // pred_region
          %p219 = scmp.lt.s32.totalorder %s27, 0
          %s220 = scalar_select %p219, %s27, 0
          %s221 = smul.addr %s220, 8
          %s222 = scalar_lea.vmem %s3, %s221
        $region24: #{tpu_custom_call.1} parent=11 // pred_fallthru
          _
        // Predicated region
        $region25: #{tpu_custom_call.1} parent=11 // pred_check
          %p223 = pneg %p159
        $region26: #{tpu_custom_call.1} parent=11 // pred_check_branch
          %225 = sbr.rel (%p223) target = $region28
        $region27: #{tpu_custom_call.1} parent=11 // pred_region
          %p226 = scmp.lt.s32.totalorder %s27, 0
          %s227 = scalar_select %p226, %s27, 0
          %s228 = smul.addr %s227, 8
          %s229 = scalar_lea.vmem %s4, %s228
        $region28: #{tpu_custom_call.1} parent=11 // pred_fallthru
          _
      $region12: #{tpu_custom_call.1} parent=5 // pred_fallthru
        _
      %p230 = scmp.lt.s32.totalorder %s17, 2
      // Predicated region
      $region29: #{tpu_custom_call.1} parent=5 // pred_check
        %p231 = pneg %p230
      $region30: #{tpu_custom_call.1} parent=5 // pred_check_branch
        %233 = sbr.rel (%p231) target = $region32
      $region31: #{tpu_custom_call.1} parent=5 // pred_region
        // Predicated region
        $region33: #{tpu_custom_call.1} parent=31 // pred_check
          %p234 = pneg %p49
        $region34: #{tpu_custom_call.1} parent=31 // pred_check_branch
          %236 = sbr.rel (%p234) target = $region36
        $region35: #{tpu_custom_call.1} parent=31 // pred_region
          %s237 = sand.u32 %s39, 1
          %s238 = scalar_lea.sflag [#allocation3], %s237
          %s239 = sand.u32 %s39, 1
          %s240 = smul.addr %s239, 48
          %s241 = scalar_lea.vmem [#allocation2], %s240
          %s243 = ssub.s32 768, 768
          %244 = vsyncadd %s238, %s243
          %s245 = smul.addr %s24, 24
          %s246 = smul.addr %s245, 32
          %s247 = scalar_lea.hbm %s0, %s246
          %s249 = sshll.u32 %s241, 4
          %s250 = int_to_ptr.vmem [resolvable:$true] %s249
          %252 = dma.hbm_to_vmem [thread:$0]  %s247, 768, %s250, %s238
        $region36: #{tpu_custom_call.1} parent=31 // pred_fallthru
          _
      $region32: #{tpu_custom_call.1} parent=5 // pred_fallthru
        _
      %p253 = scmp.le.s32.totalorder 1, %s17
      %p254 = scmp.lt.s32.totalorder %s17, 3
      %p255 = pnand %p253, %p254
      %p256 = pneg %p255
      // Predicated region
      $region37: #{tpu_custom_call.1} parent=5 // pred_check
        _
      $region38: #{tpu_custom_call.1} parent=5 // pred_check_branch
        %258 = sbr.rel (%p255) target = $region40
      $region39: #{tpu_custom_call.1} parent=5 // pred_region
        %s259 = ssub.s32 %s17, 1
        %s260 = sand.u32 %s42, 1
        %s261 = scalar_lea.sflag [#allocation3], %s260
        %s262 = sand.u32 %s42, 1
        %s263 = smul.addr %s262, 48
        %s264 = scalar_lea.vmem [#allocation2], %s263
        // Predicated region
        $region41: #{tpu_custom_call.1} parent=39 // pred_check
          %p265 = pneg %p55
        $region42: #{tpu_custom_call.1} parent=39 // pred_check_branch
          %267 = sbr.rel (%p265) target = $region44
        $region43: #{tpu_custom_call.1} parent=39 // pred_region
          %268 = dma.done %s261, 768
        $region44: #{tpu_custom_call.1} parent=39 // pred_fallthru
          _
        %s269 = sand.u32 %s42, 1
        %s270 = scalar_lea.sflag [#allocation3], %s269
        %s271 = sand.u32 %s42, 1
        %s272 = smul.addr %s271, 48
        %s273 = scalar_lea.vmem [#allocation2], %s272
        %p274 = pneg %p55
        %p275 = pneg %p52
        %p276 = scmp.lt.s32.totalorder %s27, 0
        %s277 = scalar_select %p276, %s27, 0
        %s278 = smul.addr %s277, 4
        %s279 = scalar_lea.vmem %s1, %s278
        %p280 = pneg %p81
        %p281 = pneg %p78
        %p282 = scmp.lt.s32.totalorder %s27, 0
        %s283 = scalar_select %p282, %s27, 0
        %s284 = smul.addr %s283, 8
        %s285 = scalar_lea.vmem %s2, %s284
        %p286 = pneg %p107
        %p287 = pneg %p104
        %p288 = scmp.lt.s32.totalorder %s27, 0
        %s289 = scalar_select %p288, %s27, 0
        %s290 = smul.addr %s289, 8
        %s291 = scalar_lea.vmem %s3, %s290
        %p292 = pneg %p133
        %p293 = pneg %p130
        %p294 = scmp.lt.s32.totalorder %s27, 0
        %s295 = scalar_select %p294, %s27, 0
        %s296 = smul.addr %s295, 8
        %s297 = scalar_lea.vmem %s4, %s296
        %p298 = pneg %p159
        %p299 = pneg %p156
        %p300 = pneg %p187
        %p301 = pneg %p184
        %s302 = sand.u32 %s174, 1
        %s303 = scalar_lea.sflag [#allocation4], %s302
        %s304 = sand.u32 %s174, 1
        %s305 = smul.addr %s304, 128
        %s306 = scalar_lea.vmem [#allocation5], %s305
        %p307 = scmp.lt.s32.totalorder %s27, 0
        %s308 = scalar_select %p307, %s27, 0
        %s309 = smul.addr %s308, 4
        %s310 = scalar_lea.vmem %s1, %s309
        %p311 = scmp.lt.s32.totalorder %s27, 0
        %s312 = scalar_select %p311, %s27, 0
        %s313 = smul.addr %s312, 8
        %s314 = scalar_lea.vmem %s2, %s313
        %p315 = scmp.lt.s32.totalorder %s27, 0
        %s316 = scalar_select %p315, %s27, 0
        %s317 = smul.addr %s316, 8
        %s318 = scalar_lea.vmem %s3, %s317
        %p319 = scmp.lt.s32.totalorder %s27, 0
        %s320 = scalar_select %p319, %s27, 0
        %s321 = smul.addr %s320, 8
        %s322 = scalar_lea.vmem %s4, %s321
        %v324 = vld [vmem:[%s310] sm:$0xf]
        %s325 = scalar_lea.vmem %s310, 4
        %v326 = vld [vmem:[%s325] sm:$0xf]
        %s327 = scalar_lea.vmem %s310, 8
        %v328 = vld [vmem:[%s327] sm:$0xf]
        %s329 = scalar_lea.vmem %s310, 12
        %v330 = vld [vmem:[%s329] sm:$0xf]
        %s331 = scalar_lea.vmem %s310, 16
        %v332 = vld [vmem:[%s331] sm:$0xf]
        %s333 = scalar_lea.vmem %s310, 20
        %v334 = vld [vmem:[%s333] sm:$0xf]
        %s335 = scalar_lea.vmem %s310, 24
        %v336 = vld [vmem:[%s335] sm:$0xf]
        %s337 = scalar_lea.vmem %s310, 28
        %v338 = vld [vmem:[%s337] sm:$0xf]
        %s339 = scalar_lea.vmem %s310, 32
        %v340 = vld [vmem:[%s339] sm:$0xf]
        %v341 = vld [vmem:[%s314] sm:$0xff]
        %v342 = vld [vmem:[%s318] sm:$0xff]
        %v343 = vld [vmem:[%s322] sm:$0xff]
        %v344 = vld [vmem:[%s264] sm:$0xff]
        %v345 = vld [vmem:[%s264 + $0x8] sm:$0xff]
        %s346 = scalar_lea.vmem %s264, 2 [#allocation2]
        %v347 = vld [vmem:[%s346] sm:$0xff]
        %v348 = vld [vmem:[%s346 + $0x8] sm:$0xff]
        %v351 = vcombine.high %v347, %v347
        %v353 = vunpack.c.l.s4 1983009808
        %v354 = vunpack.c.0.s8 %v353
        %v355 = vlaneseq
        %v356 = vshrl.u32 %v355, 7
        %v357 = vsub.s32 %v354, %v356
        %v358 = vrot.slane %v347, %v357
        %v360 = vunpack.c.l.s4 1983009808
        %v361 = vunpack.c.0.s8 %v360
        %v362 = vlaneseq
        %v363 = vshrl.u32 %v362, 7
        %v364 = vsub.s32 %v361, %v363
        %v365 = vrot.slane %v351, %v364
        %v366 = vcombine.high %v358, %v358
        %v367 = vcombine.high %v365, %v365
        %v368 = vcombine.high %v348, %v348
        %v370 = vunpack.c.l.s4 1983009808
        %v371 = vunpack.c.0.s8 %v370
        %v372 = vlaneseq
        %v373 = vshrl.u32 %v372, 7
        %v374 = vsub.s32 %v371, %v373
        %v375 = vrot.slane %v348, %v374
        %v377 = vunpack.c.l.s4 1983009808
        %v378 = vunpack.c.0.s8 %v377
        %v379 = vlaneseq
        %v380 = vshrl.u32 %v379, 7
        %v381 = vsub.s32 %v378, %v380
        %v382 = vrot.slane %v368, %v381
        %v383 = vcombine.high %v375, %v375
        %v384 = vcombine.high %v382, %v382
        %vm385 = vcmask 31744
        %v387 = vsel %vm385, %v326, 0
        %vm389 = vcmask 1041408
        %v391 = vsel %vm389, %v358, 0
        %v394 = vsel %vm389, %v366, 0
        %v397 = vsel %vm389, %v365, 0
        %v400 = vsel %vm389, %v367, 0
        %v403 = vsel %vm389, %v375, 0
        %v406 = vsel %vm389, %v383, 0
        %v409 = vsel %vm389, %v382, 0
        %v412 = vsel %vm389, %v384, 0
        %414 = vmatprep.subr.bf16.mxu0 %v394
        %415 = vmatpush1.bf16.msra.mxu0 %v391
        %416 = vmatprep.subr.bf16.mxu0 0
        %417 = vmatpush1.bf16.msra.mxu0 0
        %418 = vmatprep.subr.bf16.mxu0 0
        %419 = vmatpush1.bf16.msra.mxu0 0
        %420 = vmatprep.subr.bf16.mxu0 0
        %421 = vmatpush1.bf16.msra.mxu0 0
        %422 = vmatprep.subr.bf16.mxu0 0
        %423 = vmatpush1.bf16.msra.mxu0 0
        %424 = vmatprep.subr.bf16.mxu0 0
        %425 = vmatpush1.bf16.msra.mxu0 0
        %426 = vmatprep.subr.bf16.mxu0 0
        %427 = vmatpush1.bf16.msra.mxu0 0
        %428 = vmatprep.subr.bf16.mxu0 0
        %429 = vmatpush1.bf16.msra.mxu0 0
        %430 = vmatprep.subr.bf16.mxu0 0
        %431 = vmatpush1.bf16.msra.mxu0 0
        %432 = vmatprep.subr.bf16.mxu0 0
        %433 = vmatpush1.bf16.msra.mxu0 0
        %434 = vmatprep.subr.bf16.mxu0 0
        %435 = vmatpush1.bf16.msra.mxu0 0
        %436 = vmatprep.subr.bf16.mxu0 0
        %437 = vmatpush1.bf16.msra.mxu0 0
        %438 = vmatprep.subr.bf16.mxu0 0
        %439 = vmatpush1.bf16.msra.mxu0 0
        %440 = vmatprep.subr.bf16.mxu0 0
        %441 = vmatpush1.bf16.msra.mxu0 0
        %442 = vmatprep.subr.bf16.mxu0 0
        %443 = vmatpush1.bf16.msra.mxu0 0
        %444 = vmatprep.subr.bf16.mxu0 0
        %445 = vmatpush1.bf16.msra.mxu0 0
        %446 = vmatprep.mubr.bf16.mxu0 0
        %447 = vmatmul.mubr.bf16.gmra.mrb[0].mxu0 %v387
        %v448 = vpop.f32.mrb[0].mxu0
        %v449 = vadd.f32 0.0, %v448
        %v450 = vpop.f32.mrb[0].mxu0
        %v451 = vadd.f32 0.0, %v450
        %v452 = vpop.f32.mrb[0].mxu0
        %v453 = vpop.f32.mrb[0].mxu0
        %454 = vdwg.mxu0
        %455 = vmatprep.subr.bf16.mxu0 %v400
        %456 = vmatpush1.bf16.msra.mxu0 %v397
        %457 = vmatprep.subr.bf16.mxu0 0
        %458 = vmatpush1.bf16.msra.mxu0 0
        %459 = vmatprep.subr.bf16.mxu0 0
        %460 = vmatpush1.bf16.msra.mxu0 0
        %461 = vmatprep.subr.bf16.mxu0 0
        %462 = vmatpush1.bf16.msra.mxu0 0
        %463 = vmatprep.subr.bf16.mxu0 0
        %464 = vmatpush1.bf16.msra.mxu0 0
        %465 = vmatprep.subr.bf16.mxu0 0
        %466 = vmatpush1.bf16.msra.mxu0 0
        %467 = vmatprep.subr.bf16.mxu0 0
        %468 = vmatpush1.bf16.msra.mxu0 0
        %469 = vmatprep.subr.bf16.mxu0 0
        %470 = vmatpush1.bf16.msra.mxu0 0
        %471 = vmatprep.subr.bf16.mxu0 0
        %472 = vmatpush1.bf16.msra.mxu0 0
        %473 = vmatprep.subr.bf16.mxu0 0
        %474 = vmatpush1.bf16.msra.mxu0 0
        %475 = vmatprep.subr.bf16.mxu0 0
        %476 = vmatpush1.bf16.msra.mxu0 0
        %477 = vmatprep.subr.bf16.mxu0 0
        %478 = vmatpush1.bf16.msra.mxu0 0
        %479 = vmatprep.subr.bf16.mxu0 0
        %480 = vmatpush1.bf16.msra.mxu0 0
        %481 = vmatprep.subr.bf16.mxu0 0
        %482 = vmatpush1.bf16.msra.mxu0 0
        %483 = vmatprep.subr.bf16.mxu0 0
        %484 = vmatpush1.bf16.msra.mxu0 0
        %485 = vmatprep.subr.bf16.mxu0 0
        %486 = vmatpush1.bf16.msra.mxu0 0
        %487 = vmatprep.mubr.bf16.mxu0 0
        %488 = vmatmul.mubr.bf16.gmra.mrb[0].mxu0 %v387
        %v489 = vpop.f32.mrb[0].mxu0
        %v490 = vadd.f32 0.0, %v489
        %v491 = vpop.f32.mrb[0].mxu0
        %v492 = vadd.f32 0.0, %v491
        %v493 = vpop.f32.mrb[0].mxu0
        %v494 = vpop.f32.mrb[0].mxu0
        %495 = vdwg.mxu0
        %496 = vmatprep.subr.bf16.mxu0 %v406
        %497 = vmatpush1.bf16.msra.mxu0 %v403
        %498 = vmatprep.subr.bf16.mxu0 0
        %499 = vmatpush1.bf16.msra.mxu0 0
        %500 = vmatprep.subr.bf16.mxu0 0
        %501 = vmatpush1.bf16.msra.mxu0 0
        %502 = vmatprep.subr.bf16.mxu0 0
        %503 = vmatpush1.bf16.msra.mxu0 0
        %504 = vmatprep.subr.bf16.mxu0 0
        %505 = vmatpush1.bf16.msra.mxu0 0
        %506 = vmatprep.subr.bf16.mxu0 0
        %507 = vmatpush1.bf16.msra.mxu0 0
        %508 = vmatprep.subr.bf16.mxu0 0
        %509 = vmatpush1.bf16.msra.mxu0 0
        %510 = vmatprep.subr.bf16.mxu0 0
        %511 = vmatpush1.bf16.msra.mxu0 0
        %512 = vmatprep.subr.bf16.mxu0 0
        %513 = vmatpush1.bf16.msra.mxu0 0
        %514 = vmatprep.subr.bf16.mxu0 0
        %515 = vmatpush1.bf16.msra.mxu0 0
        %516 = vmatprep.subr.bf16.mxu0 0
        %517 = vmatpush1.bf16.msra.mxu0 0
        %518 = vmatprep.subr.bf16.mxu0 0
        %519 = vmatpush1.bf16.msra.mxu0 0
        %520 = vmatprep.subr.bf16.mxu0 0
        %521 = vmatpush1.bf16.msra.mxu0 0
        %522 = vmatprep.subr.bf16.mxu0 0
        %523 = vmatpush1.bf16.msra.mxu0 0
        %524 = vmatprep.subr.bf16.mxu0 0
        %525 = vmatpush1.bf16.msra.mxu0 0
        %526 = vmatprep.subr.bf16.mxu0 0
        %527 = vmatpush1.bf16.msra.mxu0 0
        %528 = vmatprep.mubr.bf16.mxu0 0
        %529 = vmatmul.mubr.bf16.gmra.mrb[0].mxu0 %v387
        %v530 = vpop.f32.mrb[0].mxu0
        %v531 = vadd.f32 0.0, %v530
        %v532 = vpop.f32.mrb[0].mxu0
        %v533 = vadd.f32 0.0, %v532
        %v534 = vpop.f32.mrb[0].mxu0
        %v535 = vpop.f32.mrb[0].mxu0
        %536 = vdwg.mxu0
        %537 = vmatprep.subr.bf16.mxu0 %v412
        %538 = vmatpush1.bf16.msra.mxu0 %v409
        %539 = vmatprep.subr.bf16.mxu0 0
        %540 = vmatpush1.bf16.msra.mxu0 0
        %541 = vmatprep.subr.bf16.mxu0 0
        %542 = vmatpush1.bf16.msra.mxu0 0
        %543 = vmatprep.subr.bf16.mxu0 0
        %544 = vmatpush1.bf16.msra.mxu0 0
        %545 = vmatprep.subr.bf16.mxu0 0
        %546 = vmatpush1.bf16.msra.mxu0 0
        %547 = vmatprep.subr.bf16.mxu0 0
        %548 = vmatpush1.bf16.msra.mxu0 0
        %549 = vmatprep.subr.bf16.mxu0 0
        %550 = vmatpush1.bf16.msra.mxu0 0
        %551 = vmatprep.subr.bf16.mxu0 0
        %552 = vmatpush1.bf16.msra.mxu0 0
        %553 = vmatprep.subr.bf16.mxu0 0
        %554 = vmatpush1.bf16.msra.mxu0 0
        %555 = vmatprep.subr.bf16.mxu0 0
        %556 = vmatpush1.bf16.msra.mxu0 0
        %557 = vmatprep.subr.bf16.mxu0 0
        %558 = vmatpush1.bf16.msra.mxu0 0
        %559 = vmatprep.subr.bf16.mxu0 0
        %560 = vmatpush1.bf16.msra.mxu0 0
        %561 = vmatprep.subr.bf16.mxu0 0
        %562 = vmatpush1.bf16.msra.mxu0 0
        %563 = vmatprep.subr.bf16.mxu0 0
        %564 = vmatpush1.bf16.msra.mxu0 0
        %565 = vmatprep.subr.bf16.mxu0 0
        %566 = vmatpush1.bf16.msra.mxu0 0
        %567 = vmatprep.subr.bf16.mxu0 0
        %568 = vmatpush1.bf16.msra.mxu0 0
        %569 = vmatprep.mubr.bf16.mxu0 0
        %570 = vmatmul.mubr.bf16.gmra.mrb[0].mxu0 %v387
        %v571 = vpop.f32.mrb[0].mxu0
        %v572 = vadd.f32 0.0, %v571
        %v573 = vpop.f32.mrb[0].mxu0
        %v574 = vadd.f32 0.0, %v573
        %v575 = vpop.f32.mrb[0].mxu0
        %v576 = vpop.f32.mrb[0].mxu0
        %577 = vdwg.mxu0
        %v580 = vcombine.high %v344, %v344
        %v582 = vunpack.c.l.s4 1983009808
        %v583 = vunpack.c.0.s8 %v582
        %v584 = vlaneseq
        %v585 = vshrl.u32 %v584, 7
        %v586 = vsub.s32 %v583, %v585
        %v587 = vrot.slane %v344, %v586
        %v589 = vunpack.c.l.s4 1983009808
        %v590 = vunpack.c.0.s8 %v589
        %v591 = vlaneseq
        %v592 = vshrl.u32 %v591, 7
        %v593 = vsub.s32 %v590, %v592
        %v594 = vrot.slane %v580, %v593
        %v595 = vcombine.high %v587, %v587
        %v596 = vcombine.high %v594, %v594
        %v597 = vcombine.high %v345, %v345
        %v599 = vunpack.c.l.s4 1983009808
        %v600 = vunpack.c.0.s8 %v599
        %v601 = vlaneseq
        %v602 = vshrl.u32 %v601, 7
        %v603 = vsub.s32 %v600, %v602
        %v604 = vrot.slane %v345, %v603
        %v606 = vunpack.c.l.s4 1983009808
        %v607 = vunpack.c.0.s8 %v606
        %v608 = vlaneseq
        %v609 = vshrl.u32 %v608, 7
        %v610 = vsub.s32 %v607, %v609
        %v611 = vrot.slane %v597, %v610
        %v612 = vcombine.high %v604, %v604
        %v613 = vcombine.high %v611, %v611
        %v615 = vsel %vm385, %v324, 0
        %v618 = vsel %vm389, %v587, 0
        %v621 = vsel %vm389, %v595, 0
        %v624 = vsel %vm389, %v594, 0
        %v627 = vsel %vm389, %v596, 0
        %v630 = vsel %vm389, %v604, 0
        %v633 = vsel %vm389, %v612, 0
        %v636 = vsel %vm389, %v611, 0
        %v639 = vsel %vm389, %v613, 0
        %641 = vmatprep.subr.bf16.mxu0 %v621
        %642 = vmatpush1.bf16.msra.mxu0 %v618
        %643 = vmatprep.subr.bf16.mxu0 0
        %644 = vmatpush1.bf16.msra.mxu0 0
        %645 = vmatprep.subr.bf16.mxu0 0
        %646 = vmatpush1.bf16.msra.mxu0 0
        %647 = vmatprep.subr.bf16.mxu0 0
        %648 = vmatpush1.bf16.msra.mxu0 0
        %649 = vmatprep.subr.bf16.mxu0 0
        %650 = vmatpush1.bf16.msra.mxu0 0
        %651 = vmatprep.subr.bf16.mxu0 0
        %652 = vmatpush1.bf16.msra.mxu0 0
        %653 = vmatprep.subr.bf16.mxu0 0
        %654 = vmatpush1.bf16.msra.mxu0 0
        %655 = vmatprep.subr.bf16.mxu0 0
        %656 = vmatpush1.bf16.msra.mxu0 0
        %657 = vmatprep.subr.bf16.mxu0 0
        %658 = vmatpush1.bf16.msra.mxu0 0
        %659 = vmatprep.subr.bf16.mxu0 0
        %660 = vmatpush1.bf16.msra.mxu0 0
        %661 = vmatprep.subr.bf16.mxu0 0
        %662 = vmatpush1.bf16.msra.mxu0 0
        %663 = vmatprep.subr.bf16.mxu0 0
        %664 = vmatpush1.bf16.msra.mxu0 0
        %665 = vmatprep.subr.bf16.mxu0 0
        %666 = vmatpush1.bf16.msra.mxu0 0
        %667 = vmatprep.subr.bf16.mxu0 0
        %668 = vmatpush1.bf16.msra.mxu0 0
        %669 = vmatprep.subr.bf16.mxu0 0
        %670 = vmatpush1.bf16.msra.mxu0 0
        %671 = vmatprep.subr.bf16.mxu0 0
        %672 = vmatpush1.bf16.msra.mxu0 0
        %673 = vmatprep.mubr.bf16.mxu0 0
        %674 = vmatmul.mubr.bf16.gmra.mrb[0].mxu0 %v615
        %v675 = vpop.f32.mrb[0].mxu0
        %v676 = vadd.f32 %v449, %v675
        %v677 = vpop.f32.mrb[0].mxu0
        %v678 = vadd.f32 %v451, %v677
        %v679 = vpop.f32.mrb[0].mxu0
        %v680 = vpop.f32.mrb[0].mxu0
        %681 = vdwg.mxu0
        %682 = vmatprep.subr.bf16.mxu0 %v627
        %683 = vmatpush1.bf16.msra.mxu0 %v624
        %684 = vmatprep.subr.bf16.mxu0 0
        %685 = vmatpush1.bf16.msra.mxu0 0
        %686 = vmatprep.subr.bf16.mxu0 0
        %687 = vmatpush1.bf16.msra.mxu0 0
        %688 = vmatprep.subr.bf16.mxu0 0
        %689 = vmatpush1.bf16.msra.mxu0 0
        %690 = vmatprep.subr.bf16.mxu0 0
        %691 = vmatpush1.bf16.msra.mxu0 0
        %692 = vmatprep.subr.bf16.mxu0 0
        %693 = vmatpush1.bf16.msra.mxu0 0
        %694 = vmatprep.subr.bf16.mxu0 0
        %695 = vmatpush1.bf16.msra.mxu0 0
        %696 = vmatprep.subr.bf16.mxu0 0
        %697 = vmatpush1.bf16.msra.mxu0 0
        %698 = vmatprep.subr.bf16.mxu0 0
        %699 = vmatpush1.bf16.msra.mxu0 0
        %700 = vmatprep.subr.bf16.mxu0 0
        %701 = vmatpush1.bf16.msra.mxu0 0
        %702 = vmatprep.subr.bf16.mxu0 0
        %703 = vmatpush1.bf16.msra.mxu0 0
        %704 = vmatprep.subr.bf16.mxu0 0
        %705 = vmatpush1.bf16.msra.mxu0 0
        %706 = vmatprep.subr.bf16.mxu0 0
        %707 = vmatpush1.bf16.msra.mxu0 0
        %708 = vmatprep.subr.bf16.mxu0 0
        %709 = vmatpush1.bf16.msra.mxu0 0
        %710 = vmatprep.subr.bf16.mxu0 0
        %711 = vmatpush1.bf16.msra.mxu0 0
        %712 = vmatprep.subr.bf16.mxu0 0
        %713 = vmatpush1.bf16.msra.mxu0 0
        %714 = vmatprep.mubr.bf16.mxu0 0
        %715 = vmatmul.mubr.bf16.gmra.mrb[0].mxu0 %v615
        %v716 = vpop.f32.mrb[0].mxu0
        %v717 = vadd.f32 %v490, %v716
        %v718 = vpop.f32.mrb[0].mxu0
        %v719 = vadd.f32 %v492, %v718
        %v720 = vpop.f32.mrb[0].mxu0
        %v721 = vpop.f32.mrb[0].mxu0
        %722 = vdwg.mxu0
        %723 = vmatprep.subr.bf16.mxu0 %v633
        %724 = vmatpush1.bf16.msra.mxu0 %v630
        %725 = vmatprep.subr.bf16.mxu0 0
        %726 = vmatpush1.bf16.msra.mxu0 0
        %727 = vmatprep.subr.bf16.mxu0 0
        %728 = vmatpush1.bf16.msra.mxu0 0
        %729 = vmatprep.subr.bf16.mxu0 0
        %730 = vmatpush1.bf16.msra.mxu0 0
        %731 = vmatprep.subr.bf16.mxu0 0
        %732 = vmatpush1.bf16.msra.mxu0 0
        %733 = vmatprep.subr.bf16.mxu0 0
        %734 = vmatpush1.bf16.msra.mxu0 0
        %735 = vmatprep.subr.bf16.mxu0 0
        %736 = vmatpush1.bf16.msra.mxu0 0
        %737 = vmatprep.subr.bf16.mxu0 0
        %738 = vmatpush1.bf16.msra.mxu0 0
        %739 = vmatprep.subr.bf16.mxu0 0
        %740 = vmatpush1.bf16.msra.mxu0 0
        %741 = vmatprep.subr.bf16.mxu0 0
        %742 = vmatpush1.bf16.msra.mxu0 0
        %743 = vmatprep.subr.bf16.mxu0 0
        %744 = vmatpush1.bf16.msra.mxu0 0
        %745 = vmatprep.subr.bf16.mxu0 0
        %746 = vmatpush1.bf16.msra.mxu0 0
        %747 = vmatprep.subr.bf16.mxu0 0
        %748 = vmatpush1.bf16.msra.mxu0 0
        %749 = vmatprep.subr.bf16.mxu0 0
        %750 = vmatpush1.bf16.msra.mxu0 0
        %751 = vmatprep.subr.bf16.mxu0 0
        %752 = vmatpush1.bf16.msra.mxu0 0
        %753 = vmatprep.subr.bf16.mxu0 0
        %754 = vmatpush1.bf16.msra.mxu0 0
        %755 = vmatprep.mubr.bf16.mxu0 0
        %756 = vmatmul.mubr.bf16.gmra.mrb[0].mxu0 %v615
        %v757 = vpop.f32.mrb[0].mxu0
        %v758 = vadd.f32 %v531, %v757
        %v759 = vpop.f32.mrb[0].mxu0
        %v760 = vadd.f32 %v533, %v759
        %v761 = vpop.f32.mrb[0].mxu0
        %v762 = vpop.f32.mrb[0].mxu0
        %763 = vdwg.mxu0
        %764 = vmatprep.subr.bf16.mxu0 %v639
        %765 = vmatpush1.bf16.msra.mxu0 %v636
        %766 = vmatprep.subr.bf16.mxu0 0
        %767 = vmatpush1.bf16.msra.mxu0 0
        %768 = vmatprep.subr.bf16.mxu0 0
        %769 = vmatpush1.bf16.msra.mxu0 0
        %770 = vmatprep.subr.bf16.mxu0 0
        %771 = vmatpush1.bf16.msra.mxu0 0
        %772 = vmatprep.subr.bf16.mxu0 0
        %773 = vmatpush1.bf16.msra.mxu0 0
        %774 = vmatprep.subr.bf16.mxu0 0
        %775 = vmatpush1.bf16.msra.mxu0 0
        %776 = vmatprep.subr.bf16.mxu0 0
        %777 = vmatpush1.bf16.msra.mxu0 0
        %778 = vmatprep.subr.bf16.mxu0 0
        %779 = vmatpush1.bf16.msra.mxu0 0
        %780 = vmatprep.subr.bf16.mxu0 0
        %781 = vmatpush1.bf16.msra.mxu0 0
        %782 = vmatprep.subr.bf16.mxu0 0
        %783 = vmatpush1.bf16.msra.mxu0 0
        %784 = vmatprep.subr.bf16.mxu0 0
        %785 = vmatpush1.bf16.msra.mxu0 0
        %786 = vmatprep.subr.bf16.mxu0 0
        %787 = vmatpush1.bf16.msra.mxu0 0
        %788 = vmatprep.subr.bf16.mxu0 0
        %789 = vmatpush1.bf16.msra.mxu0 0
        %790 = vmatprep.subr.bf16.mxu0 0
        %791 = vmatpush1.bf16.msra.mxu0 0
        %792 = vmatprep.subr.bf16.mxu0 0
        %793 = vmatpush1.bf16.msra.mxu0 0
        %794 = vmatprep.subr.bf16.mxu0 0
        %795 = vmatpush1.bf16.msra.mxu0 0
        %796 = vmatprep.mubr.bf16.mxu0 0
        %797 = vmatmul.mubr.bf16.gmra.mrb[0].mxu0 %v615
        %v798 = vpop.f32.mrb[0].mxu0
        %v799 = vadd.f32 %v572, %v798
        %v800 = vpop.f32.mrb[0].mxu0
        %v801 = vadd.f32 %v574, %v800
        %v802 = vpop.f32.mrb[0].mxu0
        %v803 = vpop.f32.mrb[0].mxu0
        %804 = vdwg.mxu0
        %s805 = scalar_lea.vmem %s264, 4 [#allocation2]
        %v806 = vld [vmem:[%s805] sm:$0xff]
        %v807 = vld [vmem:[%s805 + $0x8] sm:$0xff]
        %v810 = vcombine.high %v806, %v806
        %v812 = vunpack.c.l.s4 1983009808
        %v813 = vunpack.c.0.s8 %v812
        %v814 = vlaneseq
        %v815 = vshrl.u32 %v814, 7
        %v816 = vsub.s32 %v813, %v815
        %v817 = vrot.slane %v806, %v816
        %v819 = vunpack.c.l.s4 1983009808
        %v820 = vunpack.c.0.s8 %v819
        %v821 = vlaneseq
        %v822 = vshrl.u32 %v821, 7
        %v823 = vsub.s32 %v820, %v822
        %v824 = vrot.slane %v810, %v823
        %v825 = vcombine.high %v817, %v817
        %v826 = vcombine.high %v824, %v824
        %v827 = vcombine.high %v807, %v807
        %v829 = vunpack.c.l.s4 1983009808
        %v830 = vunpack.c.0.s8 %v829
        %v831 = vlaneseq
        %v832 = vshrl.u32 %v831, 7
        %v833 = vsub.s32 %v830, %v832
        %v834 = vrot.slane %v807, %v833
        %v836 = vunpack.c.l.s4 1983009808
        %v837 = vunpack.c.0.s8 %v836
        %v838 = vlaneseq
        %v839 = vshrl.u32 %v838, 7
        %v840 = vsub.s32 %v837, %v839
        %v841 = vrot.slane %v827, %v840
        %v842 = vcombine.high %v834, %v834
        %v843 = vcombine.high %v841, %v841
        %v845 = vsel %vm385, %v328, 0
        %v848 = vsel %vm389, %v817, 0
        %v851 = vsel %vm389, %v825, 0
        %v854 = vsel %vm389, %v824, 0
        %v857 = vsel %vm389, %v826, 0
        %v860 = vsel %vm389, %v834, 0
        %v863 = vsel %vm389, %v842, 0
        %v866 = vsel %vm389, %v841, 0
        %v869 = vsel %vm389, %v843, 0
        %871 = vmatprep.subr.bf16.mxu0 %v851
        %872 = vmatpush1.bf16.msra.mxu0 %v848
        %873 = vmatprep.subr.bf16.mxu0 0
        %874 = vmatpush1.bf16.msra.mxu0 0
        %875 = vmatprep.subr.bf16.mxu0 0
        %876 = vmatpush1.bf16.msra.mxu0 0
        %877 = vmatprep.subr.bf16.mxu0 0
        %878 = vmatpush1.bf16.msra.mxu0 0
        %879 = vmatprep.subr.bf16.mxu0 0
        %880 = vmatpush1.bf16.msra.mxu0 0
        %881 = vmatprep.subr.bf16.mxu0 0
        %882 = vmatpush1.bf16.msra.mxu0 0
        %883 = vmatprep.subr.bf16.mxu0 0
        %884 = vmatpush1.bf16.msra.mxu0 0
        %885 = vmatprep.subr.bf16.mxu0 0
        %886 = vmatpush1.bf16.msra.mxu0 0
        %887 = vmatprep.subr.bf16.mxu0 0
        %888 = vmatpush1.bf16.msra.mxu0 0
        %889 = vmatprep.subr.bf16.mxu0 0
        %890 = vmatpush1.bf16.msra.mxu0 0
        %891 = vmatprep.subr.bf16.mxu0 0
        %892 = vmatpush1.bf16.msra.mxu0 0
        %893 = vmatprep.subr.bf16.mxu0 0
        %894 = vmatpush1.bf16.msra.mxu0 0
        %895 = vmatprep.subr.bf16.mxu0 0
        %896 = vmatpush1.bf16.msra.mxu0 0
        %897 = vmatprep.subr.bf16.mxu0 0
        %898 = vmatpush1.bf16.msra.mxu0 0
        %899 = vmatprep.subr.bf16.mxu0 0
        %900 = vmatpush1.bf16.msra.mxu0 0
        %901 = vmatprep.subr.bf16.mxu0 0
        %902 = vmatpush1.bf16.msra.mxu0 0
        %903 = vmatprep.mubr.bf16.mxu0 0
        %904 = vmatmul.mubr.bf16.gmra.mrb[0].mxu0 %v845
        %v905 = vpop.f32.mrb[0].mxu0
        %v906 = vadd.f32 0.0, %v905
        %v907 = vpop.f32.mrb[0].mxu0
        %v908 = vadd.f32 0.0, %v907
        %v909 = vpop.f32.mrb[0].mxu0
        %v910 = vpop.f32.mrb[0].mxu0
        %911 = vdwg.mxu0
        %912 = vmatprep.subr.bf16.mxu0 %v857
        %913 = vmatpush1.bf16.msra.mxu0 %v854
        %914 = vmatprep.subr.bf16.mxu0 0
        %915 = vmatpush1.bf16.msra.mxu0 0
        %916 = vmatprep.subr.bf16.mxu0 0
        %917 = vmatpush1.bf16.msra.mxu0 0
        %918 = vmatprep.subr.bf16.mxu0 0
        %919 = vmatpush1.bf16.msra.mxu0 0
        %920 = vmatprep.subr.bf16.mxu0 0
        %921 = vmatpush1.bf16.msra.mxu0 0
        %922 = vmatprep.subr.bf16.mxu0 0
        %923 = vmatpush1.bf16.msra.mxu0 0
        %924 = vmatprep.subr.bf16.mxu0 0
        %925 = vmatpush1.bf16.msra.mxu0 0
        %926 = vmatprep.subr.bf16.mxu0 0
        %927 = vmatpush1.bf16.msra.mxu0 0
        %928 = vmatprep.subr.bf16.mxu0 0
        %929 = vmatpush1.bf16.msra.mxu0 0
        %930 = vmatprep.subr.bf16.mxu0 0
        %931 = vmatpush1.bf16.msra.mxu0 0
        %932 = vmatprep.subr.bf16.mxu0 0
        %933 = vmatpush1.bf16.msra.mxu0 0
        %934 = vmatprep.subr.bf16.mxu0 0
        %935 = vmatpush1.bf16.msra.mxu0 0
        %936 = vmatprep.subr.bf16.mxu0 0
        %937 = vmatpush1.bf16.msra.mxu0 0
        %938 = vmatprep.subr.bf16.mxu0 0
        %939 = vmatpush1.bf16.msra.mxu0 0
        %940 = vmatprep.subr.bf16.mxu0 0
        %941 = vmatpush1.bf16.msra.mxu0 0
        %942 = vmatprep.subr.bf16.mxu0 0
        %943 = vmatpush1.bf16.msra.mxu0 0
        %944 = vmatprep.mubr.bf16.mxu0 0
        %945 = vmatmul.mubr.bf16.gmra.mrb[0].mxu0 %v845
        %v946 = vpop.f32.mrb[0].mxu0
        %v947 = vadd.f32 0.0, %v946
        %v948 = vpop.f32.mrb[0].mxu0
        %v949 = vadd.f32 0.0, %v948
        %v950 = vpop.f32.mrb[0].mxu0
        %v951 = vpop.f32.mrb[0].mxu0
        %952 = vdwg.mxu0
        %953 = vmatprep.subr.bf16.mxu0 %v863
        %954 = vmatpush1.bf16.msra.mxu0 %v860
        %955 = vmatprep.subr.bf16.mxu0 0
        %956 = vmatpush1.bf16.msra.mxu0 0
        %957 = vmatprep.subr.bf16.mxu0 0
        %958 = vmatpush1.bf16.msra.mxu0 0
        %959 = vmatprep.subr.bf16.mxu0 0
        %960 = vmatpush1.bf16.msra.mxu0 0
        %961 = vmatprep.subr.bf16.mxu0 0
        %962 = vmatpush1.bf16.msra.mxu0 0
        %963 = vmatprep.subr.bf16.mxu0 0
        %964 = vmatpush1.bf16.msra.mxu0 0
        %965 = vmatprep.subr.bf16.mxu0 0
        %966 = vmatpush1.bf16.msra.mxu0 0
        %967 = vmatprep.subr.bf16.mxu0 0
        %968 = vmatpush1.bf16.msra.mxu0 0
        %969 = vmatprep.subr.bf16.mxu0 0
        %970 = vmatpush1.bf16.msra.mxu0 0
        %971 = vmatprep.subr.bf16.mxu0 0
        %972 = vmatpush1.bf16.msra.mxu0 0
        %973 = vmatprep.subr.bf16.mxu0 0
        %974 = vmatpush1.bf16.msra.mxu0 0
        %975 = vmatprep.subr.bf16.mxu0 0
        %976 = vmatpush1.bf16.msra.mxu0 0
        %977 = vmatprep.subr.bf16.mxu0 0
        %978 = vmatpush1.bf16.msra.mxu0 0
        %979 = vmatprep.subr.bf16.mxu0 0
        %980 = vmatpush1.bf16.msra.mxu0 0
        %981 = vmatprep.subr.bf16.mxu0 0
        %982 = vmatpush1.bf16.msra.mxu0 0
        %983 = vmatprep.subr.bf16.mxu0 0
        %984 = vmatpush1.bf16.msra.mxu0 0
        %985 = vmatprep.mubr.bf16.mxu0 0
        %986 = vmatmul.mubr.bf16.gmra.mrb[0].mxu0 %v845
        %v987 = vpop.f32.mrb[0].mxu0
        %v988 = vadd.f32 0.0, %v987
        %v989 = vpop.f32.mrb[0].mxu0
        %v990 = vadd.f32 0.0, %v989
        %v991 = vpop.f32.mrb[0].mxu0
        %v992 = vpop.f32.mrb[0].mxu0
        %993 = vdwg.mxu0
        %994 = vmatprep.subr.bf16.mxu0 %v869
        %995 = vmatpush1.bf16.msra.mxu0 %v866
        %996 = vmatprep.subr.bf16.mxu0 0
        %997 = vmatpush1.bf16.msra.mxu0 0
        %998 = vmatprep.subr.bf16.mxu0 0
        %999 = vmatpush1.bf16.msra.mxu0 0
        %1000 = vmatprep.subr.bf16.mxu0 0
        %1001 = vmatpush1.bf16.msra.mxu0 0
        %1002 = vmatprep.subr.bf16.mxu0 0
        %1003 = vmatpush1.bf16.msra.mxu0 0
        %1004 = vmatprep.subr.bf16.mxu0 0
        %1005 = vmatpush1.bf16.msra.mxu0 0
        %1006 = vmatprep.subr.bf16.mxu0 0
        %1007 = vmatpush1.bf16.msra.mxu0 0
        %1008 = vmatprep.subr.bf16.mxu0 0
        %1009 = vmatpush1.bf16.msra.mxu0 0
        %1010 = vmatprep.subr.bf16.mxu0 0
        %1011 = vmatpush1.bf16.msra.mxu0 0
        %1012 = vmatprep.subr.bf16.mxu0 0
        %1013 = vmatpush1.bf16.msra.mxu0 0
        %1014 = vmatprep.subr.bf16.mxu0 0
        %1015 = vmatpush1.bf16.msra.mxu0 0
        %1016 = vmatprep.subr.bf16.mxu0 0
        %1017 = vmatpush1.bf16.msra.mxu0 0
        %1018 = vmatprep.subr.bf16.mxu0 0
        %1019 = vmatpush1.bf16.msra.mxu0 0
        %1020 = vmatprep.subr.bf16.mxu0 0
        %1021 = vmatpush1.bf16.msra.mxu0 0
        %1022 = vmatprep.subr.bf16.mxu0 0
        %1023 = vmatpush1.bf16.msra.mxu0 0
        %1024 = vmatprep.subr.bf16.mxu0 0
        %1025 = vmatpush1.bf16.msra.mxu0 0
        %1026 = vmatprep.mubr.bf16.mxu0 0
        %1027 = vmatmul.mubr.bf16.gmra.mrb[0].mxu0 %v845
        %v1028 = vpop.f32.mrb[0].mxu0
        %v1029 = vadd.f32 0.0, %v1028
        %v1030 = vpop.f32.mrb[0].mxu0
        %v1031 = vadd.f32 0.0, %v1030
        %v1032 = vpop.f32.mrb[0].mxu0
        %v1033 = vpop.f32.mrb[0].mxu0
        %1034 = vdwg.mxu0
        %v1035 = vadd.f32 %v676, %v906
        %v1036 = vadd.f32 %v678, %v908
        %v1037 = vadd.f32 %v717, %v947
        %v1038 = vadd.f32 %v719, %v949
        %v1039 = vadd.f32 %v758, %v988
        %v1040 = vadd.f32 %v760, %v990
        %v1041 = vadd.f32 %v799, %v1029
        %v1042 = vadd.f32 %v801, %v1031
        %s1043 = scalar_lea.vmem %s264, 6 [#allocation2]
        %v1044 = vld [vmem:[%s1043] sm:$0xff]
        %v1045 = vld [vmem:[%s1043 + $0x8] sm:$0xff]
        %v1048 = vcombine.high %v1044, %v1044
        %v1050 = vunpack.c.l.s4 1983009808
        %v1051 = vunpack.c.0.s8 %v1050
        %v1052 = vlaneseq
        %v1053 = vshrl.u32 %v1052, 7
        %v1054 = vsub.s32 %v1051, %v1053
        %v1055 = vrot.slane %v1044, %v1054
        %v1057 = vunpack.c.l.s4 1983009808
        %v1058 = vunpack.c.0.s8 %v1057
        %v1059 = vlaneseq
        %v1060 = vshrl.u32 %v1059, 7
        %v1061 = vsub.s32 %v1058, %v1060
        %v1062 = vrot.slane %v1048, %v1061
        %v1063 = vcombine.high %v1055, %v1055
        %v1064 = vcombine.high %v1062, %v1062
        %v1065 = vcombine.high %v1045, %v1045
        %v1067 = vunpack.c.l.s4 1983009808
        %v1068 = vunpack.c.0.s8 %v1067
        %v1069 = vlaneseq
        %v1070 = vshrl.u32 %v1069, 7
        %v1071 = vsub.s32 %v1068, %v1070
        %v1072 = vrot.slane %v1045, %v1071
        %v1074 = vunpack.c.l.s4 1983009808
        %v1075 = vunpack.c.0.s8 %v1074
        %v1076 = vlaneseq
        %v1077 = vshrl.u32 %v1076, 7
        %v1078 = vsub.s32 %v1075, %v1077
        %v1079 = vrot.slane %v1065, %v1078
        %v1080 = vcombine.high %v1072, %v1072
        %v1081 = vcombine.high %v1079, %v1079
        %v1083 = vsel %vm385, %v330, 0
        %v1086 = vsel %vm389, %v1055, 0
        %v1089 = vsel %vm389, %v1063, 0
        %v1092 = vsel %vm389, %v1062, 0
        %v1095 = vsel %vm389, %v1064, 0
        %v1098 = vsel %vm389, %v1072, 0
        %v1101 = vsel %vm389, %v1080, 0
        %v1104 = vsel %vm389, %v1079, 0
        %v1107 = vsel %vm389, %v1081, 0
        %1109 = vmatprep.subr.bf16.mxu0 %v1089
        %1110 = vmatpush1.bf16.msra.mxu0 %v1086
        %1111 = vmatprep.subr.bf16.mxu0 0
        %1112 = vmatpush1.bf16.msra.mxu0 0
        %1113 = vmatprep.subr.bf16.mxu0 0
        %1114 = vmatpush1.bf16.msra.mxu0 0
        %1115 = vmatprep.subr.bf16.mxu0 0
        %1116 = vmatpush1.bf16.msra.mxu0 0
        %1117 = vmatprep.subr.bf16.mxu0 0
        %1118 = vmatpush1.bf16.msra.mxu0 0
        %1119 = vmatprep.subr.bf16.mxu0 0
        %1120 = vmatpush1.bf16.msra.mxu0 0
        %1121 = vmatprep.subr.bf16.mxu0 0
        %1122 = vmatpush1.bf16.msra.mxu0 0
        %1123 = vmatprep.subr.bf16.mxu0 0
        %1124 = vmatpush1.bf16.msra.mxu0 0
        %1125 = vmatprep.subr.bf16.mxu0 0
        %1126 = vmatpush1.bf16.msra.mxu0 0
        %1127 = vmatprep.subr.bf16.mxu0 0
        %1128 = vmatpush1.bf16.msra.mxu0 0
        %1129 = vmatprep.subr.bf16.mxu0 0
        %1130 = vmatpush1.bf16.msra.mxu0 0
        %1131 = vmatprep.subr.bf16.mxu0 0
        %1132 = vmatpush1.bf16.msra.mxu0 0
        %1133 = vmatprep.subr.bf16.mxu0 0
        %1134 = vmatpush1.bf16.msra.mxu0 0
        %1135 = vmatprep.subr.bf16.mxu0 0
        %1136 = vmatpush1.bf16.msra.mxu0 0
        %1137 = vmatprep.subr.bf16.mxu0 0
        %1138 = vmatpush1.bf16.msra.mxu0 0
        %1139 = vmatprep.subr.bf16.mxu0 0
        %1140 = vmatpush1.bf16.msra.mxu0 0
        %1141 = vmatprep.mubr.bf16.mxu0 0
        %1142 = vmatmul.mubr.bf16.gmra.mrb[0].mxu0 %v1083
        %v1143 = vpop.f32.mrb[0].mxu0
        %v1144 = vadd.f32 0.0, %v1143
        %v1145 = vpop.f32.mrb[0].mxu0
        %v1146 = vadd.f32 0.0, %v1145
        %v1147 = vpop.f32.mrb[0].mxu0
        %v1148 = vpop.f32.mrb[0].mxu0
        %1149 = vdwg.mxu0
        %1150 = vmatprep.subr.bf16.mxu0 %v1095
        %1151 = vmatpush1.bf16.msra.mxu0 %v1092
        %1152 = vmatprep.subr.bf16.mxu0 0
        %1153 = vmatpush1.bf16.msra.mxu0 0
        %1154 = vmatprep.subr.bf16.mxu0 0
        %1155 = vmatpush1.bf16.msra.mxu0 0
        %1156 = vmatprep.subr.bf16.mxu0 0
        %1157 = vmatpush1.bf16.msra.mxu0 0
        %1158 = vmatprep.subr.bf16.mxu0 0
        %1159 = vmatpush1.bf16.msra.mxu0 0
        %1160 = vmatprep.subr.bf16.mxu0 0
        %1161 = vmatpush1.bf16.msra.mxu0 0
        %1162 = vmatprep.subr.bf16.mxu0 0
        %1163 = vmatpush1.bf16.msra.mxu0 0
        %1164 = vmatprep.subr.bf16.mxu0 0
        %1165 = vmatpush1.bf16.msra.mxu0 0
        %1166 = vmatprep.subr.bf16.mxu0 0
        %1167 = vmatpush1.bf16.msra.mxu0 0
        %1168 = vmatprep.subr.bf16.mxu0 0
        %1169 = vmatpush1.bf16.msra.mxu0 0
        %1170 = vmatprep.subr.bf16.mxu0 0
        %1171 = vmatpush1.bf16.msra.mxu0 0
        %1172 = vmatprep.subr.bf16.mxu0 0
        %1173 = vmatpush1.bf16.msra.mxu0 0
        %1174 = vmatprep.subr.bf16.mxu0 0
        %1175 = vmatpush1.bf16.msra.mxu0 0
        %1176 = vmatprep.subr.bf16.mxu0 0
        %1177 = vmatpush1.bf16.msra.mxu0 0
        %1178 = vmatprep.subr.bf16.mxu0 0
        %1179 = vmatpush1.bf16.msra.mxu0 0
        %1180 = vmatprep.subr.bf16.mxu0 0
        %1181 = vmatpush1.bf16.msra.mxu0 0
        %1182 = vmatprep.mubr.bf16.mxu0 0
        %1183 = vmatmul.mubr.bf16.gmra.mrb[0].mxu0 %v1083
        %v1184 = vpop.f32.mrb[0].mxu0
        %v1185 = vadd.f32 0.0, %v1184
        %v1186 = vpop.f32.mrb[0].mxu0
        %v1187 = vadd.f32 0.0, %v1186
        %v1188 = vpop.f32.mrb[0].mxu0
        %v1189 = vpop.f32.mrb[0].mxu0
        %1190 = vdwg.mxu0
        %1191 = vmatprep.subr.bf16.mxu0 %v1101
        %1192 = vmatpush1.bf16.msra.mxu0 %v1098
        %1193 = vmatprep.subr.bf16.mxu0 0
        %1194 = vmatpush1.bf16.msra.mxu0 0
        %1195 = vmatprep.subr.bf16.mxu0 0
        %1196 = vmatpush1.bf16.msra.mxu0 0
        %1197 = vmatprep.subr.bf16.mxu0 0
        %1198 = vmatpush1.bf16.msra.mxu0 0
        %1199 = vmatprep.subr.bf16.mxu0 0
        %1200 = vmatpush1.bf16.msra.mxu0 0
        %1201 = vmatprep.subr.bf16.mxu0 0
        %1202 = vmatpush1.bf16.msra.mxu0 0
        %1203 = vmatprep.subr.bf16.mxu0 0
        %1204 = vmatpush1.bf16.msra.mxu0 0
        %1205 = vmatprep.subr.bf16.mxu0 0
        %1206 = vmatpush1.bf16.msra.mxu0 0
        %1207 = vmatprep.subr.bf16.mxu0 0
        %1208 = vmatpush1.bf16.msra.mxu0 0
        %1209 = vmatprep.subr.bf16.mxu0 0
        %1210 = vmatpush1.bf16.msra.mxu0 0
        %1211 = vmatprep.subr.bf16.mxu0 0
        %1212 = vmatpush1.bf16.msra.mxu0 0
        %1213 = vmatprep.subr.bf16.mxu0 0
        %1214 = vmatpush1.bf16.msra.mxu0 0
        %1215 = vmatprep.subr.bf16.mxu0 0
        %1216 = vmatpush1.bf16.msra.mxu0 0
        %1217 = vmatprep.subr.bf16.mxu0 0
        %1218 = vmatpush1.bf16.msra.mxu0 0
        %1219 = vmatprep.subr.bf16.mxu0 0
        %1220 = vmatpush1.bf16.msra.mxu0 0
        %1221 = vmatprep.subr.bf16.mxu0 0
        %1222 = vmatpush1.bf16.msra.mxu0 0
        %1223 = vmatprep.mubr.bf16.mxu0 0
        %1224 = vmatmul.mubr.bf16.gmra.mrb[0].mxu0 %v1083
        %v1225 = vpop.f32.mrb[0].mxu0
        %v1226 = vadd.f32 0.0, %v1225
        %v1227 = vpop.f32.mrb[0].mxu0
        %v1228 = vadd.f32 0.0, %v1227
        %v1229 = vpop.f32.mrb[0].mxu0
        %v1230 = vpop.f32.mrb[0].mxu0
        %1231 = vdwg.mxu0
        %1232 = vmatprep.subr.bf16.mxu0 %v1107
        %1233 = vmatpush1.bf16.msra.mxu0 %v1104
        %1234 = vmatprep.subr.bf16.mxu0 0
        %1235 = vmatpush1.bf16.msra.mxu0 0
        %1236 = vmatprep.subr.bf16.mxu0 0
        %1237 = vmatpush1.bf16.msra.mxu0 0
        %1238 = vmatprep.subr.bf16.mxu0 0
        %1239 = vmatpush1.bf16.msra.mxu0 0
        %1240 = vmatprep.subr.bf16.mxu0 0
        %1241 = vmatpush1.bf16.msra.mxu0 0
        %1242 = vmatprep.subr.bf16.mxu0 0
        %1243 = vmatpush1.bf16.msra.mxu0 0
        %1244 = vmatprep.subr.bf16.mxu0 0
        %1245 = vmatpush1.bf16.msra.mxu0 0
        %1246 = vmatprep.subr.bf16.mxu0 0
        %1247 = vmatpush1.bf16.msra.mxu0 0
        %1248 = vmatprep.subr.bf16.mxu0 0
        %1249 = vmatpush1.bf16.msra.mxu0 0
        %1250 = vmatprep.subr.bf16.mxu0 0
        %1251 = vmatpush1.bf16.msra.mxu0 0
        %1252 = vmatprep.subr.bf16.mxu0 0
        %1253 = vmatpush1.bf16.msra.mxu0 0
        %1254 = vmatprep.subr.bf16.mxu0 0
        %1255 = vmatpush1.bf16.msra.mxu0 0
        %1256 = vmatprep.subr.bf16.mxu0 0
        %1257 = vmatpush1.bf16.msra.mxu0 0
        %1258 = vmatprep.subr.bf16.mxu0 0
        %1259 = vmatpush1.bf16.msra.mxu0 0
        %1260 = vmatprep.subr.bf16.mxu0 0
        %1261 = vmatpush1.bf16.msra.mxu0 0
        %1262 = vmatprep.subr.bf16.mxu0 0
        %1263 = vmatpush1.bf16.msra.mxu0 0
        %1264 = vmatprep.mubr.bf16.mxu0 0
        %1265 = vmatmul.mubr.bf16.gmra.mrb[0].mxu0 %v1083
        %v1266 = vpop.f32.mrb[0].mxu0
        %v1267 = vadd.f32 0.0, %v1266
        %v1268 = vpop.f32.mrb[0].mxu0
        %v1269 = vadd.f32 0.0, %v1268
        %v1270 = vpop.f32.mrb[0].mxu0
        %v1271 = vpop.f32.mrb[0].mxu0
        %1272 = vdwg.mxu0
        %v1273 = vadd.f32 %v1035, %v1144
        %v1274 = vadd.f32 %v1036, %v1146
        %v1275 = vadd.f32 %v1037, %v1185
        %v1276 = vadd.f32 %v1038, %v1187
        %v1277 = vadd.f32 %v1039, %v1226
        %v1278 = vadd.f32 %v1040, %v1228
        %v1279 = vadd.f32 %v1041, %v1267
        %v1280 = vadd.f32 %v1042, %v1269
        %s1281 = scalar_lea.vmem %s264, 8 [#allocation2]
        %v1282 = vld [vmem:[%s1281] sm:$0xff]
        %v1283 = vld [vmem:[%s1281 + $0x8] sm:$0xff]
        %v1286 = vcombine.high %v1282, %v1282
        %v1288 = vunpack.c.l.s4 1983009808
        %v1289 = vunpack.c.0.s8 %v1288
        %v1290 = vlaneseq
        %v1291 = vshrl.u32 %v1290, 7
        %v1292 = vsub.s32 %v1289, %v1291
        %v1293 = vrot.slane %v1282, %v1292
        %v1295 = vunpack.c.l.s4 1983009808
        %v1296 = vunpack.c.0.s8 %v1295
        %v1297 = vlaneseq
        %v1298 = vshrl.u32 %v1297, 7
        %v1299 = vsub.s32 %v1296, %v1298
        %v1300 = vrot.slane %v1286, %v1299
        %v1301 = vcombine.high %v1293, %v1293
        %v1302 = vcombine.high %v1300, %v1300
        %v1303 = vcombine.high %v1283, %v1283
        %v1305 = vunpack.c.l.s4 1983009808
        %v1306 = vunpack.c.0.s8 %v1305
        %v1307 = vlaneseq
        %v1308 = vshrl.u32 %v1307, 7
        %v1309 = vsub.s32 %v1306, %v1308
        %v1310 = vrot.slane %v1283, %v1309
        %v1312 = vunpack.c.l.s4 1983009808
        %v1313 = vunpack.c.0.s8 %v1312
        %v1314 = vlaneseq
        %v1315 = vshrl.u32 %v1314, 7
        %v1316 = vsub.s32 %v1313, %v1315
        %v1317 = vrot.slane %v1303, %v1316
        %v1318 = vcombine.high %v1310, %v1310
        %v1319 = vcombine.high %v1317, %v1317
        %v1321 = vsel %vm385, %v332, 0
        %v1324 = vsel %vm389, %v1293, 0
        %v1327 = vsel %vm389, %v1301, 0
        %v1330 = vsel %vm389, %v1300, 0
        %v1333 = vsel %vm389, %v1302, 0
        %v1336 = vsel %vm389, %v1310, 0
        %v1339 = vsel %vm389, %v1318, 0
        %v1342 = vsel %vm389, %v1317, 0
        %v1345 = vsel %vm389, %v1319, 0
        %1347 = vmatprep.subr.bf16.mxu0 %v1327
        %1348 = vmatpush1.bf16.msra.mxu0 %v1324
        %1349 = vmatprep.subr.bf16.mxu0 0
        %1350 = vmatpush1.bf16.msra.mxu0 0
        %1351 = vmatprep.subr.bf16.mxu0 0
        %1352 = vmatpush1.bf16.msra.mxu0 0
        %1353 = vmatprep.subr.bf16.mxu0 0
        %1354 = vmatpush1.bf16.msra.mxu0 0
        %1355 = vmatprep.subr.bf16.mxu0 0
        %1356 = vmatpush1.bf16.msra.mxu0 0
        %1357 = vmatprep.subr.bf16.mxu0 0
        %1358 = vmatpush1.bf16.msra.mxu0 0
        %1359 = vmatprep.subr.bf16.mxu0 0
        %1360 = vmatpush1.bf16.msra.mxu0 0
        %1361 = vmatprep.subr.bf16.mxu0 0
        %1362 = vmatpush1.bf16.msra.mxu0 0
        %1363 = vmatprep.subr.bf16.mxu0 0
        %1364 = vmatpush1.bf16.msra.mxu0 0
        %1365 = vmatprep.subr.bf16.mxu0 0
        %1366 = vmatpush1.bf16.msra.mxu0 0
        %1367 = vmatprep.subr.bf16.mxu0 0
        %1368 = vmatpush1.bf16.msra.mxu0 0
        %1369 = vmatprep.subr.bf16.mxu0 0
        %1370 = vmatpush1.bf16.msra.mxu0 0
        %1371 = vmatprep.subr.bf16.mxu0 0
        %1372 = vmatpush1.bf16.msra.mxu0 0
        %1373 = vmatprep.subr.bf16.mxu0 0
        %1374 = vmatpush1.bf16.msra.mxu0 0
        %1375 = vmatprep.subr.bf16.mxu0 0
        %1376 = vmatpush1.bf16.msra.mxu0 0
        %1377 = vmatprep.subr.bf16.mxu0 0
        %1378 = vmatpush1.bf16.msra.mxu0 0
        %1379 = vmatprep.mubr.bf16.mxu0 0
        %1380 = vmatmul.mubr.bf16.gmra.mrb[0].mxu0 %v1321
        %v1381 = vpop.f32.mrb[0].mxu0
        %v1382 = vadd.f32 0.0, %v1381
        %v1383 = vpop.f32.mrb[0].mxu0
        %v1384 = vadd.f32 0.0, %v1383
        %v1385 = vpop.f32.mrb[0].mxu0
        %v1386 = vpop.f32.mrb[0].mxu0
        %1387 = vdwg.mxu0
        %1388 = vmatprep.subr.bf16.mxu0 %v1333
        %1389 = vmatpush1.bf16.msra.mxu0 %v1330
        %1390 = vmatprep.subr.bf16.mxu0 0
        %1391 = vmatpush1.bf16.msra.mxu0 0
        %1392 = vmatprep.subr.bf16.mxu0 0
        %1393 = vmatpush1.bf16.msra.mxu0 0
        %1394 = vmatprep.subr.bf16.mxu0 0
        %1395 = vmatpush1.bf16.msra.mxu0 0
        %1396 = vmatprep.subr.bf16.mxu0 0
        %1397 = vmatpush1.bf16.msra.mxu0 0
        %1398 = vmatprep.subr.bf16.mxu0 0
        %1399 = vmatpush1.bf16.msra.mxu0 0
        %1400 = vmatprep.subr.bf16.mxu0 0
        %1401 = vmatpush1.bf16.msra.mxu0 0
        %1402 = vmatprep.subr.bf16.mxu0 0
        %1403 = vmatpush1.bf16.msra.mxu0 0
        %1404 = vmatprep.subr.bf16.mxu0 0
        %1405 = vmatpush1.bf16.msra.mxu0 0
        %1406 = vmatprep.subr.bf16.mxu0 0
        %1407 = vmatpush1.bf16.msra.mxu0 0
        %1408 = vmatprep.subr.bf16.mxu0 0
        %1409 = vmatpush1.bf16.msra.mxu0 0
        %1410 = vmatprep.subr.bf16.mxu0 0
        %1411 = vmatpush1.bf16.msra.mxu0 0
        %1412 = vmatprep.subr.bf16.mxu0 0
        %1413 = vmatpush1.bf16.msra.mxu0 0
        %1414 = vmatprep.subr.bf16.mxu0 0
        %1415 = vmatpush1.bf16.msra.mxu0 0
        %1416 = vmatprep.subr.bf16.mxu0 0
        %1417 = vmatpush1.bf16.msra.mxu0 0
        %1418 = vmatprep.subr.bf16.mxu0 0
        %1419 = vmatpush1.bf16.msra.mxu0 0
        %1420 = vmatprep.mubr.bf16.mxu0 0
        %1421 = vmatmul.mubr.bf16.gmra.mrb[0].mxu0 %v1321
        %v1422 = vpop.f32.mrb[0].mxu0
        %v1423 = vadd.f32 0.0, %v1422
        %v1424 = vpop.f32.mrb[0].mxu0
        %v1425 = vadd.f32 0.0, %v1424
        %v1426 = vpop.f32.mrb[0].mxu0
        %v1427 = vpop.f32.mrb[0].mxu0
        %1428 = vdwg.mxu0
        %1429 = vmatprep.subr.bf16.mxu0 %v1339
        %1430 = vmatpush1.bf16.msra.mxu0 %v1336
        %1431 = vmatprep.subr.bf16.mxu0 0
        %1432 = vmatpush1.bf16.msra.mxu0 0
        %1433 = vmatprep.subr.bf16.mxu0 0
        %1434 = vmatpush1.bf16.msra.mxu0 0
        %1435 = vmatprep.subr.bf16.mxu0 0
        %1436 = vmatpush1.bf16.msra.mxu0 0
        %1437 = vmatprep.subr.bf16.mxu0 0
        %1438 = vmatpush1.bf16.msra.mxu0 0
        %1439 = vmatprep.subr.bf16.mxu0 0
        %1440 = vmatpush1.bf16.msra.mxu0 0
        %1441 = vmatprep.subr.bf16.mxu0 0
        %1442 = vmatpush1.bf16.msra.mxu0 0
        %1443 = vmatprep.subr.bf16.mxu0 0
        %1444 = vmatpush1.bf16.msra.mxu0 0
        %1445 = vmatprep.subr.bf16.mxu0 0
        %1446 = vmatpush1.bf16.msra.mxu0 0
        %1447 = vmatprep.subr.bf16.mxu0 0
        %1448 = vmatpush1.bf16.msra.mxu0 0
        %1449 = vmatprep.subr.bf16.mxu0 0
        %1450 = vmatpush1.bf16.msra.mxu0 0
        %1451 = vmatprep.subr.bf16.mxu0 0
        %1452 = vmatpush1.bf16.msra.mxu0 0
        %1453 = vmatprep.subr.bf16.mxu0 0
        %1454 = vmatpush1.bf16.msra.mxu0 0
        %1455 = vmatprep.subr.bf16.mxu0 0
        %1456 = vmatpush1.bf16.msra.mxu0 0
        %1457 = vmatprep.subr.bf16.mxu0 0
        %1458 = vmatpush1.bf16.msra.mxu0 0
        %1459 = vmatprep.subr.bf16.mxu0 0
        %1460 = vmatpush1.bf16.msra.mxu0 0
        %1461 = vmatprep.mubr.bf16.mxu0 0
        %1462 = vmatmul.mubr.bf16.gmra.mrb[0].mxu0 %v1321
        %v1463 = vpop.f32.mrb[0].mxu0
        %v1464 = vadd.f32 0.0, %v1463
        %v1465 = vpop.f32.mrb[0].mxu0
        %v1466 = vadd.f32 0.0, %v1465
        %v1467 = vpop.f32.mrb[0].mxu0
        %v1468 = vpop.f32.mrb[0].mxu0
        %1469 = vdwg.mxu0
        %1470 = vmatprep.subr.bf16.mxu0 %v1345
        %1471 = vmatpush1.bf16.msra.mxu0 %v1342
        %1472 = vmatprep.subr.bf16.mxu0 0
        %1473 = vmatpush1.bf16.msra.mxu0 0
        %1474 = vmatprep.subr.bf16.mxu0 0
        %1475 = vmatpush1.bf16.msra.mxu0 0
        %1476 = vmatprep.subr.bf16.mxu0 0
        %1477 = vmatpush1.bf16.msra.mxu0 0
        %1478 = vmatprep.subr.bf16.mxu0 0
        %1479 = vmatpush1.bf16.msra.mxu0 0
        %1480 = vmatprep.subr.bf16.mxu0 0
        %1481 = vmatpush1.bf16.msra.mxu0 0
        %1482 = vmatprep.subr.bf16.mxu0 0
        %1483 = vmatpush1.bf16.msra.mxu0 0
        %1484 = vmatprep.subr.bf16.mxu0 0
        %1485 = vmatpush1.bf16.msra.mxu0 0
        %1486 = vmatprep.subr.bf16.mxu0 0
        %1487 = vmatpush1.bf16.msra.mxu0 0
        %1488 = vmatprep.subr.bf16.mxu0 0
        %1489 = vmatpush1.bf16.msra.mxu0 0
        %1490 = vmatprep.subr.bf16.mxu0 0
        %1491 = vmatpush1.bf16.msra.mxu0 0
        %1492 = vmatprep.subr.bf16.mxu0 0
        %1493 = vmatpush1.bf16.msra.mxu0 0
        %1494 = vmatprep.subr.bf16.mxu0 0
        %1495 = vmatpush1.bf16.msra.mxu0 0
        %1496 = vmatprep.subr.bf16.mxu0 0
        %1497 = vmatpush1.bf16.msra.mxu0 0
        %1498 = vmatprep.subr.bf16.mxu0 0
        %1499 = vmatpush1.bf16.msra.mxu0 0
        %1500 = vmatprep.subr.bf16.mxu0 0
        %1501 = vmatpush1.bf16.msra.mxu0 0
        %1502 = vmatprep.mubr.bf16.mxu0 0
        %1503 = vmatmul.mubr.bf16.gmra.mrb[0].mxu0 %v1321
        %v1504 = vpop.f32.mrb[0].mxu0
        %v1505 = vadd.f32 0.0, %v1504
        %v1506 = vpop.f32.mrb[0].mxu0
        %v1507 = vadd.f32 0.0, %v1506
        %v1508 = vpop.f32.mrb[0].mxu0
        %v1509 = vpop.f32.mrb[0].mxu0
        %1510 = vdwg.mxu0
        %v1511 = vadd.f32 %v1273, %v1382
        %v1512 = vadd.f32 %v1274, %v1384
        %v1513 = vadd.f32 %v1275, %v1423
        %v1514 = vadd.f32 %v1276, %v1425
        %v1515 = vadd.f32 %v1277, %v1464
        %v1516 = vadd.f32 %v1278, %v1466
        %v1517 = vadd.f32 %v1279, %v1505
        %v1518 = vadd.f32 %v1280, %v1507
        %s1519 = scalar_lea.vmem %s264, 10 [#allocation2]
        %v1520 = vld [vmem:[%s1519] sm:$0xff]
        %v1521 = vld [vmem:[%s1519 + $0x8] sm:$0xff]
        %v1524 = vcombine.high %v1520, %v1520
        %v1526 = vunpack.c.l.s4 1983009808
        %v1527 = vunpack.c.0.s8 %v1526
        %v1528 = vlaneseq
        %v1529 = vshrl.u32 %v1528, 7
        %v1530 = vsub.s32 %v1527, %v1529
        %v1531 = vrot.slane %v1520, %v1530
        %v1533 = vunpack.c.l.s4 1983009808
        %v1534 = vunpack.c.0.s8 %v1533
        %v1535 = vlaneseq
        %v1536 = vshrl.u32 %v1535, 7
        %v1537 = vsub.s32 %v1534, %v1536
        %v1538 = vrot.slane %v1524, %v1537
        %v1539 = vcombine.high %v1531, %v1531
        %v1540 = vcombine.high %v1538, %v1538
        %v1541 = vcombine.high %v1521, %v1521
        %v1543 = vunpack.c.l.s4 1983009808
        %v1544 = vunpack.c.0.s8 %v1543
        %v1545 = vlaneseq
        %v1546 = vshrl.u32 %v1545, 7
        %v1547 = vsub.s32 %v1544, %v1546
        %v1548 = vrot.slane %v1521, %v1547
        %v1550 = vunpack.c.l.s4 1983009808
        %v1551 = vunpack.c.0.s8 %v1550
        %v1552 = vlaneseq
        %v1553 = vshrl.u32 %v1552, 7
        %v1554 = vsub.s32 %v1551, %v1553
        %v1555 = vrot.slane %v1541, %v1554
        %v1556 = vcombine.high %v1548, %v1548
        %v1557 = vcombine.high %v1555, %v1555
        %v1559 = vsel %vm385, %v334, 0
        %v1562 = vsel %vm389, %v1531, 0
        %v1565 = vsel %vm389, %v1539, 0
        %v1568 = vsel %vm389, %v1538, 0
        %v1571 = vsel %vm389, %v1540, 0
        %v1574 = vsel %vm389, %v1548, 0
        %v1577 = vsel %vm389, %v1556, 0
        %v1580 = vsel %vm389, %v1555, 0
        %v1583 = vsel %vm389, %v1557, 0
        %1585 = vmatprep.subr.bf16.mxu0 %v1565
        %1586 = vmatpush1.bf16.msra.mxu0 %v1562
        %1587 = vmatprep.subr.bf16.mxu0 0
        %1588 = vmatpush1.bf16.msra.mxu0 0
        %1589 = vmatprep.subr.bf16.mxu0 0
        %1590 = vmatpush1.bf16.msra.mxu0 0
        %1591 = vmatprep.subr.bf16.mxu0 0
        %1592 = vmatpush1.bf16.msra.mxu0 0
        %1593 = vmatprep.subr.bf16.mxu0 0
        %1594 = vmatpush1.bf16.msra.mxu0 0
        %1595 = vmatprep.subr.bf16.mxu0 0
        %1596 = vmatpush1.bf16.msra.mxu0 0
        %1597 = vmatprep.subr.bf16.mxu0 0
        %1598 = vmatpush1.bf16.msra.mxu0 0
        %1599 = vmatprep.subr.bf16.mxu0 0
        %1600 = vmatpush1.bf16.msra.mxu0 0
        %1601 = vmatprep.subr.bf16.mxu0 0
        %1602 = vmatpush1.bf16.msra.mxu0 0
        %1603 = vmatprep.subr.bf16.mxu0 0
        %1604 = vmatpush1.bf16.msra.mxu0 0
        %1605 = vmatprep.subr.bf16.mxu0 0
        %1606 = vmatpush1.bf16.msra.mxu0 0
        %1607 = vmatprep.subr.bf16.mxu0 0
        %1608 = vmatpush1.bf16.msra.mxu0 0
        %1609 = vmatprep.subr.bf16.mxu0 0
        %1610 = vmatpush1.bf16.msra.mxu0 0
        %1611 = vmatprep.subr.bf16.mxu0 0
        %1612 = vmatpush1.bf16.msra.mxu0 0
        %1613 = vmatprep.subr.bf16.mxu0 0
        %1614 = vmatpush1.bf16.msra.mxu0 0
        %1615 = vmatprep.subr.bf16.mxu0 0
        %1616 = vmatpush1.bf16.msra.mxu0 0
        %1617 = vmatprep.mubr.bf16.mxu0 0
        %1618 = vmatmul.mubr.bf16.gmra.mrb[0].mxu0 %v1559
        %v1619 = vpop.f32.mrb[0].mxu0
        %v1620 = vadd.f32 0.0, %v1619
        %v1621 = vpop.f32.mrb[0].mxu0
        %v1622 = vadd.f32 0.0, %v1621
        %v1623 = vpop.f32.mrb[0].mxu0
        %v1624 = vpop.f32.mrb[0].mxu0
        %1625 = vdwg.mxu0
        %1626 = vmatprep.subr.bf16.mxu0 %v1571
        %1627 = vmatpush1.bf16.msra.mxu0 %v1568
        %1628 = vmatprep.subr.bf16.mxu0 0
        %1629 = vmatpush1.bf16.msra.mxu0 0
        %1630 = vmatprep.subr.bf16.mxu0 0
        %1631 = vmatpush1.bf16.msra.mxu0 0
        %1632 = vmatprep.subr.bf16.mxu0 0
        %1633 = vmatpush1.bf16.msra.mxu0 0
        %1634 = vmatprep.subr.bf16.mxu0 0
        %1635 = vmatpush1.bf16.msra.mxu0 0
        %1636 = vmatprep.subr.bf16.mxu0 0
        %1637 = vmatpush1.bf16.msra.mxu0 0
        %1638 = vmatprep.subr.bf16.mxu0 0
        %1639 = vmatpush1.bf16.msra.mxu0 0
        %1640 = vmatprep.subr.bf16.mxu0 0
        %1641 = vmatpush1.bf16.msra.mxu0 0
        %1642 = vmatprep.subr.bf16.mxu0 0
        %1643 = vmatpush1.bf16.msra.mxu0 0
        %1644 = vmatprep.subr.bf16.mxu0 0
        %1645 = vmatpush1.bf16.msra.mxu0 0
        %1646 = vmatprep.subr.bf16.mxu0 0
        %1647 = vmatpush1.bf16.msra.mxu0 0
        %1648 = vmatprep.subr.bf16.mxu0 0
        %1649 = vmatpush1.bf16.msra.mxu0 0
        %1650 = vmatprep.subr.bf16.mxu0 0
        %1651 = vmatpush1.bf16.msra.mxu0 0
        %1652 = vmatprep.subr.bf16.mxu0 0
        %1653 = vmatpush1.bf16.msra.mxu0 0
        %1654 = vmatprep.subr.bf16.mxu0 0
        %1655 = vmatpush1.bf16.msra.mxu0 0
        %1656 = vmatprep.subr.bf16.mxu0 0
        %1657 = vmatpush1.bf16.msra.mxu0 0
        %1658 = vmatprep.mubr.bf16.mxu0 0
        %1659 = vmatmul.mubr.bf16.gmra.mrb[0].mxu0 %v1559
        %v1660 = vpop.f32.mrb[0].mxu0
        %v1661 = vadd.f32 0.0, %v1660
        %v1662 = vpop.f32.mrb[0].mxu0
        %v1663 = vadd.f32 0.0, %v1662
        %v1664 = vpop.f32.mrb[0].mxu0
        %v1665 = vpop.f32.mrb[0].mxu0
        %1666 = vdwg.mxu0
        %1667 = vmatprep.subr.bf16.mxu0 %v1577
        %1668 = vmatpush1.bf16.msra.mxu0 %v1574
        %1669 = vmatprep.subr.bf16.mxu0 0
        %1670 = vmatpush1.bf16.msra.mxu0 0
        %1671 = vmatprep.subr.bf16.mxu0 0
        %1672 = vmatpush1.bf16.msra.mxu0 0
        %1673 = vmatprep.subr.bf16.mxu0 0
        %1674 = vmatpush1.bf16.msra.mxu0 0
        %1675 = vmatprep.subr.bf16.mxu0 0
        %1676 = vmatpush1.bf16.msra.mxu0 0
        %1677 = vmatprep.subr.bf16.mxu0 0
        %1678 = vmatpush1.bf16.msra.mxu0 0
        %1679 = vmatprep.subr.bf16.mxu0 0
        %1680 = vmatpush1.bf16.msra.mxu0 0
        %1681 = vmatprep.subr.bf16.mxu0 0
        %1682 = vmatpush1.bf16.msra.mxu0 0
        %1683 = vmatprep.subr.bf16.mxu0 0
        %1684 = vmatpush1.bf16.msra.mxu0 0
        %1685 = vmatprep.subr.bf16.mxu0 0
        %1686 = vmatpush1.bf16.msra.mxu0 0
        %1687 = vmatprep.subr.bf16.mxu0 0
        %1688 = vmatpush1.bf16.msra.mxu0 0
        %1689 = vmatprep.subr.bf16.mxu0 0
        %1690 = vmatpush1.bf16.msra.mxu0 0
        %1691 = vmatprep.subr.bf16.mxu0 0
        %1692 = vmatpush1.bf16.msra.mxu0 0
        %1693 = vmatprep.subr.bf16.mxu0 0
        %1694 = vmatpush1.bf16.msra.mxu0 0
        %1695 = vmatprep.subr.bf16.mxu0 0
        %1696 = vmatpush1.bf16.msra.mxu0 0
        %1697 = vmatprep.subr.bf16.mxu0 0
        %1698 = vmatpush1.bf16.msra.mxu0 0
        %1699 = vmatprep.mubr.bf16.mxu0 0
        %1700 = vmatmul.mubr.bf16.gmra.mrb[0].mxu0 %v1559
        %v1701 = vpop.f32.mrb[0].mxu0
        %v1702 = vadd.f32 0.0, %v1701
        %v1703 = vpop.f32.mrb[0].mxu0
        %v1704 = vadd.f32 0.0, %v1703
        %v1705 = vpop.f32.mrb[0].mxu0
        %v1706 = vpop.f32.mrb[0].mxu0
        %1707 = vdwg.mxu0
        %1708 = vmatprep.subr.bf16.mxu0 %v1583
        %1709 = vmatpush1.bf16.msra.mxu0 %v1580
        %1710 = vmatprep.subr.bf16.mxu0 0
        %1711 = vmatpush1.bf16.msra.mxu0 0
        %1712 = vmatprep.subr.bf16.mxu0 0
        %1713 = vmatpush1.bf16.msra.mxu0 0
        %1714 = vmatprep.subr.bf16.mxu0 0
        %1715 = vmatpush1.bf16.msra.mxu0 0
        %1716 = vmatprep.subr.bf16.mxu0 0
        %1717 = vmatpush1.bf16.msra.mxu0 0
        %1718 = vmatprep.subr.bf16.mxu0 0
        %1719 = vmatpush1.bf16.msra.mxu0 0
        %1720 = vmatprep.subr.bf16.mxu0 0
        %1721 = vmatpush1.bf16.msra.mxu0 0
        %1722 = vmatprep.subr.bf16.mxu0 0
        %1723 = vmatpush1.bf16.msra.mxu0 0
        %1724 = vmatprep.subr.bf16.mxu0 0
        %1725 = vmatpush1.bf16.msra.mxu0 0
        %1726 = vmatprep.subr.bf16.mxu0 0
        %1727 = vmatpush1.bf16.msra.mxu0 0
        %1728 = vmatprep.subr.bf16.mxu0 0
        %1729 = vmatpush1.bf16.msra.mxu0 0
        %1730 = vmatprep.subr.bf16.mxu0 0
        %1731 = vmatpush1.bf16.msra.mxu0 0
        %1732 = vmatprep.subr.bf16.mxu0 0
        %1733 = vmatpush1.bf16.msra.mxu0 0
        %1734 = vmatprep.subr.bf16.mxu0 0
        %1735 = vmatpush1.bf16.msra.mxu0 0
        %1736 = vmatprep.subr.bf16.mxu0 0
        %1737 = vmatpush1.bf16.msra.mxu0 0
        %1738 = vmatprep.subr.bf16.mxu0 0
        %1739 = vmatpush1.bf16.msra.mxu0 0
        %1740 = vmatprep.mubr.bf16.mxu0 0
        %1741 = vmatmul.mubr.bf16.gmra.mrb[0].mxu0 %v1559
        %v1742 = vpop.f32.mrb[0].mxu0
        %v1743 = vadd.f32 0.0, %v1742
        %v1744 = vpop.f32.mrb[0].mxu0
        %v1745 = vadd.f32 0.0, %v1744
        %v1746 = vpop.f32.mrb[0].mxu0
        %v1747 = vpop.f32.mrb[0].mxu0
        %1748 = vdwg.mxu0
        %v1749 = vadd.f32 %v1511, %v1620
        %v1750 = vadd.f32 %v1512, %v1622
        %v1751 = vadd.f32 %v1513, %v1661
        %v1752 = vadd.f32 %v1514, %v1663
        %v1753 = vadd.f32 %v1515, %v1702
        %v1754 = vadd.f32 %v1516, %v1704
        %v1755 = vadd.f32 %v1517, %v1743
        %v1756 = vadd.f32 %v1518, %v1745
        %s1757 = scalar_lea.vmem %s264, 12 [#allocation2]
        %v1758 = vld [vmem:[%s1757] sm:$0xff]
        %v1759 = vld [vmem:[%s1757 + $0x8] sm:$0xff]
        %v1762 = vcombine.high %v1758, %v1758
        %v1764 = vunpack.c.l.s4 1983009808
        %v1765 = vunpack.c.0.s8 %v1764
        %v1766 = vlaneseq
        %v1767 = vshrl.u32 %v1766, 7
        %v1768 = vsub.s32 %v1765, %v1767
        %v1769 = vrot.slane %v1758, %v1768
        %v1771 = vunpack.c.l.s4 1983009808
        %v1772 = vunpack.c.0.s8 %v1771
        %v1773 = vlaneseq
        %v1774 = vshrl.u32 %v1773, 7
        %v1775 = vsub.s32 %v1772, %v1774
        %v1776 = vrot.slane %v1762, %v1775
        %v1777 = vcombine.high %v1769, %v1769
        %v1778 = vcombine.high %v1776, %v1776
        %v1779 = vcombine.high %v1759, %v1759
        %v1781 = vunpack.c.l.s4 1983009808
        %v1782 = vunpack.c.0.s8 %v1781
        %v1783 = vlaneseq
        %v1784 = vshrl.u32 %v1783, 7
        %v1785 = vsub.s32 %v1782, %v1784
        %v1786 = vrot.slane %v1759, %v1785
        %v1788 = vunpack.c.l.s4 1983009808
        %v1789 = vunpack.c.0.s8 %v1788
        %v1790 = vlaneseq
        %v1791 = vshrl.u32 %v1790, 7
        %v1792 = vsub.s32 %v1789, %v1791
        %v1793 = vrot.slane %v1779, %v1792
        %v1794 = vcombine.high %v1786, %v1786
        %v1795 = vcombine.high %v1793, %v1793
        %v1797 = vsel %vm385, %v336, 0
        %v1800 = vsel %vm389, %v1769, 0
        %v1803 = vsel %vm389, %v1777, 0
        %v1806 = vsel %vm389, %v1776, 0
        %v1809 = vsel %vm389, %v1778, 0
        %v1812 = vsel %vm389, %v1786, 0
        %v1815 = vsel %vm389, %v1794, 0
        %v1818 = vsel %vm389, %v1793, 0
        %v1821 = vsel %vm389, %v1795, 0
        %1823 = vmatprep.subr.bf16.mxu0 %v1803
        %1824 = vmatpush1.bf16.msra.mxu0 %v1800
        %1825 = vmatprep.subr.bf16.mxu0 0
        %1826 = vmatpush1.bf16.msra.mxu0 0
        %1827 = vmatprep.subr.bf16.mxu0 0
        %1828 = vmatpush1.bf16.msra.mxu0 0
        %1829 = vmatprep.subr.bf16.mxu0 0
        %1830 = vmatpush1.bf16.msra.mxu0 0
        %1831 = vmatprep.subr.bf16.mxu0 0
        %1832 = vmatpush1.bf16.msra.mxu0 0
        %1833 = vmatprep.subr.bf16.mxu0 0
        %1834 = vmatpush1.bf16.msra.mxu0 0
        %1835 = vmatprep.subr.bf16.mxu0 0
        %1836 = vmatpush1.bf16.msra.mxu0 0
        %1837 = vmatprep.subr.bf16.mxu0 0
        %1838 = vmatpush1.bf16.msra.mxu0 0
        %1839 = vmatprep.subr.bf16.mxu0 0
        %1840 = vmatpush1.bf16.msra.mxu0 0
        %1841 = vmatprep.subr.bf16.mxu0 0
        %1842 = vmatpush1.bf16.msra.mxu0 0
        %1843 = vmatprep.subr.bf16.mxu0 0
        %1844 = vmatpush1.bf16.msra.mxu0 0
        %1845 = vmatprep.subr.bf16.mxu0 0
        %1846 = vmatpush1.bf16.msra.mxu0 0
        %1847 = vmatprep.subr.bf16.mxu0 0
        %1848 = vmatpush1.bf16.msra.mxu0 0
        %1849 = vmatprep.subr.bf16.mxu0 0
        %1850 = vmatpush1.bf16.msra.mxu0 0
        %1851 = vmatprep.subr.bf16.mxu0 0
        %1852 = vmatpush1.bf16.msra.mxu0 0
        %1853 = vmatprep.subr.bf16.mxu0 0
        %1854 = vmatpush1.bf16.msra.mxu0 0
        %1855 = vmatprep.mubr.bf16.mxu0 0
        %1856 = vmatmul.mubr.bf16.gmra.mrb[0].mxu0 %v1797
        %v1857 = vpop.f32.mrb[0].mxu0
        %v1858 = vadd.f32 0.0, %v1857
        %v1859 = vpop.f32.mrb[0].mxu0
        %v1860 = vadd.f32 0.0, %v1859
        %v1861 = vpop.f32.mrb[0].mxu0
        %v1862 = vpop.f32.mrb[0].mxu0
        %1863 = vdwg.mxu0
        %1864 = vmatprep.subr.bf16.mxu0 %v1809
        %1865 = vmatpush1.bf16.msra.mxu0 %v1806
        %1866 = vmatprep.subr.bf16.mxu0 0
        %1867 = vmatpush1.bf16.msra.mxu0 0
        %1868 = vmatprep.subr.bf16.mxu0 0
        %1869 = vmatpush1.bf16.msra.mxu0 0
        %1870 = vmatprep.subr.bf16.mxu0 0
        %1871 = vmatpush1.bf16.msra.mxu0 0
        %1872 = vmatprep.subr.bf16.mxu0 0
        %1873 = vmatpush1.bf16.msra.mxu0 0
        %1874 = vmatprep.subr.bf16.mxu0 0
        %1875 = vmatpush1.bf16.msra.mxu0 0
        %1876 = vmatprep.subr.bf16.mxu0 0
        %1877 = vmatpush1.bf16.msra.mxu0 0
        %1878 = vmatprep.subr.bf16.mxu0 0
        %1879 = vmatpush1.bf16.msra.mxu0 0
        %1880 = vmatprep.subr.bf16.mxu0 0
        %1881 = vmatpush1.bf16.msra.mxu0 0
        %1882 = vmatprep.subr.bf16.mxu0 0
        %1883 = vmatpush1.bf16.msra.mxu0 0
        %1884 = vmatprep.subr.bf16.mxu0 0
        %1885 = vmatpush1.bf16.msra.mxu0 0
        %1886 = vmatprep.subr.bf16.mxu0 0
        %1887 = vmatpush1.bf16.msra.mxu0 0
        %1888 = vmatprep.subr.bf16.mxu0 0
        %1889 = vmatpush1.bf16.msra.mxu0 0
        %1890 = vmatprep.subr.bf16.mxu0 0
        %1891 = vmatpush1.bf16.msra.mxu0 0
        %1892 = vmatprep.subr.bf16.mxu0 0
        %1893 = vmatpush1.bf16.msra.mxu0 0
        %1894 = vmatprep.subr.bf16.mxu0 0
        %1895 = vmatpush1.bf16.msra.mxu0 0
        %1896 = vmatprep.mubr.bf16.mxu0 0
        %1897 = vmatmul.mubr.bf16.gmra.mrb[0].mxu0 %v1797
        %v1898 = vpop.f32.mrb[0].mxu0
        %v1899 = vadd.f32 0.0, %v1898
        %v1900 = vpop.f32.mrb[0].mxu0
        %v1901 = vadd.f32 0.0, %v1900
        %v1902 = vpop.f32.mrb[0].mxu0
        %v1903 = vpop.f32.mrb[0].mxu0
        %1904 = vdwg.mxu0
        %1905 = vmatprep.subr.bf16.mxu0 %v1815
        %1906 = vmatpush1.bf16.msra.mxu0 %v1812
        %1907 = vmatprep.subr.bf16.mxu0 0
        %1908 = vmatpush1.bf16.msra.mxu0 0
        %1909 = vmatprep.subr.bf16.mxu0 0
        %1910 = vmatpush1.bf16.msra.mxu0 0
        %1911 = vmatprep.subr.bf16.mxu0 0
        %1912 = vmatpush1.bf16.msra.mxu0 0
        %1913 = vmatprep.subr.bf16.mxu0 0
        %1914 = vmatpush1.bf16.msra.mxu0 0
        %1915 = vmatprep.subr.bf16.mxu0 0
        %1916 = vmatpush1.bf16.msra.mxu0 0
        %1917 = vmatprep.subr.bf16.mxu0 0
        %1918 = vmatpush1.bf16.msra.mxu0 0
        %1919 = vmatprep.subr.bf16.mxu0 0
        %1920 = vmatpush1.bf16.msra.mxu0 0
        %1921 = vmatprep.subr.bf16.mxu0 0
        %1922 = vmatpush1.bf16.msra.mxu0 0
        %1923 = vmatprep.subr.bf16.mxu0 0
        %1924 = vmatpush1.bf16.msra.mxu0 0
        %1925 = vmatprep.subr.bf16.mxu0 0
        %1926 = vmatpush1.bf16.msra.mxu0 0
        %1927 = vmatprep.subr.bf16.mxu0 0
        %1928 = vmatpush1.bf16.msra.mxu0 0
        %1929 = vmatprep.subr.bf16.mxu0 0
        %1930 = vmatpush1.bf16.msra.mxu0 0
        %1931 = vmatprep.subr.bf16.mxu0 0
        %1932 = vmatpush1.bf16.msra.mxu0 0
        %1933 = vmatprep.subr.bf16.mxu0 0
        %1934 = vmatpush1.bf16.msra.mxu0 0
        %1935 = vmatprep.subr.bf16.mxu0 0
        %1936 = vmatpush1.bf16.msra.mxu0 0
        %1937 = vmatprep.mubr.bf16.mxu0 0
        %1938 = vmatmul.mubr.bf16.gmra.mrb[0].mxu0 %v1797
        %v1939 = vpop.f32.mrb[0].mxu0
        %v1940 = vadd.f32 0.0, %v1939
        %v1941 = vpop.f32.mrb[0].mxu0
        %v1942 = vadd.f32 0.0, %v1941
        %v1943 = vpop.f32.mrb[0].mxu0
        %v1944 = vpop.f32.mrb[0].mxu0
        %1945 = vdwg.mxu0
        %1946 = vmatprep.subr.bf16.mxu0 %v1821
        %1947 = vmatpush1.bf16.msra.mxu0 %v1818
        %1948 = vmatprep.subr.bf16.mxu0 0
        %1949 = vmatpush1.bf16.msra.mxu0 0
        %1950 = vmatprep.subr.bf16.mxu0 0
        %1951 = vmatpush1.bf16.msra.mxu0 0
        %1952 = vmatprep.subr.bf16.mxu0 0
        %1953 = vmatpush1.bf16.msra.mxu0 0
        %1954 = vmatprep.subr.bf16.mxu0 0
        %1955 = vmatpush1.bf16.msra.mxu0 0
        %1956 = vmatprep.subr.bf16.mxu0 0
        %1957 = vmatpush1.bf16.msra.mxu0 0
        %1958 = vmatprep.subr.bf16.mxu0 0
        %1959 = vmatpush1.bf16.msra.mxu0 0
        %1960 = vmatprep.subr.bf16.mxu0 0
        %1961 = vmatpush1.bf16.msra.mxu0 0
        %1962 = vmatprep.subr.bf16.mxu0 0
        %1963 = vmatpush1.bf16.msra.mxu0 0
        %1964 = vmatprep.subr.bf16.mxu0 0
        %1965 = vmatpush1.bf16.msra.mxu0 0
        %1966 = vmatprep.subr.bf16.mxu0 0
        %1967 = vmatpush1.bf16.msra.mxu0 0
        %1968 = vmatprep.subr.bf16.mxu0 0
        %1969 = vmatpush1.bf16.msra.mxu0 0
        %1970 = vmatprep.subr.bf16.mxu0 0
        %1971 = vmatpush1.bf16.msra.mxu0 0
        %1972 = vmatprep.subr.bf16.mxu0 0
        %1973 = vmatpush1.bf16.msra.mxu0 0
        %1974 = vmatprep.subr.bf16.mxu0 0
        %1975 = vmatpush1.bf16.msra.mxu0 0
        %1976 = vmatprep.subr.bf16.mxu0 0
        %1977 = vmatpush1.bf16.msra.mxu0 0
        %1978 = vmatprep.mubr.bf16.mxu0 0
        %1979 = vmatmul.mubr.bf16.gmra.mrb[0].mxu0 %v1797
        %v1980 = vpop.f32.mrb[0].mxu0
        %v1981 = vadd.f32 0.0, %v1980
        %v1982 = vpop.f32.mrb[0].mxu0
        %v1983 = vadd.f32 0.0, %v1982
        %v1984 = vpop.f32.mrb[0].mxu0
        %v1985 = vpop.f32.mrb[0].mxu0
        %1986 = vdwg.mxu0
        %v1987 = vadd.f32 %v1749, %v1858
        %v1988 = vadd.f32 %v1750, %v1860
        %v1989 = vadd.f32 %v1751, %v1899
        %v1990 = vadd.f32 %v1752, %v1901
        %v1991 = vadd.f32 %v1753, %v1940
        %v1992 = vadd.f32 %v1754, %v1942
        %v1993 = vadd.f32 %v1755, %v1981
        %v1994 = vadd.f32 %v1756, %v1983
        %s1995 = scalar_lea.vmem %s264, 14 [#allocation2]
        %v1996 = vld [vmem:[%s1995] sm:$0xff]
        %v1997 = vld [vmem:[%s1995 + $0x8] sm:$0xff]
        %v2000 = vcombine.high %v1996, %v1996
        %v2002 = vunpack.c.l.s4 1983009808
        %v2003 = vunpack.c.0.s8 %v2002
        %v2004 = vlaneseq
        %v2005 = vshrl.u32 %v2004, 7
        %v2006 = vsub.s32 %v2003, %v2005
        %v2007 = vrot.slane %v1996, %v2006
        %v2009 = vunpack.c.l.s4 1983009808
        %v2010 = vunpack.c.0.s8 %v2009
        %v2011 = vlaneseq
        %v2012 = vshrl.u32 %v2011, 7
        %v2013 = vsub.s32 %v2010, %v2012
        %v2014 = vrot.slane %v2000, %v2013
        %v2015 = vcombine.high %v2007, %v2007
        %v2016 = vcombine.high %v2014, %v2014
        %v2017 = vcombine.high %v1997, %v1997
        %v2019 = vunpack.c.l.s4 1983009808
        %v2020 = vunpack.c.0.s8 %v2019
        %v2021 = vlaneseq
        %v2022 = vshrl.u32 %v2021, 7
        %v2023 = vsub.s32 %v2020, %v2022
        %v2024 = vrot.slane %v1997, %v2023
        %v2026 = vunpack.c.l.s4 1983009808
        %v2027 = vunpack.c.0.s8 %v2026
        %v2028 = vlaneseq
        %v2029 = vshrl.u32 %v2028, 7
        %v2030 = vsub.s32 %v2027, %v2029
        %v2031 = vrot.slane %v2017, %v2030
        %v2032 = vcombine.high %v2024, %v2024
        %v2033 = vcombine.high %v2031, %v2031
        %v2035 = vsel %vm385, %v338, 0
        %v2038 = vsel %vm389, %v2007, 0
        %v2041 = vsel %vm389, %v2015, 0
        %v2044 = vsel %vm389, %v2014, 0
        %v2047 = vsel %vm389, %v2016, 0
        %v2050 = vsel %vm389, %v2024, 0
        %v2053 = vsel %vm389, %v2032, 0
        %v2056 = vsel %vm389, %v2031, 0
        %v2059 = vsel %vm389, %v2033, 0
        %2061 = vmatprep.subr.bf16.mxu0 %v2041
        %2062 = vmatpush1.bf16.msra.mxu0 %v2038
        %2063 = vmatprep.subr.bf16.mxu0 0
        %2064 = vmatpush1.bf16.msra.mxu0 0
        %2065 = vmatprep.subr.bf16.mxu0 0
        %2066 = vmatpush1.bf16.msra.mxu0 0
        %2067 = vmatprep.subr.bf16.mxu0 0
        %2068 = vmatpush1.bf16.msra.mxu0 0
        %2069 = vmatprep.subr.bf16.mxu0 0
        %2070 = vmatpush1.bf16.msra.mxu0 0
        %2071 = vmatprep.subr.bf16.mxu0 0
        %2072 = vmatpush1.bf16.msra.mxu0 0
        %2073 = vmatprep.subr.bf16.mxu0 0
        %2074 = vmatpush1.bf16.msra.mxu0 0
        %2075 = vmatprep.subr.bf16.mxu0 0
        %2076 = vmatpush1.bf16.msra.mxu0 0
        %2077 = vmatprep.subr.bf16.mxu0 0
        %2078 = vmatpush1.bf16.msra.mxu0 0
        %2079 = vmatprep.subr.bf16.mxu0 0
        %2080 = vmatpush1.bf16.msra.mxu0 0
        %2081 = vmatprep.subr.bf16.mxu0 0
        %2082 = vmatpush1.bf16.msra.mxu0 0
        %2083 = vmatprep.subr.bf16.mxu0 0
        %2084 = vmatpush1.bf16.msra.mxu0 0
        %2085 = vmatprep.subr.bf16.mxu0 0
        %2086 = vmatpush1.bf16.msra.mxu0 0
        %2087 = vmatprep.subr.bf16.mxu0 0
        %2088 = vmatpush1.bf16.msra.mxu0 0
        %2089 = vmatprep.subr.bf16.mxu0 0
        %2090 = vmatpush1.bf16.msra.mxu0 0
        %2091 = vmatprep.subr.bf16.mxu0 0
        %2092 = vmatpush1.bf16.msra.mxu0 0
        %2093 = vmatprep.mubr.bf16.mxu0 0
        %2094 = vmatmul.mubr.bf16.gmra.mrb[0].mxu0 %v2035
        %v2095 = vpop.f32.mrb[0].mxu0
        %v2096 = vadd.f32 0.0, %v2095
        %v2097 = vpop.f32.mrb[0].mxu0
        %v2098 = vadd.f32 0.0, %v2097
        %v2099 = vpop.f32.mrb[0].mxu0
        %v2100 = vpop.f32.mrb[0].mxu0
        %2101 = vdwg.mxu0
        %2102 = vmatprep.subr.bf16.mxu0 %v2047
        %2103 = vmatpush1.bf16.msra.mxu0 %v2044
        %2104 = vmatprep.subr.bf16.mxu0 0
        %2105 = vmatpush1.bf16.msra.mxu0 0
        %2106 = vmatprep.subr.bf16.mxu0 0
        %2107 = vmatpush1.bf16.msra.mxu0 0
        %2108 = vmatprep.subr.bf16.mxu0 0
        %2109 = vmatpush1.bf16.msra.mxu0 0
        %2110 = vmatprep.subr.bf16.mxu0 0
        %2111 = vmatpush1.bf16.msra.mxu0 0
        %2112 = vmatprep.subr.bf16.mxu0 0
        %2113 = vmatpush1.bf16.msra.mxu0 0
        %2114 = vmatprep.subr.bf16.mxu0 0
        %2115 = vmatpush1.bf16.msra.mxu0 0
        %2116 = vmatprep.subr.bf16.mxu0 0
        %2117 = vmatpush1.bf16.msra.mxu0 0
        %2118 = vmatprep.subr.bf16.mxu0 0
        %2119 = vmatpush1.bf16.msra.mxu0 0
        %2120 = vmatprep.subr.bf16.mxu0 0
        %2121 = vmatpush1.bf16.msra.mxu0 0
        %2122 = vmatprep.subr.bf16.mxu0 0
        %2123 = vmatpush1.bf16.msra.mxu0 0
        %2124 = vmatprep.subr.bf16.mxu0 0
        %2125 = vmatpush1.bf16.msra.mxu0 0
        %2126 = vmatprep.subr.bf16.mxu0 0
        %2127 = vmatpush1.bf16.msra.mxu0 0
        %2128 = vmatprep.subr.bf16.mxu0 0
        %2129 = vmatpush1.bf16.msra.mxu0 0
        %2130 = vmatprep.subr.bf16.mxu0 0
        %2131 = vmatpush1.bf16.msra.mxu0 0
        %2132 = vmatprep.subr.bf16.mxu0 0
        %2133 = vmatpush1.bf16.msra.mxu0 0
        %2134 = vmatprep.mubr.bf16.mxu0 0
        %2135 = vmatmul.mubr.bf16.gmra.mrb[0].mxu0 %v2035
        %v2136 = vpop.f32.mrb[0].mxu0
        %v2137 = vadd.f32 0.0, %v2136
        %v2138 = vpop.f32.mrb[0].mxu0
        %v2139 = vadd.f32 0.0, %v2138
        %v2140 = vpop.f32.mrb[0].mxu0
        %v2141 = vpop.f32.mrb[0].mxu0
        %2142 = vdwg.mxu0
        %2143 = vmatprep.subr.bf16.mxu0 %v2053
        %2144 = vmatpush1.bf16.msra.mxu0 %v2050
        %2145 = vmatprep.subr.bf16.mxu0 0
        %2146 = vmatpush1.bf16.msra.mxu0 0
        %2147 = vmatprep.subr.bf16.mxu0 0
        %2148 = vmatpush1.bf16.msra.mxu0 0
        %2149 = vmatprep.subr.bf16.mxu0 0
        %2150 = vmatpush1.bf16.msra.mxu0 0
        %2151 = vmatprep.subr.bf16.mxu0 0
        %2152 = vmatpush1.bf16.msra.mxu0 0
        %2153 = vmatprep.subr.bf16.mxu0 0
        %2154 = vmatpush1.bf16.msra.mxu0 0
        %2155 = vmatprep.subr.bf16.mxu0 0
        %2156 = vmatpush1.bf16.msra.mxu0 0
        %2157 = vmatprep.subr.bf16.mxu0 0
        %2158 = vmatpush1.bf16.msra.mxu0 0
        %2159 = vmatprep.subr.bf16.mxu0 0
        %2160 = vmatpush1.bf16.msra.mxu0 0
        %2161 = vmatprep.subr.bf16.mxu0 0
        %2162 = vmatpush1.bf16.msra.mxu0 0
        %2163 = vmatprep.subr.bf16.mxu0 0
        %2164 = vmatpush1.bf16.msra.mxu0 0
        %2165 = vmatprep.subr.bf16.mxu0 0
        %2166 = vmatpush1.bf16.msra.mxu0 0
        %2167 = vmatprep.subr.bf16.mxu0 0
        %2168 = vmatpush1.bf16.msra.mxu0 0
        %2169 = vmatprep.subr.bf16.mxu0 0
        %2170 = vmatpush1.bf16.msra.mxu0 0
        %2171 = vmatprep.subr.bf16.mxu0 0
        %2172 = vmatpush1.bf16.msra.mxu0 0
        %2173 = vmatprep.subr.bf16.mxu0 0
        %2174 = vmatpush1.bf16.msra.mxu0 0
        %2175 = vmatprep.mubr.bf16.mxu0 0
        %2176 = vmatmul.mubr.bf16.gmra.mrb[0].mxu0 %v2035
        %v2177 = vpop.f32.mrb[0].mxu0
        %v2178 = vadd.f32 0.0, %v2177
        %v2179 = vpop.f32.mrb[0].mxu0
        %v2180 = vadd.f32 0.0, %v2179
        %v2181 = vpop.f32.mrb[0].mxu0
        %v2182 = vpop.f32.mrb[0].mxu0
        %2183 = vdwg.mxu0
        %2184 = vmatprep.subr.bf16.mxu0 %v2059
        %2185 = vmatpush1.bf16.msra.mxu0 %v2056
        %2186 = vmatprep.subr.bf16.mxu0 0
        %2187 = vmatpush1.bf16.msra.mxu0 0
        %2188 = vmatprep.subr.bf16.mxu0 0
        %2189 = vmatpush1.bf16.msra.mxu0 0
        %2190 = vmatprep.subr.bf16.mxu0 0
        %2191 = vmatpush1.bf16.msra.mxu0 0
        %2192 = vmatprep.subr.bf16.mxu0 0
        %2193 = vmatpush1.bf16.msra.mxu0 0
        %2194 = vmatprep.subr.bf16.mxu0 0
        %2195 = vmatpush1.bf16.msra.mxu0 0
        %2196 = vmatprep.subr.bf16.mxu0 0
        %2197 = vmatpush1.bf16.msra.mxu0 0
        %2198 = vmatprep.subr.bf16.mxu0 0
        %2199 = vmatpush1.bf16.msra.mxu0 0
        %2200 = vmatprep.subr.bf16.mxu0 0
        %2201 = vmatpush1.bf16.msra.mxu0 0
        %2202 = vmatprep.subr.bf16.mxu0 0
        %2203 = vmatpush1.bf16.msra.mxu0 0
        %2204 = vmatprep.subr.bf16.mxu0 0
        %2205 = vmatpush1.bf16.msra.mxu0 0
        %2206 = vmatprep.subr.bf16.mxu0 0
        %2207 = vmatpush1.bf16.msra.mxu0 0
        %2208 = vmatprep.subr.bf16.mxu0 0
        %2209 = vmatpush1.bf16.msra.mxu0 0
        %2210 = vmatprep.subr.bf16.mxu0 0
        %2211 = vmatpush1.bf16.msra.mxu0 0
        %2212 = vmatprep.subr.bf16.mxu0 0
        %2213 = vmatpush1.bf16.msra.mxu0 0
        %2214 = vmatprep.subr.bf16.mxu0 0
        %2215 = vmatpush1.bf16.msra.mxu0 0
        %2216 = vmatprep.mubr.bf16.mxu0 0
        %2217 = vmatmul.mubr.bf16.gmra.mrb[0].mxu0 %v2035
        %v2218 = vpop.f32.mrb[0].mxu0
        %v2219 = vadd.f32 0.0, %v2218
        %v2220 = vpop.f32.mrb[0].mxu0
        %v2221 = vadd.f32 0.0, %v2220
        %v2222 = vpop.f32.mrb[0].mxu0
        %v2223 = vpop.f32.mrb[0].mxu0
        %2224 = vdwg.mxu0
        %v2225 = vadd.f32 %v1987, %v2096
        %v2226 = vadd.f32 %v1988, %v2098
        %v2227 = vadd.f32 %v1989, %v2137
        %v2228 = vadd.f32 %v1990, %v2139
        %v2229 = vadd.f32 %v1991, %v2178
        %v2230 = vadd.f32 %v1992, %v2180
        %v2231 = vadd.f32 %v1993, %v2219
        %v2232 = vadd.f32 %v1994, %v2221
        %s2233 = scalar_lea.vmem %s264, 16 [#allocation2]
        %v2234 = vld [vmem:[%s2233] sm:$0xff]
        %v2235 = vld [vmem:[%s2233 + $0x8] sm:$0xff]
        %v2238 = vcombine.high %v2234, %v2234
        %v2240 = vunpack.c.l.s4 1983009808
        %v2241 = vunpack.c.0.s8 %v2240
        %v2242 = vlaneseq
        %v2243 = vshrl.u32 %v2242, 7
        %v2244 = vsub.s32 %v2241, %v2243
        %v2245 = vrot.slane %v2234, %v2244
        %v2247 = vunpack.c.l.s4 1983009808
        %v2248 = vunpack.c.0.s8 %v2247
        %v2249 = vlaneseq
        %v2250 = vshrl.u32 %v2249, 7
        %v2251 = vsub.s32 %v2248, %v2250
        %v2252 = vrot.slane %v2238, %v2251
        %v2253 = vcombine.high %v2245, %v2245
        %v2254 = vcombine.high %v2252, %v2252
        %v2255 = vcombine.high %v2235, %v2235
        %v2257 = vunpack.c.l.s4 1983009808
        %v2258 = vunpack.c.0.s8 %v2257
        %v2259 = vlaneseq
        %v2260 = vshrl.u32 %v2259, 7
        %v2261 = vsub.s32 %v2258, %v2260
        %v2262 = vrot.slane %v2235, %v2261
        %v2264 = vunpack.c.l.s4 1983009808
        %v2265 = vunpack.c.0.s8 %v2264
        %v2266 = vlaneseq
        %v2267 = vshrl.u32 %v2266, 7
        %v2268 = vsub.s32 %v2265, %v2267
        %v2269 = vrot.slane %v2255, %v2268
        %v2270 = vcombine.high %v2262, %v2262
        %v2271 = vcombine.high %v2269, %v2269
        %v2273 = vsel %vm385, %v340, 0
        %v2276 = vsel %vm389, %v2245, 0
        %v2279 = vsel %vm389, %v2253, 0
        %v2282 = vsel %vm389, %v2252, 0
        %v2285 = vsel %vm389, %v2254, 0
        %v2288 = vsel %vm389, %v2262, 0
        %v2291 = vsel %vm389, %v2270, 0
        %v2294 = vsel %vm389, %v2269, 0
        %v2297 = vsel %vm389, %v2271, 0
        %2299 = vmatprep.subr.bf16.mxu0 %v2279
        %2300 = vmatpush1.bf16.msra.mxu0 %v2276
        %2301 = vmatprep.subr.bf16.mxu0 0
        %2302 = vmatpush1.bf16.msra.mxu0 0
        %2303 = vmatprep.subr.bf16.mxu0 0
        %2304 = vmatpush1.bf16.msra.mxu0 0
        %2305 = vmatprep.subr.bf16.mxu0 0
        %2306 = vmatpush1.bf16.msra.mxu0 0
        %2307 = vmatprep.subr.bf16.mxu0 0
        %2308 = vmatpush1.bf16.msra.mxu0 0
        %2309 = vmatprep.subr.bf16.mxu0 0
        %2310 = vmatpush1.bf16.msra.mxu0 0
        %2311 = vmatprep.subr.bf16.mxu0 0
        %2312 = vmatpush1.bf16.msra.mxu0 0
        %2313 = vmatprep.subr.bf16.mxu0 0
        %2314 = vmatpush1.bf16.msra.mxu0 0
        %2315 = vmatprep.subr.bf16.mxu0 0
        %2316 = vmatpush1.bf16.msra.mxu0 0
        %2317 = vmatprep.subr.bf16.mxu0 0
        %2318 = vmatpush1.bf16.msra.mxu0 0
        %2319 = vmatprep.subr.bf16.mxu0 0
        %2320 = vmatpush1.bf16.msra.mxu0 0
        %2321 = vmatprep.subr.bf16.mxu0 0
        %2322 = vmatpush1.bf16.msra.mxu0 0
        %2323 = vmatprep.subr.bf16.mxu0 0
        %2324 = vmatpush1.bf16.msra.mxu0 0
        %2325 = vmatprep.subr.bf16.mxu0 0
        %2326 = vmatpush1.bf16.msra.mxu0 0
        %2327 = vmatprep.subr.bf16.mxu0 0
        %2328 = vmatpush1.bf16.msra.mxu0 0
        %2329 = vmatprep.subr.bf16.mxu0 0
        %2330 = vmatpush1.bf16.msra.mxu0 0
        %2331 = vmatprep.mubr.bf16.mxu0 0
        %2332 = vmatmul.mubr.bf16.gmra.mrb[0].mxu0 %v2273
        %v2333 = vpop.f32.mrb[0].mxu0
        %v2334 = vadd.f32 0.0, %v2333
        %v2335 = vpop.f32.mrb[0].mxu0
        %v2336 = vadd.f32 0.0, %v2335
        %v2337 = vpop.f32.mrb[0].mxu0
        %v2338 = vpop.f32.mrb[0].mxu0
        %2339 = vdwg.mxu0
        %2340 = vmatprep.subr.bf16.mxu0 %v2285
        %2341 = vmatpush1.bf16.msra.mxu0 %v2282
        %2342 = vmatprep.subr.bf16.mxu0 0
        %2343 = vmatpush1.bf16.msra.mxu0 0
        %2344 = vmatprep.subr.bf16.mxu0 0
        %2345 = vmatpush1.bf16.msra.mxu0 0
        %2346 = vmatprep.subr.bf16.mxu0 0
        %2347 = vmatpush1.bf16.msra.mxu0 0
        %2348 = vmatprep.subr.bf16.mxu0 0
        %2349 = vmatpush1.bf16.msra.mxu0 0
        %2350 = vmatprep.subr.bf16.mxu0 0
        %2351 = vmatpush1.bf16.msra.mxu0 0
        %2352 = vmatprep.subr.bf16.mxu0 0
        %2353 = vmatpush1.bf16.msra.mxu0 0
        %2354 = vmatprep.subr.bf16.mxu0 0
        %2355 = vmatpush1.bf16.msra.mxu0 0
        %2356 = vmatprep.subr.bf16.mxu0 0
        %2357 = vmatpush1.bf16.msra.mxu0 0
        %2358 = vmatprep.subr.bf16.mxu0 0
        %2359 = vmatpush1.bf16.msra.mxu0 0
        %2360 = vmatprep.subr.bf16.mxu0 0
        %2361 = vmatpush1.bf16.msra.mxu0 0
        %2362 = vmatprep.subr.bf16.mxu0 0
        %2363 = vmatpush1.bf16.msra.mxu0 0
        %2364 = vmatprep.subr.bf16.mxu0 0
        %2365 = vmatpush1.bf16.msra.mxu0 0
        %2366 = vmatprep.subr.bf16.mxu0 0
        %2367 = vmatpush1.bf16.msra.mxu0 0
        %2368 = vmatprep.subr.bf16.mxu0 0
        %2369 = vmatpush1.bf16.msra.mxu0 0
        %2370 = vmatprep.subr.bf16.mxu0 0
        %2371 = vmatpush1.bf16.msra.mxu0 0
        %2372 = vmatprep.mubr.bf16.mxu0 0
        %2373 = vmatmul.mubr.bf16.gmra.mrb[0].mxu0 %v2273
        %v2374 = vpop.f32.mrb[0].mxu0
        %v2375 = vadd.f32 0.0, %v2374
        %v2376 = vpop.f32.mrb[0].mxu0
        %v2377 = vadd.f32 0.0, %v2376
        %v2378 = vpop.f32.mrb[0].mxu0
        %v2379 = vpop.f32.mrb[0].mxu0
        %2380 = vdwg.mxu0
        %2381 = vmatprep.subr.bf16.mxu0 %v2291
        %2382 = vmatpush1.bf16.msra.mxu0 %v2288
        %2383 = vmatprep.subr.bf16.mxu0 0
        %2384 = vmatpush1.bf16.msra.mxu0 0
        %2385 = vmatprep.subr.bf16.mxu0 0
        %2386 = vmatpush1.bf16.msra.mxu0 0
        %2387 = vmatprep.subr.bf16.mxu0 0
        %2388 = vmatpush1.bf16.msra.mxu0 0
        %2389 = vmatprep.subr.bf16.mxu0 0
        %2390 = vmatpush1.bf16.msra.mxu0 0
        %2391 = vmatprep.subr.bf16.mxu0 0
        %2392 = vmatpush1.bf16.msra.mxu0 0
        %2393 = vmatprep.subr.bf16.mxu0 0
        %2394 = vmatpush1.bf16.msra.mxu0 0
        %2395 = vmatprep.subr.bf16.mxu0 0
        %2396 = vmatpush1.bf16.msra.mxu0 0
        %2397 = vmatprep.subr.bf16.mxu0 0
        %2398 = vmatpush1.bf16.msra.mxu0 0
        %2399 = vmatprep.subr.bf16.mxu0 0
        %2400 = vmatpush1.bf16.msra.mxu0 0
        %2401 = vmatprep.subr.bf16.mxu0 0
        %2402 = vmatpush1.bf16.msra.mxu0 0
        %2403 = vmatprep.subr.bf16.mxu0 0
        %2404 = vmatpush1.bf16.msra.mxu0 0
        %2405 = vmatprep.subr.bf16.mxu0 0
        %2406 = vmatpush1.bf16.msra.mxu0 0
        %2407 = vmatprep.subr.bf16.mxu0 0
        %2408 = vmatpush1.bf16.msra.mxu0 0
        %2409 = vmatprep.subr.bf16.mxu0 0
        %2410 = vmatpush1.bf16.msra.mxu0 0
        %2411 = vmatprep.subr.bf16.mxu0 0
        %2412 = vmatpush1.bf16.msra.mxu0 0
        %2413 = vmatprep.mubr.bf16.mxu0 0
        %2414 = vmatmul.mubr.bf16.gmra.mrb[0].mxu0 %v2273
        %v2415 = vpop.f32.mrb[0].mxu0
        %v2416 = vadd.f32 0.0, %v2415
        %v2417 = vpop.f32.mrb[0].mxu0
        %v2418 = vadd.f32 0.0, %v2417
        %v2419 = vpop.f32.mrb[0].mxu0
        %v2420 = vpop.f32.mrb[0].mxu0
        %2421 = vdwg.mxu0
        %2422 = vmatprep.subr.bf16.mxu0 %v2297
        %2423 = vmatpush1.bf16.msra.mxu0 %v2294
        %2424 = vmatprep.subr.bf16.mxu0 0
        %2425 = vmatpush1.bf16.msra.mxu0 0
        %2426 = vmatprep.subr.bf16.mxu0 0
        %2427 = vmatpush1.bf16.msra.mxu0 0
        %2428 = vmatprep.subr.bf16.mxu0 0
        %2429 = vmatpush1.bf16.msra.mxu0 0
        %2430 = vmatprep.subr.bf16.mxu0 0
        %2431 = vmatpush1.bf16.msra.mxu0 0
        %2432 = vmatprep.subr.bf16.mxu0 0
        %2433 = vmatpush1.bf16.msra.mxu0 0
        %2434 = vmatprep.subr.bf16.mxu0 0
        %2435 = vmatpush1.bf16.msra.mxu0 0
        %2436 = vmatprep.subr.bf16.mxu0 0
        %2437 = vmatpush1.bf16.msra.mxu0 0
        %2438 = vmatprep.subr.bf16.mxu0 0
        %2439 = vmatpush1.bf16.msra.mxu0 0
        %2440 = vmatprep.subr.bf16.mxu0 0
        %2441 = vmatpush1.bf16.msra.mxu0 0
        %2442 = vmatprep.subr.bf16.mxu0 0
        %2443 = vmatpush1.bf16.msra.mxu0 0
        %2444 = vmatprep.subr.bf16.mxu0 0
        %2445 = vmatpush1.bf16.msra.mxu0 0
        %2446 = vmatprep.subr.bf16.mxu0 0
        %2447 = vmatpush1.bf16.msra.mxu0 0
        %2448 = vmatprep.subr.bf16.mxu0 0
        %2449 = vmatpush1.bf16.msra.mxu0 0
        %2450 = vmatprep.subr.bf16.mxu0 0
        %2451 = vmatpush1.bf16.msra.mxu0 0
        %2452 = vmatprep.subr.bf16.mxu0 0
        %2453 = vmatpush1.bf16.msra.mxu0 0
        %2454 = vmatprep.mubr.bf16.mxu0 0
        %2455 = vmatmul.mubr.bf16.gmra.mrb[0].mxu0 %v2273
        %v2456 = vpop.f32.mrb[0].mxu0
        %v2457 = vadd.f32 0.0, %v2456
        %v2458 = vpop.f32.mrb[0].mxu0
        %v2459 = vadd.f32 0.0, %v2458
        %v2460 = vpop.f32.mrb[0].mxu0
        %v2461 = vpop.f32.mrb[0].mxu0
        %2462 = vdwg.mxu0
        %v2463 = vadd.f32 %v2225, %v2334
        %v2464 = vadd.f32 %v2226, %v2336
        %v2465 = vadd.f32 %v2227, %v2375
        %v2466 = vadd.f32 %v2228, %v2377
        %v2467 = vadd.f32 %v2229, %v2416
        %v2468 = vadd.f32 %v2230, %v2418
        %v2469 = vadd.f32 %v2231, %v2457
        %v2470 = vadd.f32 %v2232, %v2459
        %2472 = vset.pattern.permute.xlu0 0
        %2473 = vperm.xlu0 %2472, %v341
        %v2474 = vpop.permute.xlu0 %2473
        %v2476 = vadd.f32 %v2463, %v2474
        %v2477 = vadd.f32 %v2464, %v2474
        %v2478 = vadd.f32 %v2465, %v2474
        %v2479 = vadd.f32 %v2466, %v2474
        %v2480 = vadd.f32 %v2467, %v2474
        %v2481 = vadd.f32 %v2468, %v2474
        %v2482 = vadd.f32 %v2469, %v2474
        %v2483 = vadd.f32 %v2470, %v2474
        %v2484 = vmin.f32 %v2476, 20.0
        %v2485 = vmin.f32 %v2477, 20.0
        %v2486 = vmin.f32 %v2478, 20.0
        %v2487 = vmin.f32 %v2479, 20.0
        %v2488 = vmin.f32 %v2480, 20.0
        %v2489 = vmin.f32 %v2481, 20.0
        %v2490 = vmin.f32 %v2482, 20.0
        %v2491 = vmin.f32 %v2483, 20.0
        %v2492 = vmul.f32 %v2484, 1.442695
        %v2493 = vpow.pop %v2492
        %v2494 = vmul.f32 %v2485, 1.442695
        %v2495 = vpow.pop %v2494
        %v2496 = vmul.f32 %v2486, 1.442695
        %v2497 = vpow.pop %v2496
        %v2498 = vmul.f32 %v2487, 1.442695
        %v2499 = vpow.pop %v2498
        %v2500 = vmul.f32 %v2488, 1.442695
        %v2501 = vpow.pop %v2500
        %v2502 = vmul.f32 %v2489, 1.442695
        %v2503 = vpow.pop %v2502
        %v2504 = vmul.f32 %v2490, 1.442695
        %v2505 = vpow.pop %v2504
        %v2506 = vmul.f32 %v2491, 1.442695
        %v2507 = vpow.pop %v2506
        %v2508 = vadd.f32 %v2493, 2.0
        %v2509 = vadd.f32 %v2495, 2.0
        %v2510 = vadd.f32 %v2497, 2.0
        %v2511 = vadd.f32 %v2499, 2.0
        %v2512 = vadd.f32 %v2501, 2.0
        %v2513 = vadd.f32 %v2503, 2.0
        %v2514 = vadd.f32 %v2505, 2.0
        %v2515 = vadd.f32 %v2507, 2.0
        %v2516 = vmul.f32 %v2493, %v2508
        %v2517 = vmul.f32 %v2495, %v2509
        %v2518 = vmul.f32 %v2497, %v2510
        %v2519 = vmul.f32 %v2499, %v2511
        %v2520 = vmul.f32 %v2501, %v2512
        %v2521 = vmul.f32 %v2503, %v2513
        %v2522 = vmul.f32 %v2505, %v2514
        %v2523 = vmul.f32 %v2507, %v2515
        %v2524 = vadd.f32 %v2516, 2.0
        %v2525 = vadd.f32 %v2517, 2.0
        %v2526 = vadd.f32 %v2518, 2.0
        %v2527 = vadd.f32 %v2519, 2.0
        %v2528 = vadd.f32 %v2520, 2.0
        %v2529 = vadd.f32 %v2521, 2.0
        %v2530 = vadd.f32 %v2522, 2.0
        %v2531 = vadd.f32 %v2523, 2.0
        %v2532 = vrcp.pop %v2524
        %v2533 = vrcp.pop %v2525
        %v2534 = vrcp.pop %v2526
        %v2535 = vrcp.pop %v2527
        %v2536 = vrcp.pop %v2528
        %v2537 = vrcp.pop %v2529
        %v2538 = vrcp.pop %v2530
        %v2539 = vrcp.pop %v2531
        %v2540 = vmul.f32 %v2516, %v2532
        %v2541 = vmul.f32 %v2517, %v2533
        %v2542 = vmul.f32 %v2518, %v2534
        %v2543 = vmul.f32 %v2519, %v2535
        %v2544 = vmul.f32 %v2520, %v2536
        %v2545 = vmul.f32 %v2521, %v2537
        %v2546 = vmul.f32 %v2522, %v2538
        %v2547 = vmul.f32 %v2523, %v2539
        %vm2548 = vcmp.gt.f32.partialorder %v2476, 20.0
        %vm2549 = vcmp.gt.f32.partialorder %v2477, 20.0
        %vm2550 = vcmp.gt.f32.partialorder %v2478, 20.0
        %vm2551 = vcmp.gt.f32.partialorder %v2479, 20.0
        %vm2552 = vcmp.gt.f32.partialorder %v2480, 20.0
        %vm2553 = vcmp.gt.f32.partialorder %v2481, 20.0
        %vm2554 = vcmp.gt.f32.partialorder %v2482, 20.0
        %vm2555 = vcmp.gt.f32.partialorder %v2483, 20.0
        %v2556 = vmul.f32 %v2476, %v2540
        %v2557 = vmul.f32 %v2477, %v2541
        %v2558 = vmul.f32 %v2478, %v2542
        %v2559 = vmul.f32 %v2479, %v2543
        %v2560 = vmul.f32 %v2480, %v2544
        %v2561 = vmul.f32 %v2481, %v2545
        %v2562 = vmul.f32 %v2482, %v2546
        %v2563 = vmul.f32 %v2483, %v2547
        %v2564 = vsel %vm2548, %v2476, %v2556
        %v2565 = vsel %vm2549, %v2477, %v2557
        %v2566 = vsel %vm2550, %v2478, %v2558
        %v2567 = vsel %vm2551, %v2479, %v2559
        %v2568 = vsel %vm2552, %v2480, %v2560
        %v2569 = vsel %vm2553, %v2481, %v2561
        %v2570 = vsel %vm2554, %v2482, %v2562
        %v2571 = vsel %vm2555, %v2483, %v2563
        %2573 = vset.pattern.permute.xlu0 0
        %2574 = vperm.xlu0 %2573, %v342
        %v2575 = vpop.permute.xlu0 %2574
        %v2577 = vmul.f32 %v2564, %v2575
        %v2578 = vmul.f32 %v2565, %v2575
        %v2579 = vmul.f32 %v2566, %v2575
        %v2580 = vmul.f32 %v2567, %v2575
        %v2581 = vmul.f32 %v2568, %v2575
        %v2582 = vmul.f32 %v2569, %v2575
        %v2583 = vmul.f32 %v2570, %v2575
        %v2584 = vmul.f32 %v2571, %v2575
        %2586 = vset.pattern.permute.xlu0 0
        %2587 = vperm.xlu0 %2586, %v343
        %v2588 = vpop.permute.xlu0 %2587
        %v2590 = vadd.f32 %v2577, %v2588
        %v2591 = vadd.f32 %v2578, %v2588
        %v2592 = vadd.f32 %v2579, %v2588
        %v2593 = vadd.f32 %v2580, %v2588
        %v2594 = vadd.f32 %v2581, %v2588
        %v2595 = vadd.f32 %v2582, %v2588
        %v2596 = vadd.f32 %v2583, %v2588
        %v2597 = vadd.f32 %v2584, %v2588
        %2598 = vst [vmem:[%s306] sm:$0xff] %v2590
        %2599 = vst [vmem:[%s306 + $0x8] sm:$0xff] %v2591
        %2600 = vst [vmem:[%s306 + $0x10] sm:$0xff] %v2592
        %2601 = vst [vmem:[%s306 + $0x18] sm:$0xff] %v2593
        %2602 = vst [vmem:[%s306 + $0x20] sm:$0xff] %v2594
        %2603 = vst [vmem:[%s306 + $0x28] sm:$0xff] %v2595
        %2604 = vst [vmem:[%s306 + $0x30] sm:$0xff] %v2596
        %2605 = vst [vmem:[%s306 + $0x38] sm:$0xff] %v2597
        %v2606 = vld [vmem:[%s2233] sm:$0xff]
        %v2607 = vld [vmem:[%s2233 + $0x8] sm:$0xff]
        %s2608 = scalar_lea.vmem %s264, 18 [#allocation2]
        %v2609 = vld [vmem:[%s2608] sm:$0xff]
        %v2610 = vld [vmem:[%s2608 + $0x8] sm:$0xff]
        %v2613 = vcombine.high %v2609, %v2609
        %v2615 = vunpack.c.l.s4 1983009808
        %v2616 = vunpack.c.0.s8 %v2615
        %v2617 = vlaneseq
        %v2618 = vshrl.u32 %v2617, 7
        %v2619 = vsub.s32 %v2616, %v2618
        %v2620 = vrot.slane %v2609, %v2619
        %v2622 = vunpack.c.l.s4 1983009808
        %v2623 = vunpack.c.0.s8 %v2622
        %v2624 = vlaneseq
        %v2625 = vshrl.u32 %v2624, 7
        %v2626 = vsub.s32 %v2623, %v2625
        %v2627 = vrot.slane %v2613, %v2626
        %v2628 = vcombine.high %v2620, %v2620
        %v2629 = vcombine.high %v2627, %v2627
        %v2630 = vcombine.high %v2610, %v2610
        %v2632 = vunpack.c.l.s4 1983009808
        %v2633 = vunpack.c.0.s8 %v2632
        %v2634 = vlaneseq
        %v2635 = vshrl.u32 %v2634, 7
        %v2636 = vsub.s32 %v2633, %v2635
        %v2637 = vrot.slane %v2610, %v2636
        %v2639 = vunpack.c.l.s4 1983009808
        %v2640 = vunpack.c.0.s8 %v2639
        %v2641 = vlaneseq
        %v2642 = vshrl.u32 %v2641, 7
        %v2643 = vsub.s32 %v2640, %v2642
        %v2644 = vrot.slane %v2630, %v2643
        %v2645 = vcombine.high %v2637, %v2637
        %v2646 = vcombine.high %v2644, %v2644
        %v2648 = vsel %vm389, %v2620, 0
        %v2651 = vsel %vm389, %v2628, 0
        %v2654 = vsel %vm389, %v2627, 0
        %v2657 = vsel %vm389, %v2629, 0
        %v2660 = vsel %vm389, %v2637, 0
        %v2663 = vsel %vm389, %v2645, 0
        %v2666 = vsel %vm389, %v2644, 0
        %v2669 = vsel %vm389, %v2646, 0
        %2671 = vmatprep.subr.bf16.mxu0 %v2651
        %2672 = vmatpush1.bf16.msra.mxu0 %v2648
        %2673 = vmatprep.subr.bf16.mxu0 0
        %2674 = vmatpush1.bf16.msra.mxu0 0
        %2675 = vmatprep.subr.bf16.mxu0 0
        %2676 = vmatpush1.bf16.msra.mxu0 0
        %2677 = vmatprep.subr.bf16.mxu0 0
        %2678 = vmatpush1.bf16.msra.mxu0 0
        %2679 = vmatprep.subr.bf16.mxu0 0
        %2680 = vmatpush1.bf16.msra.mxu0 0
        %2681 = vmatprep.subr.bf16.mxu0 0
        %2682 = vmatpush1.bf16.msra.mxu0 0
        %2683 = vmatprep.subr.bf16.mxu0 0
        %2684 = vmatpush1.bf16.msra.mxu0 0
        %2685 = vmatprep.subr.bf16.mxu0 0
        %2686 = vmatpush1.bf16.msra.mxu0 0
        %2687 = vmatprep.subr.bf16.mxu0 0
        %2688 = vmatpush1.bf16.msra.mxu0 0
        %2689 = vmatprep.subr.bf16.mxu0 0
        %2690 = vmatpush1.bf16.msra.mxu0 0
        %2691 = vmatprep.subr.bf16.mxu0 0
        %2692 = vmatpush1.bf16.msra.mxu0 0
        %2693 = vmatprep.subr.bf16.mxu0 0
        %2694 = vmatpush1.bf16.msra.mxu0 0
        %2695 = vmatprep.subr.bf16.mxu0 0
        %2696 = vmatpush1.bf16.msra.mxu0 0
        %2697 = vmatprep.subr.bf16.mxu0 0
        %2698 = vmatpush1.bf16.msra.mxu0 0
        %2699 = vmatprep.subr.bf16.mxu0 0
        %2700 = vmatpush1.bf16.msra.mxu0 0
        %2701 = vmatprep.subr.bf16.mxu0 0
        %2702 = vmatpush1.bf16.msra.mxu0 0
        %2703 = vmatprep.mubr.bf16.mxu0 0
        %2704 = vmatmul.mubr.bf16.gmra.mrb[0].mxu0 %v387
        %v2705 = vpop.f32.mrb[0].mxu0
        %v2706 = vadd.f32 0.0, %v2705
        %v2707 = vpop.f32.mrb[0].mxu0
        %v2708 = vadd.f32 0.0, %v2707
        %v2709 = vpop.f32.mrb[0].mxu0
        %v2710 = vpop.f32.mrb[0].mxu0
        %2711 = vdwg.mxu0
        %2712 = vmatprep.subr.bf16.mxu0 %v2657
        %2713 = vmatpush1.bf16.msra.mxu0 %v2654
        %2714 = vmatprep.subr.bf16.mxu0 0
        %2715 = vmatpush1.bf16.msra.mxu0 0
        %2716 = vmatprep.subr.bf16.mxu0 0
        %2717 = vmatpush1.bf16.msra.mxu0 0
        %2718 = vmatprep.subr.bf16.mxu0 0
        %2719 = vmatpush1.bf16.msra.mxu0 0
        %2720 = vmatprep.subr.bf16.mxu0 0
        %2721 = vmatpush1.bf16.msra.mxu0 0
        %2722 = vmatprep.subr.bf16.mxu0 0
        %2723 = vmatpush1.bf16.msra.mxu0 0
        %2724 = vmatprep.subr.bf16.mxu0 0
        %2725 = vmatpush1.bf16.msra.mxu0 0
        %2726 = vmatprep.subr.bf16.mxu0 0
        %2727 = vmatpush1.bf16.msra.mxu0 0
        %2728 = vmatprep.subr.bf16.mxu0 0
        %2729 = vmatpush1.bf16.msra.mxu0 0
        %2730 = vmatprep.subr.bf16.mxu0 0
        %2731 = vmatpush1.bf16.msra.mxu0 0
        %2732 = vmatprep.subr.bf16.mxu0 0
        %2733 = vmatpush1.bf16.msra.mxu0 0
        %2734 = vmatprep.subr.bf16.mxu0 0
        %2735 = vmatpush1.bf16.msra.mxu0 0
        %2736 = vmatprep.subr.bf16.mxu0 0
        %2737 = vmatpush1.bf16.msra.mxu0 0
        %2738 = vmatprep.subr.bf16.mxu0 0
        %2739 = vmatpush1.bf16.msra.mxu0 0
        %2740 = vmatprep.subr.bf16.mxu0 0
        %2741 = vmatpush1.bf16.msra.mxu0 0
        %2742 = vmatprep.subr.bf16.mxu0 0
        %2743 = vmatpush1.bf16.msra.mxu0 0
        %2744 = vmatprep.mubr.bf16.mxu0 0
        %2745 = vmatmul.mubr.bf16.gmra.mrb[0].mxu0 %v387
        %v2746 = vpop.f32.mrb[0].mxu0
        %v2747 = vadd.f32 0.0, %v2746
        %v2748 = vpop.f32.mrb[0].mxu0
        %v2749 = vadd.f32 0.0, %v2748
        %v2750 = vpop.f32.mrb[0].mxu0
        %v2751 = vpop.f32.mrb[0].mxu0
        %2752 = vdwg.mxu0
        %2753 = vmatprep.subr.bf16.mxu0 %v2663
        %2754 = vmatpush1.bf16.msra.mxu0 %v2660
        %2755 = vmatprep.subr.bf16.mxu0 0
        %2756 = vmatpush1.bf16.msra.mxu0 0
        %2757 = vmatprep.subr.bf16.mxu0 0
        %2758 = vmatpush1.bf16.msra.mxu0 0
        %2759 = vmatprep.subr.bf16.mxu0 0
        %2760 = vmatpush1.bf16.msra.mxu0 0
        %2761 = vmatprep.subr.bf16.mxu0 0
        %2762 = vmatpush1.bf16.msra.mxu0 0
        %2763 = vmatprep.subr.bf16.mxu0 0
        %2764 = vmatpush1.bf16.msra.mxu0 0
        %2765 = vmatprep.subr.bf16.mxu0 0
        %2766 = vmatpush1.bf16.msra.mxu0 0
        %2767 = vmatprep.subr.bf16.mxu0 0
        %2768 = vmatpush1.bf16.msra.mxu0 0
        %2769 = vmatprep.subr.bf16.mxu0 0
        %2770 = vmatpush1.bf16.msra.mxu0 0
        %2771 = vmatprep.subr.bf16.mxu0 0
        %2772 = vmatpush1.bf16.msra.mxu0 0
        %2773 = vmatprep.subr.bf16.mxu0 0
        %2774 = vmatpush1.bf16.msra.mxu0 0
        %2775 = vmatprep.subr.bf16.mxu0 0
        %2776 = vmatpush1.bf16.msra.mxu0 0
        %2777 = vmatprep.subr.bf16.mxu0 0
        %2778 = vmatpush1.bf16.msra.mxu0 0
        %2779 = vmatprep.subr.bf16.mxu0 0
        %2780 = vmatpush1.bf16.msra.mxu0 0
        %2781 = vmatprep.subr.bf16.mxu0 0
        %2782 = vmatpush1.bf16.msra.mxu0 0
        %2783 = vmatprep.subr.bf16.mxu0 0
        %2784 = vmatpush1.bf16.msra.mxu0 0
        %2785 = vmatprep.mubr.bf16.mxu0 0
        %2786 = vmatmul.mubr.bf16.gmra.mrb[0].mxu0 %v387
        %v2787 = vpop.f32.mrb[0].mxu0
        %v2788 = vadd.f32 0.0, %v2787
        %v2789 = vpop.f32.mrb[0].mxu0
        %v2790 = vadd.f32 0.0, %v2789
        %v2791 = vpop.f32.mrb[0].mxu0
        %v2792 = vpop.f32.mrb[0].mxu0
        %2793 = vdwg.mxu0
        %2794 = vmatprep.subr.bf16.mxu0 %v2669
        %2795 = vmatpush1.bf16.msra.mxu0 %v2666
        %2796 = vmatprep.subr.bf16.mxu0 0
        %2797 = vmatpush1.bf16.msra.mxu0 0
        %2798 = vmatprep.subr.bf16.mxu0 0
        %2799 = vmatpush1.bf16.msra.mxu0 0
        %2800 = vmatprep.subr.bf16.mxu0 0
        %2801 = vmatpush1.bf16.msra.mxu0 0
        %2802 = vmatprep.subr.bf16.mxu0 0
        %2803 = vmatpush1.bf16.msra.mxu0 0
        %2804 = vmatprep.subr.bf16.mxu0 0
        %2805 = vmatpush1.bf16.msra.mxu0 0
        %2806 = vmatprep.subr.bf16.mxu0 0
        %2807 = vmatpush1.bf16.msra.mxu0 0
        %2808 = vmatprep.subr.bf16.mxu0 0
        %2809 = vmatpush1.bf16.msra.mxu0 0
        %2810 = vmatprep.subr.bf16.mxu0 0
        %2811 = vmatpush1.bf16.msra.mxu0 0
        %2812 = vmatprep.subr.bf16.mxu0 0
        %2813 = vmatpush1.bf16.msra.mxu0 0
        %2814 = vmatprep.subr.bf16.mxu0 0
        %2815 = vmatpush1.bf16.msra.mxu0 0
        %2816 = vmatprep.subr.bf16.mxu0 0
        %2817 = vmatpush1.bf16.msra.mxu0 0
        %2818 = vmatprep.subr.bf16.mxu0 0
        %2819 = vmatpush1.bf16.msra.mxu0 0
        %2820 = vmatprep.subr.bf16.mxu0 0
        %2821 = vmatpush1.bf16.msra.mxu0 0
        %2822 = vmatprep.subr.bf16.mxu0 0
        %2823 = vmatpush1.bf16.msra.mxu0 0
        %2824 = vmatprep.subr.bf16.mxu0 0
        %2825 = vmatpush1.bf16.msra.mxu0 0
        %2826 = vmatprep.mubr.bf16.mxu0 0
        %2827 = vmatmul.mubr.bf16.gmra.mrb[0].mxu0 %v387
        %v2828 = vpop.f32.mrb[0].mxu0
        %v2829 = vadd.f32 0.0, %v2828
        %v2830 = vpop.f32.mrb[0].mxu0
        %v2831 = vadd.f32 0.0, %v2830
        %v2832 = vpop.f32.mrb[0].mxu0
        %v2833 = vpop.f32.mrb[0].mxu0
        %2834 = vdwg.mxu0
        %v2837 = vcombine.high %v2606, %v2606
        %v2839 = vunpack.c.l.s4 1983009808
        %v2840 = vunpack.c.0.s8 %v2839
        %v2841 = vlaneseq
        %v2842 = vshrl.u32 %v2841, 7
        %v2843 = vsub.s32 %v2840, %v2842
        %v2844 = vrot.slane %v2606, %v2843
        %v2846 = vunpack.c.l.s4 1983009808
        %v2847 = vunpack.c.0.s8 %v2846
        %v2848 = vlaneseq
        %v2849 = vshrl.u32 %v2848, 7
        %v2850 = vsub.s32 %v2847, %v2849
        %v2851 = vrot.slane %v2837, %v2850
        %v2852 = vcombine.high %v2844, %v2844
        %v2853 = vcombine.high %v2851, %v2851
        %v2854 = vcombine.high %v2607, %v2607
        %v2856 = vunpack.c.l.s4 1983009808
        %v2857 = vunpack.c.0.s8 %v2856
        %v2858 = vlaneseq
        %v2859 = vshrl.u32 %v2858, 7
        %v2860 = vsub.s32 %v2857, %v2859
        %v2861 = vrot.slane %v2607, %v2860
        %v2863 = vunpack.c.l.s4 1983009808
        %v2864 = vunpack.c.0.s8 %v2863
        %v2865 = vlaneseq
        %v2866 = vshrl.u32 %v2865, 7
        %v2867 = vsub.s32 %v2864, %v2866
        %v2868 = vrot.slane %v2854, %v2867
        %v2869 = vcombine.high %v2861, %v2861
        %v2870 = vcombine.high %v2868, %v2868
        %v2872 = vsel %vm389, %v2844, 0
        %v2875 = vsel %vm389, %v2852, 0
        %v2878 = vsel %vm389, %v2851, 0
        %v2881 = vsel %vm389, %v2853, 0
        %v2884 = vsel %vm389, %v2861, 0
        %v2887 = vsel %vm389, %v2869, 0
        %v2890 = vsel %vm389, %v2868, 0
        %v2893 = vsel %vm389, %v2870, 0
        %2895 = vmatprep.subr.bf16.mxu0 %v2875
        %2896 = vmatpush1.bf16.msra.mxu0 %v2872
        %2897 = vmatprep.subr.bf16.mxu0 0
        %2898 = vmatpush1.bf16.msra.mxu0 0
        %2899 = vmatprep.subr.bf16.mxu0 0
        %2900 = vmatpush1.bf16.msra.mxu0 0
        %2901 = vmatprep.subr.bf16.mxu0 0
        %2902 = vmatpush1.bf16.msra.mxu0 0
        %2903 = vmatprep.subr.bf16.mxu0 0
        %2904 = vmatpush1.bf16.msra.mxu0 0
        %2905 = vmatprep.subr.bf16.mxu0 0
        %2906 = vmatpush1.bf16.msra.mxu0 0
        %2907 = vmatprep.subr.bf16.mxu0 0
        %2908 = vmatpush1.bf16.msra.mxu0 0
        %2909 = vmatprep.subr.bf16.mxu0 0
        %2910 = vmatpush1.bf16.msra.mxu0 0
        %2911 = vmatprep.subr.bf16.mxu0 0
        %2912 = vmatpush1.bf16.msra.mxu0 0
        %2913 = vmatprep.subr.bf16.mxu0 0
        %2914 = vmatpush1.bf16.msra.mxu0 0
        %2915 = vmatprep.subr.bf16.mxu0 0
        %2916 = vmatpush1.bf16.msra.mxu0 0
        %2917 = vmatprep.subr.bf16.mxu0 0
        %2918 = vmatpush1.bf16.msra.mxu0 0
        %2919 = vmatprep.subr.bf16.mxu0 0
        %2920 = vmatpush1.bf16.msra.mxu0 0
        %2921 = vmatprep.subr.bf16.mxu0 0
        %2922 = vmatpush1.bf16.msra.mxu0 0
        %2923 = vmatprep.subr.bf16.mxu0 0
        %2924 = vmatpush1.bf16.msra.mxu0 0
        %2925 = vmatprep.subr.bf16.mxu0 0
        %2926 = vmatpush1.bf16.msra.mxu0 0
        %2927 = vmatprep.mubr.bf16.mxu0 0
        %2928 = vmatmul.mubr.bf16.gmra.mrb[0].mxu0 %v615
        %v2929 = vpop.f32.mrb[0].mxu0
        %v2930 = vadd.f32 %v2706, %v2929
        %v2931 = vpop.f32.mrb[0].mxu0
        %v2932 = vadd.f32 %v2708, %v2931
        %v2933 = vpop.f32.mrb[0].mxu0
        %v2934 = vpop.f32.mrb[0].mxu0
        %2935 = vdwg.mxu0
        %2936 = vmatprep.subr.bf16.mxu0 %v2881
        %2937 = vmatpush1.bf16.msra.mxu0 %v2878
        %2938 = vmatprep.subr.bf16.mxu0 0
        %2939 = vmatpush1.bf16.msra.mxu0 0
        %2940 = vmatprep.subr.bf16.mxu0 0
        %2941 = vmatpush1.bf16.msra.mxu0 0
        %2942 = vmatprep.subr.bf16.mxu0 0
        %2943 = vmatpush1.bf16.msra.mxu0 0
        %2944 = vmatprep.subr.bf16.mxu0 0
        %2945 = vmatpush1.bf16.msra.mxu0 0
        %2946 = vmatprep.subr.bf16.mxu0 0
        %2947 = vmatpush1.bf16.msra.mxu0 0
        %2948 = vmatprep.subr.bf16.mxu0 0
        %2949 = vmatpush1.bf16.msra.mxu0 0
        %2950 = vmatprep.subr.bf16.mxu0 0
        %2951 = vmatpush1.bf16.msra.mxu0 0
        %2952 = vmatprep.subr.bf16.mxu0 0
        %2953 = vmatpush1.bf16.msra.mxu0 0
        %2954 = vmatprep.subr.bf16.mxu0 0
        %2955 = vmatpush1.bf16.msra.mxu0 0
        %2956 = vmatprep.subr.bf16.mxu0 0
        %2957 = vmatpush1.bf16.msra.mxu0 0
        %2958 = vmatprep.subr.bf16.mxu0 0
        %2959 = vmatpush1.bf16.msra.mxu0 0
        %2960 = vmatprep.subr.bf16.mxu0 0
        %2961 = vmatpush1.bf16.msra.mxu0 0
        %2962 = vmatprep.subr.bf16.mxu0 0
        %2963 = vmatpush1.bf16.msra.mxu0 0
        %2964 = vmatprep.subr.bf16.mxu0 0
        %2965 = vmatpush1.bf16.msra.mxu0 0
        %2966 = vmatprep.subr.bf16.mxu0 0
        %2967 = vmatpush1.bf16.msra.mxu0 0
        %2968 = vmatprep.mubr.bf16.mxu0 0
        %2969 = vmatmul.mubr.bf16.gmra.mrb[0].mxu0 %v615
        %v2970 = vpop.f32.mrb[0].mxu0
        %v2971 = vadd.f32 %v2747, %v2970
        %v2972 = vpop.f32.mrb[0].mxu0
        %v2973 = vadd.f32 %v2749, %v2972
        %v2974 = vpop.f32.mrb[0].mxu0
        %v2975 = vpop.f32.mrb[0].mxu0
        %2976 = vdwg.mxu0
        %2977 = vmatprep.subr.bf16.mxu0 %v2887
        %2978 = vmatpush1.bf16.msra.mxu0 %v2884
        %2979 = vmatprep.subr.bf16.mxu0 0
        %2980 = vmatpush1.bf16.msra.mxu0 0
        %2981 = vmatprep.subr.bf16.mxu0 0
        %2982 = vmatpush1.bf16.msra.mxu0 0
        %2983 = vmatprep.subr.bf16.mxu0 0
        %2984 = vmatpush1.bf16.msra.mxu0 0
        %2985 = vmatprep.subr.bf16.mxu0 0
        %2986 = vmatpush1.bf16.msra.mxu0 0
        %2987 = vmatprep.subr.bf16.mxu0 0
        %2988 = vmatpush1.bf16.msra.mxu0 0
        %2989 = vmatprep.subr.bf16.mxu0 0
        %2990 = vmatpush1.bf16.msra.mxu0 0
        %2991 = vmatprep.subr.bf16.mxu0 0
        %2992 = vmatpush1.bf16.msra.mxu0 0
        %2993 = vmatprep.subr.bf16.mxu0 0
        %2994 = vmatpush1.bf16.msra.mxu0 0
        %2995 = vmatprep.subr.bf16.mxu0 0
        %2996 = vmatpush1.bf16.msra.mxu0 0
        %2997 = vmatprep.subr.bf16.mxu0 0
        %2998 = vmatpush1.bf16.msra.mxu0 0
        %2999 = vmatprep.subr.bf16.mxu0 0
        %3000 = vmatpush1.bf16.msra.mxu0 0
        %3001 = vmatprep.subr.bf16.mxu0 0
        %3002 = vmatpush1.bf16.msra.mxu0 0
        %3003 = vmatprep.subr.bf16.mxu0 0
        %3004 = vmatpush1.bf16.msra.mxu0 0
        %3005 = vmatprep.subr.bf16.mxu0 0
        %3006 = vmatpush1.bf16.msra.mxu0 0
        %3007 = vmatprep.subr.bf16.mxu0 0
        %3008 = vmatpush1.bf16.msra.mxu0 0
        %3009 = vmatprep.mubr.bf16.mxu0 0
        %3010 = vmatmul.mubr.bf16.gmra.mrb[0].mxu0 %v615
        %v3011 = vpop.f32.mrb[0].mxu0
        %v3012 = vadd.f32 %v2788, %v3011
        %v3013 = vpop.f32.mrb[0].mxu0
        %v3014 = vadd.f32 %v2790, %v3013
        %v3015 = vpop.f32.mrb[0].mxu0
        %v3016 = vpop.f32.mrb[0].mxu0
        %3017 = vdwg.mxu0
        %3018 = vmatprep.subr.bf16.mxu0 %v2893
        %3019 = vmatpush1.bf16.msra.mxu0 %v2890
        %3020 = vmatprep.subr.bf16.mxu0 0
        %3021 = vmatpush1.bf16.msra.mxu0 0
        %3022 = vmatprep.subr.bf16.mxu0 0
        %3023 = vmatpush1.bf16.msra.mxu0 0
        %3024 = vmatprep.subr.bf16.mxu0 0
        %3025 = vmatpush1.bf16.msra.mxu0 0
        %3026 = vmatprep.subr.bf16.mxu0 0
        %3027 = vmatpush1.bf16.msra.mxu0 0
        %3028 = vmatprep.subr.bf16.mxu0 0
        %3029 = vmatpush1.bf16.msra.mxu0 0
        %3030 = vmatprep.subr.bf16.mxu0 0
        %3031 = vmatpush1.bf16.msra.mxu0 0
        %3032 = vmatprep.subr.bf16.mxu0 0
        %3033 = vmatpush1.bf16.msra.mxu0 0
        %3034 = vmatprep.subr.bf16.mxu0 0
        %3035 = vmatpush1.bf16.msra.mxu0 0
        %3036 = vmatprep.subr.bf16.mxu0 0
        %3037 = vmatpush1.bf16.msra.mxu0 0
        %3038 = vmatprep.subr.bf16.mxu0 0
        %3039 = vmatpush1.bf16.msra.mxu0 0
        %3040 = vmatprep.subr.bf16.mxu0 0
        %3041 = vmatpush1.bf16.msra.mxu0 0
        %3042 = vmatprep.subr.bf16.mxu0 0
        %3043 = vmatpush1.bf16.msra.mxu0 0
        %3044 = vmatprep.subr.bf16.mxu0 0
        %3045 = vmatpush1.bf16.msra.mxu0 0
        %3046 = vmatprep.subr.bf16.mxu0 0
        %3047 = vmatpush1.bf16.msra.mxu0 0
        %3048 = vmatprep.subr.bf16.mxu0 0
        %3049 = vmatpush1.bf16.msra.mxu0 0
        %3050 = vmatprep.mubr.bf16.mxu0 0
        %3051 = vmatmul.mubr.bf16.gmra.mrb[0].mxu0 %v615
        %v3052 = vpop.f32.mrb[0].mxu0
        %v3053 = vadd.f32 %v2829, %v3052
        %v3054 = vpop.f32.mrb[0].mxu0
        %v3055 = vadd.f32 %v2831, %v3054
        %v3056 = vpop.f32.mrb[0].mxu0
        %v3057 = vpop.f32.mrb[0].mxu0
        %3058 = vdwg.mxu0
        %s3059 = scalar_lea.vmem %s264, 20 [#allocation2]
        %v3060 = vld [vmem:[%s3059] sm:$0xff]
        %v3061 = vld [vmem:[%s3059 + $0x8] sm:$0xff]
        %v3064 = vcombine.high %v3060, %v3060
        %v3066 = vunpack.c.l.s4 1983009808
        %v3067 = vunpack.c.0.s8 %v3066
        %v3068 = vlaneseq
        %v3069 = vshrl.u32 %v3068, 7
        %v3070 = vsub.s32 %v3067, %v3069
        %v3071 = vrot.slane %v3060, %v3070
        %v3073 = vunpack.c.l.s4 1983009808
        %v3074 = vunpack.c.0.s8 %v3073
        %v3075 = vlaneseq
        %v3076 = vshrl.u32 %v3075, 7
        %v3077 = vsub.s32 %v3074, %v3076
        %v3078 = vrot.slane %v3064, %v3077
        %v3079 = vcombine.high %v3071, %v3071
        %v3080 = vcombine.high %v3078, %v3078
        %v3081 = vcombine.high %v3061, %v3061
        %v3083 = vunpack.c.l.s4 1983009808
        %v3084 = vunpack.c.0.s8 %v3083
        %v3085 = vlaneseq
        %v3086 = vshrl.u32 %v3085, 7
        %v3087 = vsub.s32 %v3084, %v3086
        %v3088 = vrot.slane %v3061, %v3087
        %v3090 = vunpack.c.l.s4 1983009808
        %v3091 = vunpack.c.0.s8 %v3090
        %v3092 = vlaneseq
        %v3093 = vshrl.u32 %v3092, 7
        %v3094 = vsub.s32 %v3091, %v3093
        %v3095 = vrot.slane %v3081, %v3094
        %v3096 = vcombine.high %v3088, %v3088
        %v3097 = vcombine.high %v3095, %v3095
        %v3099 = vsel %vm389, %v3071, 0
        %v3102 = vsel %vm389, %v3079, 0
        %v3105 = vsel %vm389, %v3078, 0
        %v3108 = vsel %vm389, %v3080, 0
        %v3111 = vsel %vm389, %v3088, 0
        %v3114 = vsel %vm389, %v3096, 0
        %v3117 = vsel %vm389, %v3095, 0
        %v3120 = vsel %vm389, %v3097, 0
        %3122 = vmatprep.subr.bf16.mxu0 %v3102
        %3123 = vmatpush1.bf16.msra.mxu0 %v3099
        %3124 = vmatprep.subr.bf16.mxu0 0
        %3125 = vmatpush1.bf16.msra.mxu0 0
        %3126 = vmatprep.subr.bf16.mxu0 0
        %3127 = vmatpush1.bf16.msra.mxu0 0
        %3128 = vmatprep.subr.bf16.mxu0 0
        %3129 = vmatpush1.bf16.msra.mxu0 0
        %3130 = vmatprep.subr.bf16.mxu0 0
        %3131 = vmatpush1.bf16.msra.mxu0 0
        %3132 = vmatprep.subr.bf16.mxu0 0
        %3133 = vmatpush1.bf16.msra.mxu0 0
        %3134 = vmatprep.subr.bf16.mxu0 0
        %3135 = vmatpush1.bf16.msra.mxu0 0
        %3136 = vmatprep.subr.bf16.mxu0 0
        %3137 = vmatpush1.bf16.msra.mxu0 0
        %3138 = vmatprep.subr.bf16.mxu0 0
        %3139 = vmatpush1.bf16.msra.mxu0 0
        %3140 = vmatprep.subr.bf16.mxu0 0
        %3141 = vmatpush1.bf16.msra.mxu0 0
        %3142 = vmatprep.subr.bf16.mxu0 0
        %3143 = vmatpush1.bf16.msra.mxu0 0
        %3144 = vmatprep.subr.bf16.mxu0 0
        %3145 = vmatpush1.bf16.msra.mxu0 0
        %3146 = vmatprep.subr.bf16.mxu0 0
        %3147 = vmatpush1.bf16.msra.mxu0 0
        %3148 = vmatprep.subr.bf16.mxu0 0
        %3149 = vmatpush1.bf16.msra.mxu0 0
        %3150 = vmatprep.subr.bf16.mxu0 0
        %3151 = vmatpush1.bf16.msra.mxu0 0
        %3152 = vmatprep.subr.bf16.mxu0 0
        %3153 = vmatpush1.bf16.msra.mxu0 0
        %3154 = vmatprep.mubr.bf16.mxu0 0
        %3155 = vmatmul.mubr.bf16.gmra.mrb[0].mxu0 %v845
        %v3156 = vpop.f32.mrb[0].mxu0
        %v3157 = vadd.f32 0.0, %v3156
        %v3158 = vpop.f32.mrb[0].mxu0
        %v3159 = vadd.f32 0.0, %v3158
        %v3160 = vpop.f32.mrb[0].mxu0
        %v3161 = vpop.f32.mrb[0].mxu0
        %3162 = vdwg.mxu0
        %3163 = vmatprep.subr.bf16.mxu0 %v3108
        %3164 = vmatpush1.bf16.msra.mxu0 %v3105
        %3165 = vmatprep.subr.bf16.mxu0 0
        %3166 = vmatpush1.bf16.msra.mxu0 0
        %3167 = vmatprep.subr.bf16.mxu0 0
        %3168 = vmatpush1.bf16.msra.mxu0 0
        %3169 = vmatprep.subr.bf16.mxu0 0
        %3170 = vmatpush1.bf16.msra.mxu0 0
        %3171 = vmatprep.subr.bf16.mxu0 0
        %3172 = vmatpush1.bf16.msra.mxu0 0
        %3173 = vmatprep.subr.bf16.mxu0 0
        %3174 = vmatpush1.bf16.msra.mxu0 0
        %3175 = vmatprep.subr.bf16.mxu0 0
        %3176 = vmatpush1.bf16.msra.mxu0 0
        %3177 = vmatprep.subr.bf16.mxu0 0
        %3178 = vmatpush1.bf16.msra.mxu0 0
        %3179 = vmatprep.subr.bf16.mxu0 0
        %3180 = vmatpush1.bf16.msra.mxu0 0
        %3181 = vmatprep.subr.bf16.mxu0 0
        %3182 = vmatpush1.bf16.msra.mxu0 0
        %3183 = vmatprep.subr.bf16.mxu0 0
        %3184 = vmatpush1.bf16.msra.mxu0 0
        %3185 = vmatprep.subr.bf16.mxu0 0
        %3186 = vmatpush1.bf16.msra.mxu0 0
        %3187 = vmatprep.subr.bf16.mxu0 0
        %3188 = vmatpush1.bf16.msra.mxu0 0
        %3189 = vmatprep.subr.bf16.mxu0 0
        %3190 = vmatpush1.bf16.msra.mxu0 0
        %3191 = vmatprep.subr.bf16.mxu0 0
        %3192 = vmatpush1.bf16.msra.mxu0 0
        %3193 = vmatprep.subr.bf16.mxu0 0
        %3194 = vmatpush1.bf16.msra.mxu0 0
        %3195 = vmatprep.mubr.bf16.mxu0 0
        %3196 = vmatmul.mubr.bf16.gmra.mrb[0].mxu0 %v845
        %v3197 = vpop.f32.mrb[0].mxu0
        %v3198 = vadd.f32 0.0, %v3197
        %v3199 = vpop.f32.mrb[0].mxu0
        %v3200 = vadd.f32 0.0, %v3199
        %v3201 = vpop.f32.mrb[0].mxu0
        %v3202 = vpop.f32.mrb[0].mxu0
        %3203 = vdwg.mxu0
        %3204 = vmatprep.subr.bf16.mxu0 %v3114
        %3205 = vmatpush1.bf16.msra.mxu0 %v3111
        %3206 = vmatprep.subr.bf16.mxu0 0
        %3207 = vmatpush1.bf16.msra.mxu0 0
        %3208 = vmatprep.subr.bf16.mxu0 0
        %3209 = vmatpush1.bf16.msra.mxu0 0
        %3210 = vmatprep.subr.bf16.mxu0 0
        %3211 = vmatpush1.bf16.msra.mxu0 0
        %3212 = vmatprep.subr.bf16.mxu0 0
        %3213 = vmatpush1.bf16.msra.mxu0 0
        %3214 = vmatprep.subr.bf16.mxu0 0
        %3215 = vmatpush1.bf16.msra.mxu0 0
        %3216 = vmatprep.subr.bf16.mxu0 0
        %3217 = vmatpush1.bf16.msra.mxu0 0
        %3218 = vmatprep.subr.bf16.mxu0 0
        %3219 = vmatpush1.bf16.msra.mxu0 0
        %3220 = vmatprep.subr.bf16.mxu0 0
        %3221 = vmatpush1.bf16.msra.mxu0 0
        %3222 = vmatprep.subr.bf16.mxu0 0
        %3223 = vmatpush1.bf16.msra.mxu0 0
        %3224 = vmatprep.subr.bf16.mxu0 0
        %3225 = vmatpush1.bf16.msra.mxu0 0
        %3226 = vmatprep.subr.bf16.mxu0 0
        %3227 = vmatpush1.bf16.msra.mxu0 0
        %3228 = vmatprep.subr.bf16.mxu0 0
        %3229 = vmatpush1.bf16.msra.mxu0 0
        %3230 = vmatprep.subr.bf16.mxu0 0
        %3231 = vmatpush1.bf16.msra.mxu0 0
        %3232 = vmatprep.subr.bf16.mxu0 0
        %3233 = vmatpush1.bf16.msra.mxu0 0
        %3234 = vmatprep.subr.bf16.mxu0 0
        %3235 = vmatpush1.bf16.msra.mxu0 0
        %3236 = vmatprep.mubr.bf16.mxu0 0
        %3237 = vmatmul.mubr.bf16.gmra.mrb[0].mxu0 %v845
        %v3238 = vpop.f32.mrb[0].mxu0
        %v3239 = vadd.f32 0.0, %v3238
        %v3240 = vpop.f32.mrb[0].mxu0
        %v3241 = vadd.f32 0.0, %v3240
        %v3242 = vpop.f32.mrb[0].mxu0
        %v3243 = vpop.f32.mrb[0].mxu0
        %3244 = vdwg.mxu0
        %3245 = vmatprep.subr.bf16.mxu0 %v3120
        %3246 = vmatpush1.bf16.msra.mxu0 %v3117
        %3247 = vmatprep.subr.bf16.mxu0 0
        %3248 = vmatpush1.bf16.msra.mxu0 0
        %3249 = vmatprep.subr.bf16.mxu0 0
        %3250 = vmatpush1.bf16.msra.mxu0 0
        %3251 = vmatprep.subr.bf16.mxu0 0
        %3252 = vmatpush1.bf16.msra.mxu0 0
        %3253 = vmatprep.subr.bf16.mxu0 0
        %3254 = vmatpush1.bf16.msra.mxu0 0
        %3255 = vmatprep.subr.bf16.mxu0 0
        %3256 = vmatpush1.bf16.msra.mxu0 0
        %3257 = vmatprep.subr.bf16.mxu0 0
        %3258 = vmatpush1.bf16.msra.mxu0 0
        %3259 = vmatprep.subr.bf16.mxu0 0
        %3260 = vmatpush1.bf16.msra.mxu0 0
        %3261 = vmatprep.subr.bf16.mxu0 0
        %3262 = vmatpush1.bf16.msra.mxu0 0
        %3263 = vmatprep.subr.bf16.mxu0 0
        %3264 = vmatpush1.bf16.msra.mxu0 0
        %3265 = vmatprep.subr.bf16.mxu0 0
        %3266 = vmatpush1.bf16.msra.mxu0 0
        %3267 = vmatprep.subr.bf16.mxu0 0
        %3268 = vmatpush1.bf16.msra.mxu0 0
        %3269 = vmatprep.subr.bf16.mxu0 0
        %3270 = vmatpush1.bf16.msra.mxu0 0
        %3271 = vmatprep.subr.bf16.mxu0 0
        %3272 = vmatpush1.bf16.msra.mxu0 0
        %3273 = vmatprep.subr.bf16.mxu0 0
        %3274 = vmatpush1.bf16.msra.mxu0 0
        %3275 = vmatprep.subr.bf16.mxu0 0
        %3276 = vmatpush1.bf16.msra.mxu0 0
        %3277 = vmatprep.mubr.bf16.mxu0 0
        %3278 = vmatmul.mubr.bf16.gmra.mrb[0].mxu0 %v845
        %v3279 = vpop.f32.mrb[0].mxu0
        %v3280 = vadd.f32 0.0, %v3279
        %v3281 = vpop.f32.mrb[0].mxu0
        %v3282 = vadd.f32 0.0, %v3281
        %v3283 = vpop.f32.mrb[0].mxu0
        %v3284 = vpop.f32.mrb[0].mxu0
        %3285 = vdwg.mxu0
        %v3286 = vadd.f32 %v2930, %v3157
        %v3287 = vadd.f32 %v2932, %v3159
        %v3288 = vadd.f32 %v2971, %v3198
        %v3289 = vadd.f32 %v2973, %v3200
        %v3290 = vadd.f32 %v3012, %v3239
        %v3291 = vadd.f32 %v3014, %v3241
        %v3292 = vadd.f32 %v3053, %v3280
        %v3293 = vadd.f32 %v3055, %v3282
        %s3294 = scalar_lea.vmem %s264, 22 [#allocation2]
        %v3295 = vld [vmem:[%s3294] sm:$0xff]
        %v3296 = vld [vmem:[%s3294 + $0x8] sm:$0xff]
        %v3299 = vcombine.high %v3295, %v3295
        %v3301 = vunpack.c.l.s4 1983009808
        %v3302 = vunpack.c.0.s8 %v3301
        %v3303 = vlaneseq
        %v3304 = vshrl.u32 %v3303, 7
        %v3305 = vsub.s32 %v3302, %v3304
        %v3306 = vrot.slane %v3295, %v3305
        %v3308 = vunpack.c.l.s4 1983009808
        %v3309 = vunpack.c.0.s8 %v3308
        %v3310 = vlaneseq
        %v3311 = vshrl.u32 %v3310, 7
        %v3312 = vsub.s32 %v3309, %v3311
        %v3313 = vrot.slane %v3299, %v3312
        %v3314 = vcombine.high %v3306, %v3306
        %v3315 = vcombine.high %v3313, %v3313
        %v3316 = vcombine.high %v3296, %v3296
        %v3318 = vunpack.c.l.s4 1983009808
        %v3319 = vunpack.c.0.s8 %v3318
        %v3320 = vlaneseq
        %v3321 = vshrl.u32 %v3320, 7
        %v3322 = vsub.s32 %v3319, %v3321
        %v3323 = vrot.slane %v3296, %v3322
        %v3325 = vunpack.c.l.s4 1983009808
        %v3326 = vunpack.c.0.s8 %v3325
        %v3327 = vlaneseq
        %v3328 = vshrl.u32 %v3327, 7
        %v3329 = vsub.s32 %v3326, %v3328
        %v3330 = vrot.slane %v3316, %v3329
        %v3331 = vcombine.high %v3323, %v3323
        %v3332 = vcombine.high %v3330, %v3330
        %v3334 = vsel %vm389, %v3306, 0
        %v3337 = vsel %vm389, %v3314, 0
        %v3340 = vsel %vm389, %v3313, 0
        %v3343 = vsel %vm389, %v3315, 0
        %v3346 = vsel %vm389, %v3323, 0
        %v3349 = vsel %vm389, %v3331, 0
        %v3352 = vsel %vm389, %v3330, 0
        %v3355 = vsel %vm389, %v3332, 0
        %3357 = vmatprep.subr.bf16.mxu0 %v3337
        %3358 = vmatpush1.bf16.msra.mxu0 %v3334
        %3359 = vmatprep.subr.bf16.mxu0 0
        %3360 = vmatpush1.bf16.msra.mxu0 0
        %3361 = vmatprep.subr.bf16.mxu0 0
        %3362 = vmatpush1.bf16.msra.mxu0 0
        %3363 = vmatprep.subr.bf16.mxu0 0
        %3364 = vmatpush1.bf16.msra.mxu0 0
        %3365 = vmatprep.subr.bf16.mxu0 0
        %3366 = vmatpush1.bf16.msra.mxu0 0
        %3367 = vmatprep.subr.bf16.mxu0 0
        %3368 = vmatpush1.bf16.msra.mxu0 0
        %3369 = vmatprep.subr.bf16.mxu0 0
        %3370 = vmatpush1.bf16.msra.mxu0 0
        %3371 = vmatprep.subr.bf16.mxu0 0
        %3372 = vmatpush1.bf16.msra.mxu0 0
        %3373 = vmatprep.subr.bf16.mxu0 0
        %3374 = vmatpush1.bf16.msra.mxu0 0
        %3375 = vmatprep.subr.bf16.mxu0 0
        %3376 = vmatpush1.bf16.msra.mxu0 0
        %3377 = vmatprep.subr.bf16.mxu0 0
        %3378 = vmatpush1.bf16.msra.mxu0 0
        %3379 = vmatprep.subr.bf16.mxu0 0
        %3380 = vmatpush1.bf16.msra.mxu0 0
        %3381 = vmatprep.subr.bf16.mxu0 0
        %3382 = vmatpush1.bf16.msra.mxu0 0
        %3383 = vmatprep.subr.bf16.mxu0 0
        %3384 = vmatpush1.bf16.msra.mxu0 0
        %3385 = vmatprep.subr.bf16.mxu0 0
        %3386 = vmatpush1.bf16.msra.mxu0 0
        %3387 = vmatprep.subr.bf16.mxu0 0
        %3388 = vmatpush1.bf16.msra.mxu0 0
        %3389 = vmatprep.mubr.bf16.mxu0 0
        %3390 = vmatmul.mubr.bf16.gmra.mrb[0].mxu0 %v1083
        %v3391 = vpop.f32.mrb[0].mxu0
        %v3392 = vadd.f32 0.0, %v3391
        %v3393 = vpop.f32.mrb[0].mxu0
        %v3394 = vadd.f32 0.0, %v3393
        %v3395 = vpop.f32.mrb[0].mxu0
        %v3396 = vpop.f32.mrb[0].mxu0
        %3397 = vdwg.mxu0
        %3398 = vmatprep.subr.bf16.mxu0 %v3343
        %3399 = vmatpush1.bf16.msra.mxu0 %v3340
        %3400 = vmatprep.subr.bf16.mxu0 0
        %3401 = vmatpush1.bf16.msra.mxu0 0
        %3402 = vmatprep.subr.bf16.mxu0 0
        %3403 = vmatpush1.bf16.msra.mxu0 0
        %3404 = vmatprep.subr.bf16.mxu0 0
        %3405 = vmatpush1.bf16.msra.mxu0 0
        %3406 = vmatprep.subr.bf16.mxu0 0
        %3407 = vmatpush1.bf16.msra.mxu0 0
        %3408 = vmatprep.subr.bf16.mxu0 0
        %3409 = vmatpush1.bf16.msra.mxu0 0
        %3410 = vmatprep.subr.bf16.mxu0 0
        %3411 = vmatpush1.bf16.msra.mxu0 0
        %3412 = vmatprep.subr.bf16.mxu0 0
        %3413 = vmatpush1.bf16.msra.mxu0 0
        %3414 = vmatprep.subr.bf16.mxu0 0
        %3415 = vmatpush1.bf16.msra.mxu0 0
        %3416 = vmatprep.subr.bf16.mxu0 0
        %3417 = vmatpush1.bf16.msra.mxu0 0
        %3418 = vmatprep.subr.bf16.mxu0 0
        %3419 = vmatpush1.bf16.msra.mxu0 0
        %3420 = vmatprep.subr.bf16.mxu0 0
        %3421 = vmatpush1.bf16.msra.mxu0 0
        %3422 = vmatprep.subr.bf16.mxu0 0
        %3423 = vmatpush1.bf16.msra.mxu0 0
        %3424 = vmatprep.subr.bf16.mxu0 0
        %3425 = vmatpush1.bf16.msra.mxu0 0
        %3426 = vmatprep.subr.bf16.mxu0 0
        %3427 = vmatpush1.bf16.msra.mxu0 0
        %3428 = vmatprep.subr.bf16.mxu0 0
        %3429 = vmatpush1.bf16.msra.mxu0 0
        %3430 = vmatprep.mubr.bf16.mxu0 0
        %3431 = vmatmul.mubr.bf16.gmra.mrb[0].mxu0 %v1083
        %v3432 = vpop.f32.mrb[0].mxu0
        %v3433 = vadd.f32 0.0, %v3432
        %v3434 = vpop.f32.mrb[0].mxu0
        %v3435 = vadd.f32 0.0, %v3434
        %v3436 = vpop.f32.mrb[0].mxu0
        %v3437 = vpop.f32.mrb[0].mxu0
        %3438 = vdwg.mxu0
        %3439 = vmatprep.subr.bf16.mxu0 %v3349
        %3440 = vmatpush1.bf16.msra.mxu0 %v3346
        %3441 = vmatprep.subr.bf16.mxu0 0
        %3442 = vmatpush1.bf16.msra.mxu0 0
        %3443 = vmatprep.subr.bf16.mxu0 0
        %3444 = vmatpush1.bf16.msra.mxu0 0
        %3445 = vmatprep.subr.bf16.mxu0 0
        %3446 = vmatpush1.bf16.msra.mxu0 0
        %3447 = vmatprep.subr.bf16.mxu0 0
        %3448 = vmatpush1.bf16.msra.mxu0 0
        %3449 = vmatprep.subr.bf16.mxu0 0
        %3450 = vmatpush1.bf16.msra.mxu0 0
        %3451 = vmatprep.subr.bf16.mxu0 0
        %3452 = vmatpush1.bf16.msra.mxu0 0
        %3453 = vmatprep.subr.bf16.mxu0 0
        %3454 = vmatpush1.bf16.msra.mxu0 0
        %3455 = vmatprep.subr.bf16.mxu0 0
        %3456 = vmatpush1.bf16.msra.mxu0 0
        %3457 = vmatprep.subr.bf16.mxu0 0
        %3458 = vmatpush1.bf16.msra.mxu0 0
        %3459 = vmatprep.subr.bf16.mxu0 0
        %3460 = vmatpush1.bf16.msra.mxu0 0
        %3461 = vmatprep.subr.bf16.mxu0 0
        %3462 = vmatpush1.bf16.msra.mxu0 0
        %3463 = vmatprep.subr.bf16.mxu0 0
        %3464 = vmatpush1.bf16.msra.mxu0 0
        %3465 = vmatprep.subr.bf16.mxu0 0
        %3466 = vmatpush1.bf16.msra.mxu0 0
        %3467 = vmatprep.subr.bf16.mxu0 0
        %3468 = vmatpush1.bf16.msra.mxu0 0
        %3469 = vmatprep.subr.bf16.mxu0 0
        %3470 = vmatpush1.bf16.msra.mxu0 0
        %3471 = vmatprep.mubr.bf16.mxu0 0
        %3472 = vmatmul.mubr.bf16.gmra.mrb[0].mxu0 %v1083
        %v3473 = vpop.f32.mrb[0].mxu0
        %v3474 = vadd.f32 0.0, %v3473
        %v3475 = vpop.f32.mrb[0].mxu0
        %v3476 = vadd.f32 0.0, %v3475
        %v3477 = vpop.f32.mrb[0].mxu0
        %v3478 = vpop.f32.mrb[0].mxu0
        %3479 = vdwg.mxu0
        %3480 = vmatprep.subr.bf16.mxu0 %v3355
        %3481 = vmatpush1.bf16.msra.mxu0 %v3352
        %3482 = vmatprep.subr.bf16.mxu0 0
        %3483 = vmatpush1.bf16.msra.mxu0 0
        %3484 = vmatprep.subr.bf16.mxu0 0
        %3485 = vmatpush1.bf16.msra.mxu0 0
        %3486 = vmatprep.subr.bf16.mxu0 0
        %3487 = vmatpush1.bf16.msra.mxu0 0
        %3488 = vmatprep.subr.bf16.mxu0 0
        %3489 = vmatpush1.bf16.msra.mxu0 0
        %3490 = vmatprep.subr.bf16.mxu0 0
        %3491 = vmatpush1.bf16.msra.mxu0 0
        %3492 = vmatprep.subr.bf16.mxu0 0
        %3493 = vmatpush1.bf16.msra.mxu0 0
        %3494 = vmatprep.subr.bf16.mxu0 0
        %3495 = vmatpush1.bf16.msra.mxu0 0
        %3496 = vmatprep.subr.bf16.mxu0 0
        %3497 = vmatpush1.bf16.msra.mxu0 0
        %3498 = vmatprep.subr.bf16.mxu0 0
        %3499 = vmatpush1.bf16.msra.mxu0 0
        %3500 = vmatprep.subr.bf16.mxu0 0
        %3501 = vmatpush1.bf16.msra.mxu0 0
        %3502 = vmatprep.subr.bf16.mxu0 0
        %3503 = vmatpush1.bf16.msra.mxu0 0
        %3504 = vmatprep.subr.bf16.mxu0 0
        %3505 = vmatpush1.bf16.msra.mxu0 0
        %3506 = vmatprep.subr.bf16.mxu0 0
        %3507 = vmatpush1.bf16.msra.mxu0 0
        %3508 = vmatprep.subr.bf16.mxu0 0
        %3509 = vmatpush1.bf16.msra.mxu0 0
        %3510 = vmatprep.subr.bf16.mxu0 0
        %3511 = vmatpush1.bf16.msra.mxu0 0
        %3512 = vmatprep.mubr.bf16.mxu0 0
        %3513 = vmatmul.mubr.bf16.gmra.mrb[0].mxu0 %v1083
        %v3514 = vpop.f32.mrb[0].mxu0
        %v3515 = vadd.f32 0.0, %v3514
        %v3516 = vpop.f32.mrb[0].mxu0
        %v3517 = vadd.f32 0.0, %v3516
        %v3518 = vpop.f32.mrb[0].mxu0
        %v3519 = vpop.f32.mrb[0].mxu0
        %3520 = vdwg.mxu0
        %v3521 = vadd.f32 %v3286, %v3392
        %v3522 = vadd.f32 %v3287, %v3394
        %v3523 = vadd.f32 %v3288, %v3433
        %v3524 = vadd.f32 %v3289, %v3435
        %v3525 = vadd.f32 %v3290, %v3474
        %v3526 = vadd.f32 %v3291, %v3476
        %v3527 = vadd.f32 %v3292, %v3515
        %v3528 = vadd.f32 %v3293, %v3517
        %s3529 = scalar_lea.vmem %s264, 24 [#allocation2]
        %v3530 = vld [vmem:[%s3529] sm:$0xff]
        %v3531 = vld [vmem:[%s3529 + $0x8] sm:$0xff]
        %v3534 = vcombine.high %v3530, %v3530
        %v3536 = vunpack.c.l.s4 1983009808
        %v3537 = vunpack.c.0.s8 %v3536
        %v3538 = vlaneseq
        %v3539 = vshrl.u32 %v3538, 7
        %v3540 = vsub.s32 %v3537, %v3539
        %v3541 = vrot.slane %v3530, %v3540
        %v3543 = vunpack.c.l.s4 1983009808
        %v3544 = vunpack.c.0.s8 %v3543
        %v3545 = vlaneseq
        %v3546 = vshrl.u32 %v3545, 7
        %v3547 = vsub.s32 %v3544, %v3546
        %v3548 = vrot.slane %v3534, %v3547
        %v3549 = vcombine.high %v3541, %v3541
        %v3550 = vcombine.high %v3548, %v3548
        %v3551 = vcombine.high %v3531, %v3531
        %v3553 = vunpack.c.l.s4 1983009808
        %v3554 = vunpack.c.0.s8 %v3553
        %v3555 = vlaneseq
        %v3556 = vshrl.u32 %v3555, 7
        %v3557 = vsub.s32 %v3554, %v3556
        %v3558 = vrot.slane %v3531, %v3557
        %v3560 = vunpack.c.l.s4 1983009808
        %v3561 = vunpack.c.0.s8 %v3560
        %v3562 = vlaneseq
        %v3563 = vshrl.u32 %v3562, 7
        %v3564 = vsub.s32 %v3561, %v3563
        %v3565 = vrot.slane %v3551, %v3564
        %v3566 = vcombine.high %v3558, %v3558
        %v3567 = vcombine.high %v3565, %v3565
        %v3569 = vsel %vm389, %v3541, 0
        %v3572 = vsel %vm389, %v3549, 0
        %v3575 = vsel %vm389, %v3548, 0
        %v3578 = vsel %vm389, %v3550, 0
        %v3581 = vsel %vm389, %v3558, 0
        %v3584 = vsel %vm389, %v3566, 0
        %v3587 = vsel %vm389, %v3565, 0
        %v3590 = vsel %vm389, %v3567, 0
        %3592 = vmatprep.subr.bf16.mxu0 %v3572
        %3593 = vmatpush1.bf16.msra.mxu0 %v3569
        %3594 = vmatprep.subr.bf16.mxu0 0
        %3595 = vmatpush1.bf16.msra.mxu0 0
        %3596 = vmatprep.subr.bf16.mxu0 0
        %3597 = vmatpush1.bf16.msra.mxu0 0
        %3598 = vmatprep.subr.bf16.mxu0 0
        %3599 = vmatpush1.bf16.msra.mxu0 0
        %3600 = vmatprep.subr.bf16.mxu0 0
        %3601 = vmatpush1.bf16.msra.mxu0 0
        %3602 = vmatprep.subr.bf16.mxu0 0
        %3603 = vmatpush1.bf16.msra.mxu0 0
        %3604 = vmatprep.subr.bf16.mxu0 0
        %3605 = vmatpush1.bf16.msra.mxu0 0
        %3606 = vmatprep.subr.bf16.mxu0 0
        %3607 = vmatpush1.bf16.msra.mxu0 0
        %3608 = vmatprep.subr.bf16.mxu0 0
        %3609 = vmatpush1.bf16.msra.mxu0 0
        %3610 = vmatprep.subr.bf16.mxu0 0
        %3611 = vmatpush1.bf16.msra.mxu0 0
        %3612 = vmatprep.subr.bf16.mxu0 0
        %3613 = vmatpush1.bf16.msra.mxu0 0
        %3614 = vmatprep.subr.bf16.mxu0 0
        %3615 = vmatpush1.bf16.msra.mxu0 0
        %3616 = vmatprep.subr.bf16.mxu0 0
        %3617 = vmatpush1.bf16.msra.mxu0 0
        %3618 = vmatprep.subr.bf16.mxu0 0
        %3619 = vmatpush1.bf16.msra.mxu0 0
        %3620 = vmatprep.subr.bf16.mxu0 0
        %3621 = vmatpush1.bf16.msra.mxu0 0
        %3622 = vmatprep.subr.bf16.mxu0 0
        %3623 = vmatpush1.bf16.msra.mxu0 0
        %3624 = vmatprep.mubr.bf16.mxu0 0
        %3625 = vmatmul.mubr.bf16.gmra.mrb[0].mxu0 %v1321
        %v3626 = vpop.f32.mrb[0].mxu0
        %v3627 = vadd.f32 0.0, %v3626
        %v3628 = vpop.f32.mrb[0].mxu0
        %v3629 = vadd.f32 0.0, %v3628
        %v3630 = vpop.f32.mrb[0].mxu0
        %v3631 = vpop.f32.mrb[0].mxu0
        %3632 = vdwg.mxu0
        %3633 = vmatprep.subr.bf16.mxu0 %v3578
        %3634 = vmatpush1.bf16.msra.mxu0 %v3575
        %3635 = vmatprep.subr.bf16.mxu0 0
        %3636 = vmatpush1.bf16.msra.mxu0 0
        %3637 = vmatprep.subr.bf16.mxu0 0
        %3638 = vmatpush1.bf16.msra.mxu0 0
        %3639 = vmatprep.subr.bf16.mxu0 0
        %3640 = vmatpush1.bf16.msra.mxu0 0
        %3641 = vmatprep.subr.bf16.mxu0 0
        %3642 = vmatpush1.bf16.msra.mxu0 0
        %3643 = vmatprep.subr.bf16.mxu0 0
        %3644 = vmatpush1.bf16.msra.mxu0 0
        %3645 = vmatprep.subr.bf16.mxu0 0
        %3646 = vmatpush1.bf16.msra.mxu0 0
        %3647 = vmatprep.subr.bf16.mxu0 0
        %3648 = vmatpush1.bf16.msra.mxu0 0
        %3649 = vmatprep.subr.bf16.mxu0 0
        %3650 = vmatpush1.bf16.msra.mxu0 0
        %3651 = vmatprep.subr.bf16.mxu0 0
        %3652 = vmatpush1.bf16.msra.mxu0 0
        %3653 = vmatprep.subr.bf16.mxu0 0
        %3654 = vmatpush1.bf16.msra.mxu0 0
        %3655 = vmatprep.subr.bf16.mxu0 0
        %3656 = vmatpush1.bf16.msra.mxu0 0
        %3657 = vmatprep.subr.bf16.mxu0 0
        %3658 = vmatpush1.bf16.msra.mxu0 0
        %3659 = vmatprep.subr.bf16.mxu0 0
        %3660 = vmatpush1.bf16.msra.mxu0 0
        %3661 = vmatprep.subr.bf16.mxu0 0
        %3662 = vmatpush1.bf16.msra.mxu0 0
        %3663 = vmatprep.subr.bf16.mxu0 0
        %3664 = vmatpush1.bf16.msra.mxu0 0
        %3665 = vmatprep.mubr.bf16.mxu0 0
        %3666 = vmatmul.mubr.bf16.gmra.mrb[0].mxu0 %v1321
        %v3667 = vpop.f32.mrb[0].mxu0
        %v3668 = vadd.f32 0.0, %v3667
        %v3669 = vpop.f32.mrb[0].mxu0
        %v3670 = vadd.f32 0.0, %v3669
        %v3671 = vpop.f32.mrb[0].mxu0
        %v3672 = vpop.f32.mrb[0].mxu0
        %3673 = vdwg.mxu0
        %3674 = vmatprep.subr.bf16.mxu0 %v3584
        %3675 = vmatpush1.bf16.msra.mxu0 %v3581
        %3676 = vmatprep.subr.bf16.mxu0 0
        %3677 = vmatpush1.bf16.msra.mxu0 0
        %3678 = vmatprep.subr.bf16.mxu0 0
        %3679 = vmatpush1.bf16.msra.mxu0 0
        %3680 = vmatprep.subr.bf16.mxu0 0
        %3681 = vmatpush1.bf16.msra.mxu0 0
        %3682 = vmatprep.subr.bf16.mxu0 0
        %3683 = vmatpush1.bf16.msra.mxu0 0
        %3684 = vmatprep.subr.bf16.mxu0 0
        %3685 = vmatpush1.bf16.msra.mxu0 0
        %3686 = vmatprep.subr.bf16.mxu0 0
        %3687 = vmatpush1.bf16.msra.mxu0 0
        %3688 = vmatprep.subr.bf16.mxu0 0
        %3689 = vmatpush1.bf16.msra.mxu0 0
        %3690 = vmatprep.subr.bf16.mxu0 0
        %3691 = vmatpush1.bf16.msra.mxu0 0
        %3692 = vmatprep.subr.bf16.mxu0 0
        %3693 = vmatpush1.bf16.msra.mxu0 0
        %3694 = vmatprep.subr.bf16.mxu0 0
        %3695 = vmatpush1.bf16.msra.mxu0 0
        %3696 = vmatprep.subr.bf16.mxu0 0
        %3697 = vmatpush1.bf16.msra.mxu0 0
        %3698 = vmatprep.subr.bf16.mxu0 0
        %3699 = vmatpush1.bf16.msra.mxu0 0
        %3700 = vmatprep.subr.bf16.mxu0 0
        %3701 = vmatpush1.bf16.msra.mxu0 0
        %3702 = vmatprep.subr.bf16.mxu0 0
        %3703 = vmatpush1.bf16.msra.mxu0 0
        %3704 = vmatprep.subr.bf16.mxu0 0
        %3705 = vmatpush1.bf16.msra.mxu0 0
        %3706 = vmatprep.mubr.bf16.mxu0 0
        %3707 = vmatmul.mubr.bf16.gmra.mrb[0].mxu0 %v1321
        %v3708 = vpop.f32.mrb[0].mxu0
        %v3709 = vadd.f32 0.0, %v3708
        %v3710 = vpop.f32.mrb[0].mxu0
        %v3711 = vadd.f32 0.0, %v3710
        %v3712 = vpop.f32.mrb[0].mxu0
        %v3713 = vpop.f32.mrb[0].mxu0
        %3714 = vdwg.mxu0
        %3715 = vmatprep.subr.bf16.mxu0 %v3590
        %3716 = vmatpush1.bf16.msra.mxu0 %v3587
        %3717 = vmatprep.subr.bf16.mxu0 0
        %3718 = vmatpush1.bf16.msra.mxu0 0
        %3719 = vmatprep.subr.bf16.mxu0 0
        %3720 = vmatpush1.bf16.msra.mxu0 0
        %3721 = vmatprep.subr.bf16.mxu0 0
        %3722 = vmatpush1.bf16.msra.mxu0 0
        %3723 = vmatprep.subr.bf16.mxu0 0
        %3724 = vmatpush1.bf16.msra.mxu0 0
        %3725 = vmatprep.subr.bf16.mxu0 0
        %3726 = vmatpush1.bf16.msra.mxu0 0
        %3727 = vmatprep.subr.bf16.mxu0 0
        %3728 = vmatpush1.bf16.msra.mxu0 0
        %3729 = vmatprep.subr.bf16.mxu0 0
        %3730 = vmatpush1.bf16.msra.mxu0 0
        %3731 = vmatprep.subr.bf16.mxu0 0
        %3732 = vmatpush1.bf16.msra.mxu0 0
        %3733 = vmatprep.subr.bf16.mxu0 0
        %3734 = vmatpush1.bf16.msra.mxu0 0
        %3735 = vmatprep.subr.bf16.mxu0 0
        %3736 = vmatpush1.bf16.msra.mxu0 0
        %3737 = vmatprep.subr.bf16.mxu0 0
        %3738 = vmatpush1.bf16.msra.mxu0 0
        %3739 = vmatprep.subr.bf16.mxu0 0
        %3740 = vmatpush1.bf16.msra.mxu0 0
        %3741 = vmatprep.subr.bf16.mxu0 0
        %3742 = vmatpush1.bf16.msra.mxu0 0
        %3743 = vmatprep.subr.bf16.mxu0 0
        %3744 = vmatpush1.bf16.msra.mxu0 0
        %3745 = vmatprep.subr.bf16.mxu0 0
        %3746 = vmatpush1.bf16.msra.mxu0 0
        %3747 = vmatprep.mubr.bf16.mxu0 0
        %3748 = vmatmul.mubr.bf16.gmra.mrb[0].mxu0 %v1321
        %v3749 = vpop.f32.mrb[0].mxu0
        %v3750 = vadd.f32 0.0, %v3749
        %v3751 = vpop.f32.mrb[0].mxu0
        %v3752 = vadd.f32 0.0, %v3751
        %v3753 = vpop.f32.mrb[0].mxu0
        %v3754 = vpop.f32.mrb[0].mxu0
        %3755 = vdwg.mxu0
        %v3756 = vadd.f32 %v3521, %v3627
        %v3757 = vadd.f32 %v3522, %v3629
        %v3758 = vadd.f32 %v3523, %v3668
        %v3759 = vadd.f32 %v3524, %v3670
        %v3760 = vadd.f32 %v3525, %v3709
        %v3761 = vadd.f32 %v3526, %v3711
        %v3762 = vadd.f32 %v3527, %v3750
        %v3763 = vadd.f32 %v3528, %v3752
        %s3764 = scalar_lea.vmem %s264, 26 [#allocation2]
        %v3765 = vld [vmem:[%s3764] sm:$0xff]
        %v3766 = vld [vmem:[%s3764 + $0x8] sm:$0xff]
        %v3769 = vcombine.high %v3765, %v3765
        %v3771 = vunpack.c.l.s4 1983009808
        %v3772 = vunpack.c.0.s8 %v3771
        %v3773 = vlaneseq
        %v3774 = vshrl.u32 %v3773, 7
        %v3775 = vsub.s32 %v3772, %v3774
        %v3776 = vrot.slane %v3765, %v3775
        %v3778 = vunpack.c.l.s4 1983009808
        %v3779 = vunpack.c.0.s8 %v3778
        %v3780 = vlaneseq
        %v3781 = vshrl.u32 %v3780, 7
        %v3782 = vsub.s32 %v3779, %v3781
        %v3783 = vrot.slane %v3769, %v3782
        %v3784 = vcombine.high %v3776, %v3776
        %v3785 = vcombine.high %v3783, %v3783
        %v3786 = vcombine.high %v3766, %v3766
        %v3788 = vunpack.c.l.s4 1983009808
        %v3789 = vunpack.c.0.s8 %v3788
        %v3790 = vlaneseq
        %v3791 = vshrl.u32 %v3790, 7
        %v3792 = vsub.s32 %v3789, %v3791
        %v3793 = vrot.slane %v3766, %v3792
        %v3795 = vunpack.c.l.s4 1983009808
        %v3796 = vunpack.c.0.s8 %v3795
        %v3797 = vlaneseq
        %v3798 = vshrl.u32 %v3797, 7
        %v3799 = vsub.s32 %v3796, %v3798
        %v3800 = vrot.slane %v3786, %v3799
        %v3801 = vcombine.high %v3793, %v3793
        %v3802 = vcombine.high %v3800, %v3800
        %v3804 = vsel %vm389, %v3776, 0
        %v3807 = vsel %vm389, %v3784, 0
        %v3810 = vsel %vm389, %v3783, 0
        %v3813 = vsel %vm389, %v3785, 0
        %v3816 = vsel %vm389, %v3793, 0
        %v3819 = vsel %vm389, %v3801, 0
        %v3822 = vsel %vm389, %v3800, 0
        %v3825 = vsel %vm389, %v3802, 0
        %3827 = vmatprep.subr.bf16.mxu0 %v3807
        %3828 = vmatpush1.bf16.msra.mxu0 %v3804
        %3829 = vmatprep.subr.bf16.mxu0 0
        %3830 = vmatpush1.bf16.msra.mxu0 0
        %3831 = vmatprep.subr.bf16.mxu0 0
        %3832 = vmatpush1.bf16.msra.mxu0 0
        %3833 = vmatprep.subr.bf16.mxu0 0
        %3834 = vmatpush1.bf16.msra.mxu0 0
        %3835 = vmatprep.subr.bf16.mxu0 0
        %3836 = vmatpush1.bf16.msra.mxu0 0
        %3837 = vmatprep.subr.bf16.mxu0 0
        %3838 = vmatpush1.bf16.msra.mxu0 0
        %3839 = vmatprep.subr.bf16.mxu0 0
        %3840 = vmatpush1.bf16.msra.mxu0 0
        %3841 = vmatprep.subr.bf16.mxu0 0
        %3842 = vmatpush1.bf16.msra.mxu0 0
        %3843 = vmatprep.subr.bf16.mxu0 0
        %3844 = vmatpush1.bf16.msra.mxu0 0
        %3845 = vmatprep.subr.bf16.mxu0 0
        %3846 = vmatpush1.bf16.msra.mxu0 0
        %3847 = vmatprep.subr.bf16.mxu0 0
        %3848 = vmatpush1.bf16.msra.mxu0 0
        %3849 = vmatprep.subr.bf16.mxu0 0
        %3850 = vmatpush1.bf16.msra.mxu0 0
        %3851 = vmatprep.subr.bf16.mxu0 0
        %3852 = vmatpush1.bf16.msra.mxu0 0
        %3853 = vmatprep.subr.bf16.mxu0 0
        %3854 = vmatpush1.bf16.msra.mxu0 0
        %3855 = vmatprep.subr.bf16.mxu0 0
        %3856 = vmatpush1.bf16.msra.mxu0 0
        %3857 = vmatprep.subr.bf16.mxu0 0
        %3858 = vmatpush1.bf16.msra.mxu0 0
        %3859 = vmatprep.mubr.bf16.mxu0 0
        %3860 = vmatmul.mubr.bf16.gmra.mrb[0].mxu0 %v1559
        %v3861 = vpop.f32.mrb[0].mxu0
        %v3862 = vadd.f32 0.0, %v3861
        %v3863 = vpop.f32.mrb[0].mxu0
        %v3864 = vadd.f32 0.0, %v3863
        %v3865 = vpop.f32.mrb[0].mxu0
        %v3866 = vpop.f32.mrb[0].mxu0
        %3867 = vdwg.mxu0
        %3868 = vmatprep.subr.bf16.mxu0 %v3813
        %3869 = vmatpush1.bf16.msra.mxu0 %v3810
        %3870 = vmatprep.subr.bf16.mxu0 0
        %3871 = vmatpush1.bf16.msra.mxu0 0
        %3872 = vmatprep.subr.bf16.mxu0 0
        %3873 = vmatpush1.bf16.msra.mxu0 0
        %3874 = vmatprep.subr.bf16.mxu0 0
        %3875 = vmatpush1.bf16.msra.mxu0 0
        %3876 = vmatprep.subr.bf16.mxu0 0
        %3877 = vmatpush1.bf16.msra.mxu0 0
        %3878 = vmatprep.subr.bf16.mxu0 0
        %3879 = vmatpush1.bf16.msra.mxu0 0
        %3880 = vmatprep.subr.bf16.mxu0 0
        %3881 = vmatpush1.bf16.msra.mxu0 0
        %3882 = vmatprep.subr.bf16.mxu0 0
        %3883 = vmatpush1.bf16.msra.mxu0 0
        %3884 = vmatprep.subr.bf16.mxu0 0
        %3885 = vmatpush1.bf16.msra.mxu0 0
        %3886 = vmatprep.subr.bf16.mxu0 0
        %3887 = vmatpush1.bf16.msra.mxu0 0
        %3888 = vmatprep.subr.bf16.mxu0 0
        %3889 = vmatpush1.bf16.msra.mxu0 0
        %3890 = vmatprep.subr.bf16.mxu0 0
        %3891 = vmatpush1.bf16.msra.mxu0 0
        %3892 = vmatprep.subr.bf16.mxu0 0
        %3893 = vmatpush1.bf16.msra.mxu0 0
        %3894 = vmatprep.subr.bf16.mxu0 0
        %3895 = vmatpush1.bf16.msra.mxu0 0
        %3896 = vmatprep.subr.bf16.mxu0 0
        %3897 = vmatpush1.bf16.msra.mxu0 0
        %3898 = vmatprep.subr.bf16.mxu0 0
        %3899 = vmatpush1.bf16.msra.mxu0 0
        %3900 = vmatprep.mubr.bf16.mxu0 0
        %3901 = vmatmul.mubr.bf16.gmra.mrb[0].mxu0 %v1559
        %v3902 = vpop.f32.mrb[0].mxu0
        %v3903 = vadd.f32 0.0, %v3902
        %v3904 = vpop.f32.mrb[0].mxu0
        %v3905 = vadd.f32 0.0, %v3904
        %v3906 = vpop.f32.mrb[0].mxu0
        %v3907 = vpop.f32.mrb[0].mxu0
        %3908 = vdwg.mxu0
        %3909 = vmatprep.subr.bf16.mxu0 %v3819
        %3910 = vmatpush1.bf16.msra.mxu0 %v3816
        %3911 = vmatprep.subr.bf16.mxu0 0
        %3912 = vmatpush1.bf16.msra.mxu0 0
        %3913 = vmatprep.subr.bf16.mxu0 0
        %3914 = vmatpush1.bf16.msra.mxu0 0
        %3915 = vmatprep.subr.bf16.mxu0 0
        %3916 = vmatpush1.bf16.msra.mxu0 0
        %3917 = vmatprep.subr.bf16.mxu0 0
        %3918 = vmatpush1.bf16.msra.mxu0 0
        %3919 = vmatprep.subr.bf16.mxu0 0
        %3920 = vmatpush1.bf16.msra.mxu0 0
        %3921 = vmatprep.subr.bf16.mxu0 0
        %3922 = vmatpush1.bf16.msra.mxu0 0
        %3923 = vmatprep.subr.bf16.mxu0 0
        %3924 = vmatpush1.bf16.msra.mxu0 0
        %3925 = vmatprep.subr.bf16.mxu0 0
        %3926 = vmatpush1.bf16.msra.mxu0 0
        %3927 = vmatprep.subr.bf16.mxu0 0
        %3928 = vmatpush1.bf16.msra.mxu0 0
        %3929 = vmatprep.subr.bf16.mxu0 0
        %3930 = vmatpush1.bf16.msra.mxu0 0
        %3931 = vmatprep.subr.bf16.mxu0 0
        %3932 = vmatpush1.bf16.msra.mxu0 0
        %3933 = vmatprep.subr.bf16.mxu0 0
        %3934 = vmatpush1.bf16.msra.mxu0 0
        %3935 = vmatprep.subr.bf16.mxu0 0
        %3936 = vmatpush1.bf16.msra.mxu0 0
        %3937 = vmatprep.subr.bf16.mxu0 0
        %3938 = vmatpush1.bf16.msra.mxu0 0
        %3939 = vmatprep.subr.bf16.mxu0 0
        %3940 = vmatpush1.bf16.msra.mxu0 0
        %3941 = vmatprep.mubr.bf16.mxu0 0
        %3942 = vmatmul.mubr.bf16.gmra.mrb[0].mxu0 %v1559
        %v3943 = vpop.f32.mrb[0].mxu0
        %v3944 = vadd.f32 0.0, %v3943
        %v3945 = vpop.f32.mrb[0].mxu0
        %v3946 = vadd.f32 0.0, %v3945
        %v3947 = vpop.f32.mrb[0].mxu0
        %v3948 = vpop.f32.mrb[0].mxu0
        %3949 = vdwg.mxu0
        %3950 = vmatprep.subr.bf16.mxu0 %v3825
        %3951 = vmatpush1.bf16.msra.mxu0 %v3822
        %3952 = vmatprep.subr.bf16.mxu0 0
        %3953 = vmatpush1.bf16.msra.mxu0 0
        %3954 = vmatprep.subr.bf16.mxu0 0
        %3955 = vmatpush1.bf16.msra.mxu0 0
        %3956 = vmatprep.subr.bf16.mxu0 0
        %3957 = vmatpush1.bf16.msra.mxu0 0
        %3958 = vmatprep.subr.bf16.mxu0 0
        %3959 = vmatpush1.bf16.msra.mxu0 0
        %3960 = vmatprep.subr.bf16.mxu0 0
        %3961 = vmatpush1.bf16.msra.mxu0 0
        %3962 = vmatprep.subr.bf16.mxu0 0
        %3963 = vmatpush1.bf16.msra.mxu0 0
        %3964 = vmatprep.subr.bf16.mxu0 0
        %3965 = vmatpush1.bf16.msra.mxu0 0
        %3966 = vmatprep.subr.bf16.mxu0 0
        %3967 = vmatpush1.bf16.msra.mxu0 0
        %3968 = vmatprep.subr.bf16.mxu0 0
        %3969 = vmatpush1.bf16.msra.mxu0 0
        %3970 = vmatprep.subr.bf16.mxu0 0
        %3971 = vmatpush1.bf16.msra.mxu0 0
        %3972 = vmatprep.subr.bf16.mxu0 0
        %3973 = vmatpush1.bf16.msra.mxu0 0
        %3974 = vmatprep.subr.bf16.mxu0 0
        %3975 = vmatpush1.bf16.msra.mxu0 0
        %3976 = vmatprep.subr.bf16.mxu0 0
        %3977 = vmatpush1.bf16.msra.mxu0 0
        %3978 = vmatprep.subr.bf16.mxu0 0
        %3979 = vmatpush1.bf16.msra.mxu0 0
        %3980 = vmatprep.subr.bf16.mxu0 0
        %3981 = vmatpush1.bf16.msra.mxu0 0
        %3982 = vmatprep.mubr.bf16.mxu0 0
        %3983 = vmatmul.mubr.bf16.gmra.mrb[0].mxu0 %v1559
        %v3984 = vpop.f32.mrb[0].mxu0
        %v3985 = vadd.f32 0.0, %v3984
        %v3986 = vpop.f32.mrb[0].mxu0
        %v3987 = vadd.f32 0.0, %v3986
        %v3988 = vpop.f32.mrb[0].mxu0
        %v3989 = vpop.f32.mrb[0].mxu0
        %3990 = vdwg.mxu0
        %v3991 = vadd.f32 %v3756, %v3862
        %v3992 = vadd.f32 %v3757, %v3864
        %v3993 = vadd.f32 %v3758, %v3903
        %v3994 = vadd.f32 %v3759, %v3905
        %v3995 = vadd.f32 %v3760, %v3944
        %v3996 = vadd.f32 %v3761, %v3946
        %v3997 = vadd.f32 %v3762, %v3985
        %v3998 = vadd.f32 %v3763, %v3987
        %s3999 = scalar_lea.vmem %s264, 28 [#allocation2]
        %v4000 = vld [vmem:[%s3999] sm:$0xff]
        %v4001 = vld [vmem:[%s3999 + $0x8] sm:$0xff]
        %v4004 = vcombine.high %v4000, %v4000
        %v4006 = vunpack.c.l.s4 1983009808
        %v4007 = vunpack.c.0.s8 %v4006
        %v4008 = vlaneseq
        %v4009 = vshrl.u32 %v4008, 7
        %v4010 = vsub.s32 %v4007, %v4009
        %v4011 = vrot.slane %v4000, %v4010
        %v4013 = vunpack.c.l.s4 1983009808
        %v4014 = vunpack.c.0.s8 %v4013
        %v4015 = vlaneseq
        %v4016 = vshrl.u32 %v4015, 7
        %v4017 = vsub.s32 %v4014, %v4016
        %v4018 = vrot.slane %v4004, %v4017
        %v4019 = vcombine.high %v4011, %v4011
        %v4020 = vcombine.high %v4018, %v4018
        %v4021 = vcombine.high %v4001, %v4001
        %v4023 = vunpack.c.l.s4 1983009808
        %v4024 = vunpack.c.0.s8 %v4023
        %v4025 = vlaneseq
        %v4026 = vshrl.u32 %v4025, 7
        %v4027 = vsub.s32 %v4024, %v4026
        %v4028 = vrot.slane %v4001, %v4027
        %v4030 = vunpack.c.l.s4 1983009808
        %v4031 = vunpack.c.0.s8 %v4030
        %v4032 = vlaneseq
        %v4033 = vshrl.u32 %v4032, 7
        %v4034 = vsub.s32 %v4031, %v4033
        %v4035 = vrot.slane %v4021, %v4034
        %v4036 = vcombine.high %v4028, %v4028
        %v4037 = vcombine.high %v4035, %v4035
        %v4039 = vsel %vm389, %v4011, 0
        %v4042 = vsel %vm389, %v4019, 0
        %v4045 = vsel %vm389, %v4018, 0
        %v4048 = vsel %vm389, %v4020, 0
        %v4051 = vsel %vm389, %v4028, 0
        %v4054 = vsel %vm389, %v4036, 0
        %v4057 = vsel %vm389, %v4035, 0
        %v4060 = vsel %vm389, %v4037, 0
        %4062 = vmatprep.subr.bf16.mxu0 %v4042
        %4063 = vmatpush1.bf16.msra.mxu0 %v4039
        %4064 = vmatprep.subr.bf16.mxu0 0
        %4065 = vmatpush1.bf16.msra.mxu0 0
        %4066 = vmatprep.subr.bf16.mxu0 0
        %4067 = vmatpush1.bf16.msra.mxu0 0
        %4068 = vmatprep.subr.bf16.mxu0 0
        %4069 = vmatpush1.bf16.msra.mxu0 0
        %4070 = vmatprep.subr.bf16.mxu0 0
        %4071 = vmatpush1.bf16.msra.mxu0 0
        %4072 = vmatprep.subr.bf16.mxu0 0
        %4073 = vmatpush1.bf16.msra.mxu0 0
        %4074 = vmatprep.subr.bf16.mxu0 0
        %4075 = vmatpush1.bf16.msra.mxu0 0
        %4076 = vmatprep.subr.bf16.mxu0 0
        %4077 = vmatpush1.bf16.msra.mxu0 0
        %4078 = vmatprep.subr.bf16.mxu0 0
        %4079 = vmatpush1.bf16.msra.mxu0 0
        %4080 = vmatprep.subr.bf16.mxu0 0
        %4081 = vmatpush1.bf16.msra.mxu0 0
        %4082 = vmatprep.subr.bf16.mxu0 0
        %4083 = vmatpush1.bf16.msra.mxu0 0
        %4084 = vmatprep.subr.bf16.mxu0 0
        %4085 = vmatpush1.bf16.msra.mxu0 0
        %4086 = vmatprep.subr.bf16.mxu0 0
        %4087 = vmatpush1.bf16.msra.mxu0 0
        %4088 = vmatprep.subr.bf16.mxu0 0
        %4089 = vmatpush1.bf16.msra.mxu0 0
        %4090 = vmatprep.subr.bf16.mxu0 0
        %4091 = vmatpush1.bf16.msra.mxu0 0
        %4092 = vmatprep.subr.bf16.mxu0 0
        %4093 = vmatpush1.bf16.msra.mxu0 0
        %4094 = vmatprep.mubr.bf16.mxu0 0
        %4095 = vmatmul.mubr.bf16.gmra.mrb[0].mxu0 %v1797
        %v4096 = vpop.f32.mrb[0].mxu0
        %v4097 = vadd.f32 0.0, %v4096
        %v4098 = vpop.f32.mrb[0].mxu0
        %v4099 = vadd.f32 0.0, %v4098
        %v4100 = vpop.f32.mrb[0].mxu0
        %v4101 = vpop.f32.mrb[0].mxu0
        %4102 = vdwg.mxu0
        %4103 = vmatprep.subr.bf16.mxu0 %v4048
        %4104 = vmatpush1.bf16.msra.mxu0 %v4045
        %4105 = vmatprep.subr.bf16.mxu0 0
        %4106 = vmatpush1.bf16.msra.mxu0 0
        %4107 = vmatprep.subr.bf16.mxu0 0
        %4108 = vmatpush1.bf16.msra.mxu0 0
        %4109 = vmatprep.subr.bf16.mxu0 0
        %4110 = vmatpush1.bf16.msra.mxu0 0
        %4111 = vmatprep.subr.bf16.mxu0 0
        %4112 = vmatpush1.bf16.msra.mxu0 0
        %4113 = vmatprep.subr.bf16.mxu0 0
        %4114 = vmatpush1.bf16.msra.mxu0 0
        %4115 = vmatprep.subr.bf16.mxu0 0
        %4116 = vmatpush1.bf16.msra.mxu0 0
        %4117 = vmatprep.subr.bf16.mxu0 0
        %4118 = vmatpush1.bf16.msra.mxu0 0
        %4119 = vmatprep.subr.bf16.mxu0 0
        %4120 = vmatpush1.bf16.msra.mxu0 0
        %4121 = vmatprep.subr.bf16.mxu0 0
        %4122 = vmatpush1.bf16.msra.mxu0 0
        %4123 = vmatprep.subr.bf16.mxu0 0
        %4124 = vmatpush1.bf16.msra.mxu0 0
        %4125 = vmatprep.subr.bf16.mxu0 0
        %4126 = vmatpush1.bf16.msra.mxu0 0
        %4127 = vmatprep.subr.bf16.mxu0 0
        %4128 = vmatpush1.bf16.msra.mxu0 0
        %4129 = vmatprep.subr.bf16.mxu0 0
        %4130 = vmatpush1.bf16.msra.mxu0 0
        %4131 = vmatprep.subr.bf16.mxu0 0
        %4132 = vmatpush1.bf16.msra.mxu0 0
        %4133 = vmatprep.subr.bf16.mxu0 0
        %4134 = vmatpush1.bf16.msra.mxu0 0
        %4135 = vmatprep.mubr.bf16.mxu0 0
        %4136 = vmatmul.mubr.bf16.gmra.mrb[0].mxu0 %v1797
        %v4137 = vpop.f32.mrb[0].mxu0
        %v4138 = vadd.f32 0.0, %v4137
        %v4139 = vpop.f32.mrb[0].mxu0
        %v4140 = vadd.f32 0.0, %v4139
        %v4141 = vpop.f32.mrb[0].mxu0
        %v4142 = vpop.f32.mrb[0].mxu0
        %4143 = vdwg.mxu0
        %4144 = vmatprep.subr.bf16.mxu0 %v4054
        %4145 = vmatpush1.bf16.msra.mxu0 %v4051
        %4146 = vmatprep.subr.bf16.mxu0 0
        %4147 = vmatpush1.bf16.msra.mxu0 0
        %4148 = vmatprep.subr.bf16.mxu0 0
        %4149 = vmatpush1.bf16.msra.mxu0 0
        %4150 = vmatprep.subr.bf16.mxu0 0
        %4151 = vmatpush1.bf16.msra.mxu0 0
        %4152 = vmatprep.subr.bf16.mxu0 0
        %4153 = vmatpush1.bf16.msra.mxu0 0
        %4154 = vmatprep.subr.bf16.mxu0 0
        %4155 = vmatpush1.bf16.msra.mxu0 0
        %4156 = vmatprep.subr.bf16.mxu0 0
        %4157 = vmatpush1.bf16.msra.mxu0 0
        %4158 = vmatprep.subr.bf16.mxu0 0
        %4159 = vmatpush1.bf16.msra.mxu0 0
        %4160 = vmatprep.subr.bf16.mxu0 0
        %4161 = vmatpush1.bf16.msra.mxu0 0
        %4162 = vmatprep.subr.bf16.mxu0 0
        %4163 = vmatpush1.bf16.msra.mxu0 0
        %4164 = vmatprep.subr.bf16.mxu0 0
        %4165 = vmatpush1.bf16.msra.mxu0 0
        %4166 = vmatprep.subr.bf16.mxu0 0
        %4167 = vmatpush1.bf16.msra.mxu0 0
        %4168 = vmatprep.subr.bf16.mxu0 0
        %4169 = vmatpush1.bf16.msra.mxu0 0
        %4170 = vmatprep.subr.bf16.mxu0 0
        %4171 = vmatpush1.bf16.msra.mxu0 0
        %4172 = vmatprep.subr.bf16.mxu0 0
        %4173 = vmatpush1.bf16.msra.mxu0 0
        %4174 = vmatprep.subr.bf16.mxu0 0
        %4175 = vmatpush1.bf16.msra.mxu0 0
        %4176 = vmatprep.mubr.bf16.mxu0 0
        %4177 = vmatmul.mubr.bf16.gmra.mrb[0].mxu0 %v1797
        %v4178 = vpop.f32.mrb[0].mxu0
        %v4179 = vadd.f32 0.0, %v4178
        %v4180 = vpop.f32.mrb[0].mxu0
        %v4181 = vadd.f32 0.0, %v4180
        %v4182 = vpop.f32.mrb[0].mxu0
        %v4183 = vpop.f32.mrb[0].mxu0
        %4184 = vdwg.mxu0
        %4185 = vmatprep.subr.bf16.mxu0 %v4060
        %4186 = vmatpush1.bf16.msra.mxu0 %v4057
        %4187 = vmatprep.subr.bf16.mxu0 0
        %4188 = vmatpush1.bf16.msra.mxu0 0
        %4189 = vmatprep.subr.bf16.mxu0 0
        %4190 = vmatpush1.bf16.msra.mxu0 0
        %4191 = vmatprep.subr.bf16.mxu0 0
        %4192 = vmatpush1.bf16.msra.mxu0 0
        %4193 = vmatprep.subr.bf16.mxu0 0
        %4194 = vmatpush1.bf16.msra.mxu0 0
        %4195 = vmatprep.subr.bf16.mxu0 0
        %4196 = vmatpush1.bf16.msra.mxu0 0
        %4197 = vmatprep.subr.bf16.mxu0 0
        %4198 = vmatpush1.bf16.msra.mxu0 0
        %4199 = vmatprep.subr.bf16.mxu0 0
        %4200 = vmatpush1.bf16.msra.mxu0 0
        %4201 = vmatprep.subr.bf16.mxu0 0
        %4202 = vmatpush1.bf16.msra.mxu0 0
        %4203 = vmatprep.subr.bf16.mxu0 0
        %4204 = vmatpush1.bf16.msra.mxu0 0
        %4205 = vmatprep.subr.bf16.mxu0 0
        %4206 = vmatpush1.bf16.msra.mxu0 0
        %4207 = vmatprep.subr.bf16.mxu0 0
        %4208 = vmatpush1.bf16.msra.mxu0 0
        %4209 = vmatprep.subr.bf16.mxu0 0
        %4210 = vmatpush1.bf16.msra.mxu0 0
        %4211 = vmatprep.subr.bf16.mxu0 0
        %4212 = vmatpush1.bf16.msra.mxu0 0
        %4213 = vmatprep.subr.bf16.mxu0 0
        %4214 = vmatpush1.bf16.msra.mxu0 0
        %4215 = vmatprep.subr.bf16.mxu0 0
        %4216 = vmatpush1.bf16.msra.mxu0 0
        %4217 = vmatprep.mubr.bf16.mxu0 0
        %4218 = vmatmul.mubr.bf16.gmra.mrb[0].mxu0 %v1797
        %v4219 = vpop.f32.mrb[0].mxu0
        %v4220 = vadd.f32 0.0, %v4219
        %v4221 = vpop.f32.mrb[0].mxu0
        %v4222 = vadd.f32 0.0, %v4221
        %v4223 = vpop.f32.mrb[0].mxu0
        %v4224 = vpop.f32.mrb[0].mxu0
        %4225 = vdwg.mxu0
        %v4226 = vadd.f32 %v3991, %v4097
        %v4227 = vadd.f32 %v3992, %v4099
        %v4228 = vadd.f32 %v3993, %v4138
        %v4229 = vadd.f32 %v3994, %v4140
        %v4230 = vadd.f32 %v3995, %v4179
        %v4231 = vadd.f32 %v3996, %v4181
        %v4232 = vadd.f32 %v3997, %v4220
        %v4233 = vadd.f32 %v3998, %v4222
        %s4234 = scalar_lea.vmem %s264, 30 [#allocation2]
        %v4235 = vld [vmem:[%s4234] sm:$0xff]
        %v4236 = vld [vmem:[%s4234 + $0x8] sm:$0xff]
        %v4239 = vcombine.high %v4235, %v4235
        %v4241 = vunpack.c.l.s4 1983009808
        %v4242 = vunpack.c.0.s8 %v4241
        %v4243 = vlaneseq
        %v4244 = vshrl.u32 %v4243, 7
        %v4245 = vsub.s32 %v4242, %v4244
        %v4246 = vrot.slane %v4235, %v4245
        %v4248 = vunpack.c.l.s4 1983009808
        %v4249 = vunpack.c.0.s8 %v4248
        %v4250 = vlaneseq
        %v4251 = vshrl.u32 %v4250, 7
        %v4252 = vsub.s32 %v4249, %v4251
        %v4253 = vrot.slane %v4239, %v4252
        %v4254 = vcombine.high %v4246, %v4246
        %v4255 = vcombine.high %v4253, %v4253
        %v4256 = vcombine.high %v4236, %v4236
        %v4258 = vunpack.c.l.s4 1983009808
        %v4259 = vunpack.c.0.s8 %v4258
        %v4260 = vlaneseq
        %v4261 = vshrl.u32 %v4260, 7
        %v4262 = vsub.s32 %v4259, %v4261
        %v4263 = vrot.slane %v4236, %v4262
        %v4265 = vunpack.c.l.s4 1983009808
        %v4266 = vunpack.c.0.s8 %v4265
        %v4267 = vlaneseq
        %v4268 = vshrl.u32 %v4267, 7
        %v4269 = vsub.s32 %v4266, %v4268
        %v4270 = vrot.slane %v4256, %v4269
        %v4271 = vcombine.high %v4263, %v4263
        %v4272 = vcombine.high %v4270, %v4270
        %v4274 = vsel %vm389, %v4246, 0
        %v4277 = vsel %vm389, %v4254, 0
        %v4280 = vsel %vm389, %v4253, 0
        %v4283 = vsel %vm389, %v4255, 0
        %v4286 = vsel %vm389, %v4263, 0
        %v4289 = vsel %vm389, %v4271, 0
        %v4292 = vsel %vm389, %v4270, 0
        %v4295 = vsel %vm389, %v4272, 0
        %4297 = vmatprep.subr.bf16.mxu0 %v4277
        %4298 = vmatpush1.bf16.msra.mxu0 %v4274
        %4299 = vmatprep.subr.bf16.mxu0 0
        %4300 = vmatpush1.bf16.msra.mxu0 0
        %4301 = vmatprep.subr.bf16.mxu0 0
        %4302 = vmatpush1.bf16.msra.mxu0 0
        %4303 = vmatprep.subr.bf16.mxu0 0
        %4304 = vmatpush1.bf16.msra.mxu0 0
        %4305 = vmatprep.subr.bf16.mxu0 0
        %4306 = vmatpush1.bf16.msra.mxu0 0
        %4307 = vmatprep.subr.bf16.mxu0 0
        %4308 = vmatpush1.bf16.msra.mxu0 0
        %4309 = vmatprep.subr.bf16.mxu0 0
        %4310 = vmatpush1.bf16.msra.mxu0 0
        %4311 = vmatprep.subr.bf16.mxu0 0
        %4312 = vmatpush1.bf16.msra.mxu0 0
        %4313 = vmatprep.subr.bf16.mxu0 0
        %4314 = vmatpush1.bf16.msra.mxu0 0
        %4315 = vmatprep.subr.bf16.mxu0 0
        %4316 = vmatpush1.bf16.msra.mxu0 0
        %4317 = vmatprep.subr.bf16.mxu0 0
        %4318 = vmatpush1.bf16.msra.mxu0 0
        %4319 = vmatprep.subr.bf16.mxu0 0
        %4320 = vmatpush1.bf16.msra.mxu0 0
        %4321 = vmatprep.subr.bf16.mxu0 0
        %4322 = vmatpush1.bf16.msra.mxu0 0
        %4323 = vmatprep.subr.bf16.mxu0 0
        %4324 = vmatpush1.bf16.msra.mxu0 0
        %4325 = vmatprep.subr.bf16.mxu0 0
        %4326 = vmatpush1.bf16.msra.mxu0 0
        %4327 = vmatprep.subr.bf16.mxu0 0
        %4328 = vmatpush1.bf16.msra.mxu0 0
        %4329 = vmatprep.mubr.bf16.mxu0 0
        %4330 = vmatmul.mubr.bf16.gmra.mrb[0].mxu0 %v2035
        %v4331 = vpop.f32.mrb[0].mxu0
        %v4332 = vadd.f32 0.0, %v4331
        %v4333 = vpop.f32.mrb[0].mxu0
        %v4334 = vadd.f32 0.0, %v4333
        %v4335 = vpop.f32.mrb[0].mxu0
        %v4336 = vpop.f32.mrb[0].mxu0
        %4337 = vdwg.mxu0
        %4338 = vmatprep.subr.bf16.mxu0 %v4283
        %4339 = vmatpush1.bf16.msra.mxu0 %v4280
        %4340 = vmatprep.subr.bf16.mxu0 0
        %4341 = vmatpush1.bf16.msra.mxu0 0
        %4342 = vmatprep.subr.bf16.mxu0 0
        %4343 = vmatpush1.bf16.msra.mxu0 0
        %4344 = vmatprep.subr.bf16.mxu0 0
        %4345 = vmatpush1.bf16.msra.mxu0 0
        %4346 = vmatprep.subr.bf16.mxu0 0
        %4347 = vmatpush1.bf16.msra.mxu0 0
        %4348 = vmatprep.subr.bf16.mxu0 0
        %4349 = vmatpush1.bf16.msra.mxu0 0
        %4350 = vmatprep.subr.bf16.mxu0 0
        %4351 = vmatpush1.bf16.msra.mxu0 0
        %4352 = vmatprep.subr.bf16.mxu0 0
        %4353 = vmatpush1.bf16.msra.mxu0 0
        %4354 = vmatprep.subr.bf16.mxu0 0
        %4355 = vmatpush1.bf16.msra.mxu0 0
        %4356 = vmatprep.subr.bf16.mxu0 0
        %4357 = vmatpush1.bf16.msra.mxu0 0
        %4358 = vmatprep.subr.bf16.mxu0 0
        %4359 = vmatpush1.bf16.msra.mxu0 0
        %4360 = vmatprep.subr.bf16.mxu0 0
        %4361 = vmatpush1.bf16.msra.mxu0 0
        %4362 = vmatprep.subr.bf16.mxu0 0
        %4363 = vmatpush1.bf16.msra.mxu0 0
        %4364 = vmatprep.subr.bf16.mxu0 0
        %4365 = vmatpush1.bf16.msra.mxu0 0
        %4366 = vmatprep.subr.bf16.mxu0 0
        %4367 = vmatpush1.bf16.msra.mxu0 0
        %4368 = vmatprep.subr.bf16.mxu0 0
        %4369 = vmatpush1.bf16.msra.mxu0 0
        %4370 = vmatprep.mubr.bf16.mxu0 0
        %4371 = vmatmul.mubr.bf16.gmra.mrb[0].mxu0 %v2035
        %v4372 = vpop.f32.mrb[0].mxu0
        %v4373 = vadd.f32 0.0, %v4372
        %v4374 = vpop.f32.mrb[0].mxu0
        %v4375 = vadd.f32 0.0, %v4374
        %v4376 = vpop.f32.mrb[0].mxu0
        %v4377 = vpop.f32.mrb[0].mxu0
        %4378 = vdwg.mxu0
        %4379 = vmatprep.subr.bf16.mxu0 %v4289
        %4380 = vmatpush1.bf16.msra.mxu0 %v4286
        %4381 = vmatprep.subr.bf16.mxu0 0
        %4382 = vmatpush1.bf16.msra.mxu0 0
        %4383 = vmatprep.subr.bf16.mxu0 0
        %4384 = vmatpush1.bf16.msra.mxu0 0
        %4385 = vmatprep.subr.bf16.mxu0 0
        %4386 = vmatpush1.bf16.msra.mxu0 0
        %4387 = vmatprep.subr.bf16.mxu0 0
        %4388 = vmatpush1.bf16.msra.mxu0 0
        %4389 = vmatprep.subr.bf16.mxu0 0
        %4390 = vmatpush1.bf16.msra.mxu0 0
        %4391 = vmatprep.subr.bf16.mxu0 0
        %4392 = vmatpush1.bf16.msra.mxu0 0
        %4393 = vmatprep.subr.bf16.mxu0 0
        %4394 = vmatpush1.bf16.msra.mxu0 0
        %4395 = vmatprep.subr.bf16.mxu0 0
        %4396 = vmatpush1.bf16.msra.mxu0 0
        %4397 = vmatprep.subr.bf16.mxu0 0
        %4398 = vmatpush1.bf16.msra.mxu0 0
        %4399 = vmatprep.subr.bf16.mxu0 0
        %4400 = vmatpush1.bf16.msra.mxu0 0
        %4401 = vmatprep.subr.bf16.mxu0 0
        %4402 = vmatpush1.bf16.msra.mxu0 0
        %4403 = vmatprep.subr.bf16.mxu0 0
        %4404 = vmatpush1.bf16.msra.mxu0 0
        %4405 = vmatprep.subr.bf16.mxu0 0
        %4406 = vmatpush1.bf16.msra.mxu0 0
        %4407 = vmatprep.subr.bf16.mxu0 0
        %4408 = vmatpush1.bf16.msra.mxu0 0
        %4409 = vmatprep.subr.bf16.mxu0 0
        %4410 = vmatpush1.bf16.msra.mxu0 0
        %4411 = vmatprep.mubr.bf16.mxu0 0
        %4412 = vmatmul.mubr.bf16.gmra.mrb[0].mxu0 %v2035
        %v4413 = vpop.f32.mrb[0].mxu0
        %v4414 = vadd.f32 0.0, %v4413
        %v4415 = vpop.f32.mrb[0].mxu0
        %v4416 = vadd.f32 0.0, %v4415
        %v4417 = vpop.f32.mrb[0].mxu0
        %v4418 = vpop.f32.mrb[0].mxu0
        %4419 = vdwg.mxu0
        %4420 = vmatprep.subr.bf16.mxu0 %v4295
        %4421 = vmatpush1.bf16.msra.mxu0 %v4292
        %4422 = vmatprep.subr.bf16.mxu0 0
        %4423 = vmatpush1.bf16.msra.mxu0 0
        %4424 = vmatprep.subr.bf16.mxu0 0
        %4425 = vmatpush1.bf16.msra.mxu0 0
        %4426 = vmatprep.subr.bf16.mxu0 0
        %4427 = vmatpush1.bf16.msra.mxu0 0
        %4428 = vmatprep.subr.bf16.mxu0 0
        %4429 = vmatpush1.bf16.msra.mxu0 0
        %4430 = vmatprep.subr.bf16.mxu0 0
        %4431 = vmatpush1.bf16.msra.mxu0 0
        %4432 = vmatprep.subr.bf16.mxu0 0
        %4433 = vmatpush1.bf16.msra.mxu0 0
        %4434 = vmatprep.subr.bf16.mxu0 0
        %4435 = vmatpush1.bf16.msra.mxu0 0
        %4436 = vmatprep.subr.bf16.mxu0 0
        %4437 = vmatpush1.bf16.msra.mxu0 0
        %4438 = vmatprep.subr.bf16.mxu0 0
        %4439 = vmatpush1.bf16.msra.mxu0 0
        %4440 = vmatprep.subr.bf16.mxu0 0
        %4441 = vmatpush1.bf16.msra.mxu0 0
        %4442 = vmatprep.subr.bf16.mxu0 0
        %4443 = vmatpush1.bf16.msra.mxu0 0
        %4444 = vmatprep.subr.bf16.mxu0 0
        %4445 = vmatpush1.bf16.msra.mxu0 0
        %4446 = vmatprep.subr.bf16.mxu0 0
        %4447 = vmatpush1.bf16.msra.mxu0 0
        %4448 = vmatprep.subr.bf16.mxu0 0
        %4449 = vmatpush1.bf16.msra.mxu0 0
        %4450 = vmatprep.subr.bf16.mxu0 0
        %4451 = vmatpush1.bf16.msra.mxu0 0
        %4452 = vmatprep.mubr.bf16.mxu0 0
        %4453 = vmatmul.mubr.bf16.gmra.mrb[0].mxu0 %v2035
        %v4454 = vpop.f32.mrb[0].mxu0
        %v4455 = vadd.f32 0.0, %v4454
        %v4456 = vpop.f32.mrb[0].mxu0
        %v4457 = vadd.f32 0.0, %v4456
        %v4458 = vpop.f32.mrb[0].mxu0
        %v4459 = vpop.f32.mrb[0].mxu0
        %4460 = vdwg.mxu0
        %v4461 = vadd.f32 %v4226, %v4332
        %v4462 = vadd.f32 %v4227, %v4334
        %v4463 = vadd.f32 %v4228, %v4373
        %v4464 = vadd.f32 %v4229, %v4375
        %v4465 = vadd.f32 %v4230, %v4414
        %v4466 = vadd.f32 %v4231, %v4416
        %v4467 = vadd.f32 %v4232, %v4455
        %v4468 = vadd.f32 %v4233, %v4457
        %s4469 = scalar_lea.vmem %s264, 32 [#allocation2]
        %v4470 = vld [vmem:[%s4469] sm:$0xff]
        %v4471 = vld [vmem:[%s4469 + $0x8] sm:$0xff]
        %v4474 = vcombine.high %v4470, %v4470
        %v4476 = vunpack.c.l.s4 1983009808
        %v4477 = vunpack.c.0.s8 %v4476
        %v4478 = vlaneseq
        %v4479 = vshrl.u32 %v4478, 7
        %v4480 = vsub.s32 %v4477, %v4479
        %v4481 = vrot.slane %v4470, %v4480
        %v4483 = vunpack.c.l.s4 1983009808
        %v4484 = vunpack.c.0.s8 %v4483
        %v4485 = vlaneseq
        %v4486 = vshrl.u32 %v4485, 7
        %v4487 = vsub.s32 %v4484, %v4486
        %v4488 = vrot.slane %v4474, %v4487
        %v4489 = vcombine.high %v4481, %v4481
        %v4490 = vcombine.high %v4488, %v4488
        %v4491 = vcombine.high %v4471, %v4471
        %v4493 = vunpack.c.l.s4 1983009808
        %v4494 = vunpack.c.0.s8 %v4493
        %v4495 = vlaneseq
        %v4496 = vshrl.u32 %v4495, 7
        %v4497 = vsub.s32 %v4494, %v4496
        %v4498 = vrot.slane %v4471, %v4497
        %v4500 = vunpack.c.l.s4 1983009808
        %v4501 = vunpack.c.0.s8 %v4500
        %v4502 = vlaneseq
        %v4503 = vshrl.u32 %v4502, 7
        %v4504 = vsub.s32 %v4501, %v4503
        %v4505 = vrot.slane %v4491, %v4504
        %v4506 = vcombine.high %v4498, %v4498
        %v4507 = vcombine.high %v4505, %v4505
        %v4509 = vsel %vm389, %v4481, 0
        %v4512 = vsel %vm389, %v4489, 0
        %v4515 = vsel %vm389, %v4488, 0
        %v4518 = vsel %vm389, %v4490, 0
        %v4521 = vsel %vm389, %v4498, 0
        %v4524 = vsel %vm389, %v4506, 0
        %v4527 = vsel %vm389, %v4505, 0
        %v4530 = vsel %vm389, %v4507, 0
        %4532 = vmatprep.subr.bf16.mxu0 %v4512
        %4533 = vmatpush1.bf16.msra.mxu0 %v4509
        %4534 = vmatprep.subr.bf16.mxu0 0
        %4535 = vmatpush1.bf16.msra.mxu0 0
        %4536 = vmatprep.subr.bf16.mxu0 0
        %4537 = vmatpush1.bf16.msra.mxu0 0
        %4538 = vmatprep.subr.bf16.mxu0 0
        %4539 = vmatpush1.bf16.msra.mxu0 0
        %4540 = vmatprep.subr.bf16.mxu0 0
        %4541 = vmatpush1.bf16.msra.mxu0 0
        %4542 = vmatprep.subr.bf16.mxu0 0
        %4543 = vmatpush1.bf16.msra.mxu0 0
        %4544 = vmatprep.subr.bf16.mxu0 0
        %4545 = vmatpush1.bf16.msra.mxu0 0
        %4546 = vmatprep.subr.bf16.mxu0 0
        %4547 = vmatpush1.bf16.msra.mxu0 0
        %4548 = vmatprep.subr.bf16.mxu0 0
        %4549 = vmatpush1.bf16.msra.mxu0 0
        %4550 = vmatprep.subr.bf16.mxu0 0
        %4551 = vmatpush1.bf16.msra.mxu0 0
        %4552 = vmatprep.subr.bf16.mxu0 0
        %4553 = vmatpush1.bf16.msra.mxu0 0
        %4554 = vmatprep.subr.bf16.mxu0 0
        %4555 = vmatpush1.bf16.msra.mxu0 0
        %4556 = vmatprep.subr.bf16.mxu0 0
        %4557 = vmatpush1.bf16.msra.mxu0 0
        %4558 = vmatprep.subr.bf16.mxu0 0
        %4559 = vmatpush1.bf16.msra.mxu0 0
        %4560 = vmatprep.subr.bf16.mxu0 0
        %4561 = vmatpush1.bf16.msra.mxu0 0
        %4562 = vmatprep.subr.bf16.mxu0 0
        %4563 = vmatpush1.bf16.msra.mxu0 0
        %4564 = vmatprep.mubr.bf16.mxu0 0
        %4565 = vmatmul.mubr.bf16.gmra.mrb[0].mxu0 %v2273
        %v4566 = vpop.f32.mrb[0].mxu0
        %v4567 = vadd.f32 0.0, %v4566
        %v4568 = vpop.f32.mrb[0].mxu0
        %v4569 = vadd.f32 0.0, %v4568
        %v4570 = vpop.f32.mrb[0].mxu0
        %v4571 = vpop.f32.mrb[0].mxu0
        %4572 = vdwg.mxu0
        %4573 = vmatprep.subr.bf16.mxu0 %v4518
        %4574 = vmatpush1.bf16.msra.mxu0 %v4515
        %4575 = vmatprep.subr.bf16.mxu0 0
        %4576 = vmatpush1.bf16.msra.mxu0 0
        %4577 = vmatprep.subr.bf16.mxu0 0
        %4578 = vmatpush1.bf16.msra.mxu0 0
        %4579 = vmatprep.subr.bf16.mxu0 0
        %4580 = vmatpush1.bf16.msra.mxu0 0
        %4581 = vmatprep.subr.bf16.mxu0 0
        %4582 = vmatpush1.bf16.msra.mxu0 0
        %4583 = vmatprep.subr.bf16.mxu0 0
        %4584 = vmatpush1.bf16.msra.mxu0 0
        %4585 = vmatprep.subr.bf16.mxu0 0
        %4586 = vmatpush1.bf16.msra.mxu0 0
        %4587 = vmatprep.subr.bf16.mxu0 0
        %4588 = vmatpush1.bf16.msra.mxu0 0
        %4589 = vmatprep.subr.bf16.mxu0 0
        %4590 = vmatpush1.bf16.msra.mxu0 0
        %4591 = vmatprep.subr.bf16.mxu0 0
        %4592 = vmatpush1.bf16.msra.mxu0 0
        %4593 = vmatprep.subr.bf16.mxu0 0
        %4594 = vmatpush1.bf16.msra.mxu0 0
        %4595 = vmatprep.subr.bf16.mxu0 0
        %4596 = vmatpush1.bf16.msra.mxu0 0
        %4597 = vmatprep.subr.bf16.mxu0 0
        %4598 = vmatpush1.bf16.msra.mxu0 0
        %4599 = vmatprep.subr.bf16.mxu0 0
        %4600 = vmatpush1.bf16.msra.mxu0 0
        %4601 = vmatprep.subr.bf16.mxu0 0
        %4602 = vmatpush1.bf16.msra.mxu0 0
        %4603 = vmatprep.subr.bf16.mxu0 0
        %4604 = vmatpush1.bf16.msra.mxu0 0
        %4605 = vmatprep.mubr.bf16.mxu0 0
        %4606 = vmatmul.mubr.bf16.gmra.mrb[0].mxu0 %v2273
        %v4607 = vpop.f32.mrb[0].mxu0
        %v4608 = vadd.f32 0.0, %v4607
        %v4609 = vpop.f32.mrb[0].mxu0
        %v4610 = vadd.f32 0.0, %v4609
        %v4611 = vpop.f32.mrb[0].mxu0
        %v4612 = vpop.f32.mrb[0].mxu0
        %4613 = vdwg.mxu0
        %4614 = vmatprep.subr.bf16.mxu0 %v4524
        %4615 = vmatpush1.bf16.msra.mxu0 %v4521
        %4616 = vmatprep.subr.bf16.mxu0 0
        %4617 = vmatpush1.bf16.msra.mxu0 0
        %4618 = vmatprep.subr.bf16.mxu0 0
        %4619 = vmatpush1.bf16.msra.mxu0 0
        %4620 = vmatprep.subr.bf16.mxu0 0
        %4621 = vmatpush1.bf16.msra.mxu0 0
        %4622 = vmatprep.subr.bf16.mxu0 0
        %4623 = vmatpush1.bf16.msra.mxu0 0
        %4624 = vmatprep.subr.bf16.mxu0 0
        %4625 = vmatpush1.bf16.msra.mxu0 0
        %4626 = vmatprep.subr.bf16.mxu0 0
        %4627 = vmatpush1.bf16.msra.mxu0 0
        %4628 = vmatprep.subr.bf16.mxu0 0
        %4629 = vmatpush1.bf16.msra.mxu0 0
        %4630 = vmatprep.subr.bf16.mxu0 0
        %4631 = vmatpush1.bf16.msra.mxu0 0
        %4632 = vmatprep.subr.bf16.mxu0 0
        %4633 = vmatpush1.bf16.msra.mxu0 0
        %4634 = vmatprep.subr.bf16.mxu0 0
        %4635 = vmatpush1.bf16.msra.mxu0 0
        %4636 = vmatprep.subr.bf16.mxu0 0
        %4637 = vmatpush1.bf16.msra.mxu0 0
        %4638 = vmatprep.subr.bf16.mxu0 0
        %4639 = vmatpush1.bf16.msra.mxu0 0
        %4640 = vmatprep.subr.bf16.mxu0 0
        %4641 = vmatpush1.bf16.msra.mxu0 0
        %4642 = vmatprep.subr.bf16.mxu0 0
        %4643 = vmatpush1.bf16.msra.mxu0 0
        %4644 = vmatprep.subr.bf16.mxu0 0
        %4645 = vmatpush1.bf16.msra.mxu0 0
        %4646 = vmatprep.mubr.bf16.mxu0 0
        %4647 = vmatmul.mubr.bf16.gmra.mrb[0].mxu0 %v2273
        %v4648 = vpop.f32.mrb[0].mxu0
        %v4649 = vadd.f32 0.0, %v4648
        %v4650 = vpop.f32.mrb[0].mxu0
        %v4651 = vadd.f32 0.0, %v4650
        %v4652 = vpop.f32.mrb[0].mxu0
        %v4653 = vpop.f32.mrb[0].mxu0
        %4654 = vdwg.mxu0
        %4655 = vmatprep.subr.bf16.mxu0 %v4530
        %4656 = vmatpush1.bf16.msra.mxu0 %v4527
        %4657 = vmatprep.subr.bf16.mxu0 0
        %4658 = vmatpush1.bf16.msra.mxu0 0
        %4659 = vmatprep.subr.bf16.mxu0 0
        %4660 = vmatpush1.bf16.msra.mxu0 0
        %4661 = vmatprep.subr.bf16.mxu0 0
        %4662 = vmatpush1.bf16.msra.mxu0 0
        %4663 = vmatprep.subr.bf16.mxu0 0
        %4664 = vmatpush1.bf16.msra.mxu0 0
        %4665 = vmatprep.subr.bf16.mxu0 0
        %4666 = vmatpush1.bf16.msra.mxu0 0
        %4667 = vmatprep.subr.bf16.mxu0 0
        %4668 = vmatpush1.bf16.msra.mxu0 0
        %4669 = vmatprep.subr.bf16.mxu0 0
        %4670 = vmatpush1.bf16.msra.mxu0 0
        %4671 = vmatprep.subr.bf16.mxu0 0
        %4672 = vmatpush1.bf16.msra.mxu0 0
        %4673 = vmatprep.subr.bf16.mxu0 0
        %4674 = vmatpush1.bf16.msra.mxu0 0
        %4675 = vmatprep.subr.bf16.mxu0 0
        %4676 = vmatpush1.bf16.msra.mxu0 0
        %4677 = vmatprep.subr.bf16.mxu0 0
        %4678 = vmatpush1.bf16.msra.mxu0 0
        %4679 = vmatprep.subr.bf16.mxu0 0
        %4680 = vmatpush1.bf16.msra.mxu0 0
        %4681 = vmatprep.subr.bf16.mxu0 0
        %4682 = vmatpush1.bf16.msra.mxu0 0
        %4683 = vmatprep.subr.bf16.mxu0 0
        %4684 = vmatpush1.bf16.msra.mxu0 0
        %4685 = vmatprep.subr.bf16.mxu0 0
        %4686 = vmatpush1.bf16.msra.mxu0 0
        %4687 = vmatprep.mubr.bf16.mxu0 0
        %4688 = vmatmul.mubr.bf16.gmra.mrb[0].mxu0 %v2273
        %v4689 = vpop.f32.mrb[0].mxu0
        %v4690 = vadd.f32 0.0, %v4689
        %v4691 = vpop.f32.mrb[0].mxu0
        %v4692 = vadd.f32 0.0, %v4691
        %v4693 = vpop.f32.mrb[0].mxu0
        %v4694 = vpop.f32.mrb[0].mxu0
        %4695 = vdwg.mxu0
        %v4696 = vadd.f32 %v4461, %v4567
        %v4697 = vadd.f32 %v4462, %v4569
        %v4698 = vadd.f32 %v4463, %v4608
        %v4699 = vadd.f32 %v4464, %v4610
        %v4700 = vadd.f32 %v4465, %v4649
        %v4701 = vadd.f32 %v4466, %v4651
        %v4702 = vadd.f32 %v4467, %v4690
        %v4703 = vadd.f32 %v4468, %v4692
        %v4704 = vadd.f32 %v4696, %v2474
        %v4705 = vadd.f32 %v4697, %v2474
        %v4706 = vadd.f32 %v4698, %v2474
        %v4707 = vadd.f32 %v4699, %v2474
        %v4708 = vadd.f32 %v4700, %v2474
        %v4709 = vadd.f32 %v4701, %v2474
        %v4710 = vadd.f32 %v4702, %v2474
        %v4711 = vadd.f32 %v4703, %v2474
        %v4712 = vmin.f32 %v4704, 20.0
        %v4713 = vmin.f32 %v4705, 20.0
        %v4714 = vmin.f32 %v4706, 20.0
        %v4715 = vmin.f32 %v4707, 20.0
        %v4716 = vmin.f32 %v4708, 20.0
        %v4717 = vmin.f32 %v4709, 20.0
        %v4718 = vmin.f32 %v4710, 20.0
        %v4719 = vmin.f32 %v4711, 20.0
        %v4720 = vmul.f32 %v4712, 1.442695
        %v4721 = vpow.pop %v4720
        %v4722 = vmul.f32 %v4713, 1.442695
        %v4723 = vpow.pop %v4722
        %v4724 = vmul.f32 %v4714, 1.442695
        %v4725 = vpow.pop %v4724
        %v4726 = vmul.f32 %v4715, 1.442695
        %v4727 = vpow.pop %v4726
        %v4728 = vmul.f32 %v4716, 1.442695
        %v4729 = vpow.pop %v4728
        %v4730 = vmul.f32 %v4717, 1.442695
        %v4731 = vpow.pop %v4730
        %v4732 = vmul.f32 %v4718, 1.442695
        %v4733 = vpow.pop %v4732
        %v4734 = vmul.f32 %v4719, 1.442695
        %v4735 = vpow.pop %v4734
        %v4736 = vadd.f32 %v4721, 2.0
        %v4737 = vadd.f32 %v4723, 2.0
        %v4738 = vadd.f32 %v4725, 2.0
        %v4739 = vadd.f32 %v4727, 2.0
        %v4740 = vadd.f32 %v4729, 2.0
        %v4741 = vadd.f32 %v4731, 2.0
        %v4742 = vadd.f32 %v4733, 2.0
        %v4743 = vadd.f32 %v4735, 2.0
        %v4744 = vmul.f32 %v4721, %v4736
        %v4745 = vmul.f32 %v4723, %v4737
        %v4746 = vmul.f32 %v4725, %v4738
        %v4747 = vmul.f32 %v4727, %v4739
        %v4748 = vmul.f32 %v4729, %v4740
        %v4749 = vmul.f32 %v4731, %v4741
        %v4750 = vmul.f32 %v4733, %v4742
        %v4751 = vmul.f32 %v4735, %v4743
        %v4752 = vadd.f32 %v4744, 2.0
        %v4753 = vadd.f32 %v4745, 2.0
        %v4754 = vadd.f32 %v4746, 2.0
        %v4755 = vadd.f32 %v4747, 2.0
        %v4756 = vadd.f32 %v4748, 2.0
        %v4757 = vadd.f32 %v4749, 2.0
        %v4758 = vadd.f32 %v4750, 2.0
        %v4759 = vadd.f32 %v4751, 2.0
        %v4760 = vrcp.pop %v4752
        %v4761 = vrcp.pop %v4753
        %v4762 = vrcp.pop %v4754
        %v4763 = vrcp.pop %v4755
        %v4764 = vrcp.pop %v4756
        %v4765 = vrcp.pop %v4757
        %v4766 = vrcp.pop %v4758
        %v4767 = vrcp.pop %v4759
        %v4768 = vmul.f32 %v4744, %v4760
        %v4769 = vmul.f32 %v4745, %v4761
        %v4770 = vmul.f32 %v4746, %v4762
        %v4771 = vmul.f32 %v4747, %v4763
        %v4772 = vmul.f32 %v4748, %v4764
        %v4773 = vmul.f32 %v4749, %v4765
        %v4774 = vmul.f32 %v4750, %v4766
        %v4775 = vmul.f32 %v4751, %v4767
        %vm4776 = vcmp.gt.f32.partialorder %v4704, 20.0
        %vm4777 = vcmp.gt.f32.partialorder %v4705, 20.0
        %vm4778 = vcmp.gt.f32.partialorder %v4706, 20.0
        %vm4779 = vcmp.gt.f32.partialorder %v4707, 20.0
        %vm4780 = vcmp.gt.f32.partialorder %v4708, 20.0
        %vm4781 = vcmp.gt.f32.partialorder %v4709, 20.0
        %vm4782 = vcmp.gt.f32.partialorder %v4710, 20.0
        %vm4783 = vcmp.gt.f32.partialorder %v4711, 20.0
        %v4784 = vmul.f32 %v4704, %v4768
        %v4785 = vmul.f32 %v4705, %v4769
        %v4786 = vmul.f32 %v4706, %v4770
        %v4787 = vmul.f32 %v4707, %v4771
        %v4788 = vmul.f32 %v4708, %v4772
        %v4789 = vmul.f32 %v4709, %v4773
        %v4790 = vmul.f32 %v4710, %v4774
        %v4791 = vmul.f32 %v4711, %v4775
        %v4792 = vsel %vm4776, %v4704, %v4784
        %v4793 = vsel %vm4777, %v4705, %v4785
        %v4794 = vsel %vm4778, %v4706, %v4786
        %v4795 = vsel %vm4779, %v4707, %v4787
        %v4796 = vsel %vm4780, %v4708, %v4788
        %v4797 = vsel %vm4781, %v4709, %v4789
        %v4798 = vsel %vm4782, %v4710, %v4790
        %v4799 = vsel %vm4783, %v4711, %v4791
        %v4800 = vmul.f32 %v4792, %v2575
        %v4801 = vmul.f32 %v4793, %v2575
        %v4802 = vmul.f32 %v4794, %v2575
        %v4803 = vmul.f32 %v4795, %v2575
        %v4804 = vmul.f32 %v4796, %v2575
        %v4805 = vmul.f32 %v4797, %v2575
        %v4806 = vmul.f32 %v4798, %v2575
        %v4807 = vmul.f32 %v4799, %v2575
        %v4808 = vadd.f32 %v4800, %v2588
        %v4809 = vadd.f32 %v4801, %v2588
        %v4810 = vadd.f32 %v4802, %v2588
        %v4811 = vadd.f32 %v4803, %v2588
        %v4812 = vadd.f32 %v4804, %v2588
        %v4813 = vadd.f32 %v4805, %v2588
        %v4814 = vadd.f32 %v4806, %v2588
        %v4815 = vadd.f32 %v4807, %v2588
        %s4816 = scalar_lea.vmem %s306, 64 [#allocation5]
        %4817 = vst [vmem:[%s4816] sm:$0xff] %v4808
        %4818 = vst [vmem:[%s4816 + $0x8] sm:$0xff] %v4809
        %4819 = vst [vmem:[%s4816 + $0x10] sm:$0xff] %v4810
        %4820 = vst [vmem:[%s4816 + $0x18] sm:$0xff] %v4811
        %4821 = vst [vmem:[%s4816 + $0x20] sm:$0xff] %v4812
        %4822 = vst [vmem:[%s4816 + $0x28] sm:$0xff] %v4813
        %4823 = vst [vmem:[%s4816 + $0x30] sm:$0xff] %v4814
        %4824 = vst [vmem:[%s4816 + $0x38] sm:$0xff] %v4815
        %s4825 = sand.u32 %s174, 1
        %s4826 = scalar_lea.sflag [#allocation4], %s4825
        %s4827 = sand.u32 %s174, 1
        %s4828 = smul.addr %s4827, 128
        %s4829 = scalar_lea.vmem [#allocation5], %s4828
        // Predicated region
        $region45: #{tpu_custom_call.1} parent=39 // pred_check
          %p4830 = pneg %p184
        $region46: #{tpu_custom_call.1} parent=39 // pred_check_branch
          %4832 = sbr.rel (%p4830) target = $region48
        $region47: #{tpu_custom_call.1} parent=39 // pred_region
          %s4834 = ssub.s32 2048, 2048
          %4835 = vsyncadd %s4826, %s4834
          %s4836 = smul.addr %s27, 16
          %s4837 = smul.addr %s26, 16
          %s4838 = sadd.s32 %s4836, %s4837
          %s4839 = smul.addr %s4838, 128
          %s4840 = scalar_lea.hbm %s5, %s4839
          %s4842 = sshll.u32 %s4829, 4
          %s4843 = int_to_ptr.vmem [resolvable:$true] %s4842
          %4845 = dma.vmem_to_hbm [thread:$0]  %s4843, 2048, %s4840, %s4826
        $region48: #{tpu_custom_call.1} parent=39 // pred_fallthru
          _
      $region40: #{tpu_custom_call.1} parent=5 // pred_fallthru
        _
      %p4846 = scmp.le.s32.totalorder 2, %s17
      // Predicated region
      $region49: #{tpu_custom_call.1} parent=5 // pred_check
        %p4847 = pneg %p4846
      $region50: #{tpu_custom_call.1} parent=5 // pred_check_branch
        %4849 = sbr.rel (%p4847) target = $region52
      $region51: #{tpu_custom_call.1} parent=5 // pred_region
        %s4850 = ssub.s32 %s17, 2
        // Predicated region
        $region53: #{tpu_custom_call.1} parent=51 // pred_check
          %p4851 = pneg %p190
        $region54: #{tpu_custom_call.1} parent=51 // pred_check_branch
          %4853 = sbr.rel (%p4851) target = $region56
        $region55: #{tpu_custom_call.1} parent=51 // pred_region
          %s4854 = sand.u32 %s175, 1
          %s4855 = scalar_lea.sflag [#allocation4], %s4854
          %s4856 = sand.u32 %s175, 1
          %s4857 = smul.addr %s4856, 128
          %s4858 = scalar_lea.vmem [#allocation5], %s4857
          %4859 = dma.done %s4855, 2048
        $region56: #{tpu_custom_call.1} parent=51 // pred_fallthru
          _
      $region52: #{tpu_custom_call.1} parent=5 // pred_fallthru
        _
    $region6: #{tpu_custom_call.1} parent=1 // loop_footer
      %s21 = sadd.s32 1, %s17
    $region7: #{tpu_custom_call.1} parent=1 // loop_footer_branch
      %16 = sbr.rel target = $region3
    $region8: #{tpu_custom_call.1} parent=1 // loop_exit
      _
    %4860 = vsyncpa [#allocation3], 1
    %s4861 = scalar_lea.sflag [#allocation3], 1
    %4862 = vsyncpa %s4861, 1
    %4863 = vsyncpa [#allocation4], 1
    %s4864 = scalar_lea.sflag [#allocation4], 1
    %4865 = vsyncpa %s4864, 1

</llo_original>
